<compile_context>
chip_gen: v6e
topology: v6e:2x2x1
jax: 0.10.0
libtpu: 0.0.40
codegen_flags: <defaults>
</compile_context>

<pallas_src>
import jax
import jax.numpy as jnp
from jax.experimental import pallas as pl
from jax.experimental.pallas import tpu as pltpu

# ---------------- configuration (small, BERT-like) ----------------
B = 2             # batch
S = 8             # sequence length
H = 32            # hidden size
NH = 4            # attention heads
HD = H // NH      # head dim
INTER = 64        # FFN intermediate size (4 * H)
NUM_LAYERS = 2
CLASS_NUM = 9
CLS_PAD = 128     # lane-dense classifier output width
VOCAB = 30
VOCAB_PAD = 32    # sublane-aligned embedding table
MAX_POS = 16
LN_EPS = 1e-12
BS = B * S        # collapsed (batch * seq) row dim


# ---------------- in-kernel helpers (f32 elementwise math) ----------------
def _layer_norm(x, gamma, beta):
    mu = jnp.mean(x, axis=-1, keepdims=True)
    var = jnp.mean((x - mu) ** 2, axis=-1, keepdims=True)
    return (x - mu) * jax.lax.rsqrt(var + LN_EPS) * gamma + beta


def _gelu(x):
    # tanh approximation (BERT-style gelu); keeps everything on VPU/EUP.
    return 0.5 * x * (1.0 + jnp.tanh(0.7978845608028654 * (x + 0.044715 * x * x * x)))


# ---------------- fused kernel: embeddings -> encoder -> classifier ----------------
def bert_fused_kernel(ids_ref, word_ref, postyp_ref, embln_ref,
                      wqkv_ref, bqkv_ref, wo_ref, lvec_ref,
                      w1_ref, b1_ref, w2_ref,
                      clsw_ref, clsb_ref,
                      o_ref):
    f32 = jnp.float32
    bf16 = jnp.bfloat16

    # ----- embedding lookup: bf16 one-hot MXU matmul, no transpose, no gather -----
    ids = ids_ref[...]                                                 # (BS, 1) int32
    lane_iota = jax.lax.broadcasted_iota(jnp.int32, (BS, VOCAB_PAD), 1)
    onehot = (lane_iota == ids).astype(bf16)                           # (BS, V)
    word = jnp.dot(onehot, word_ref[...], preferred_element_type=f32)  # (BS, H) f32

    # position + token-type embeddings were pre-summed at init.
    x = _layer_norm(word + postyp_ref[...],
                    embln_ref[0:1, :], embln_ref[1:2, :])              # (BS, H) f32

    for li in range(NUM_LAYERS):                                       # static unroll (L=2)
        lv = lvec_ref[li]                                               # (6, H) f32
        bo, g1, be1 = lv[0:1, :], lv[1:2, :], lv[2:3, :]
        b2, g2, be2 = lv[3:4, :], lv[4:5, :], lv[5:6, :]

        # ----- fused QKV projection: one MXU push; 1/sqrt(HD) folded into Wq -----
        qkv = jnp.dot(x.astype(bf16), wqkv_ref[li],
                      preferred_element_type=f32) + bqkv_ref[li]        # (BS, 3H) f32

        # ----- per-(batch, head) attention core on static slices -----
        ctx_rows = []
        for bi in range(B):
            r0 = bi * S
            ctx_heads = []
            for hi in range(NH):
                c0 = hi * HD
                qn = qkv[r0:r0 + S, c0:c0 + HD].astype(bf16)                    # (S, HD)
                kn = qkv[r0:r0 + S, H + c0:H + c0 + HD].astype(bf16)            # (S, HD)
                vn = qkv[r0:r0 + S, 2 * H + c0:2 * H + c0 + HD].astype(bf16)    # (S, HD)

                sc = jnp.einsum('sd,td->st', qn, kn,
                                preferred_element_type=f32)                     # (S, S)
                m = jnp.max(sc, axis=-1, keepdims=True)
                prob = jnp.exp(sc - m)
                prob = prob * pl.reciprocal(jnp.sum(prob, axis=-1, keepdims=True),
                                            approx=True)
                ctx_heads.append(jnp.dot(prob.astype(bf16), vn,
                                         preferred_element_type=f32))           # (S, HD)
            ctx_rows.append(jnp.concatenate(ctx_heads, axis=1))                 # (S, H)
        ctx = jnp.concatenate(ctx_rows, axis=0)                                 # (BS, H)

        # ----- output projection: head reduction inside the MXU -----
        attn_out = jnp.dot(ctx.astype(bf16), wo_ref[li],
                           preferred_element_type=f32) + bo                     # (BS, H)

        x1 = _layer_norm(x + attn_out, g1, be1)

        # ----- FFN -----
        h1 = jnp.dot(x1.astype(bf16), w1_ref[li],
                     preferred_element_type=f32) + b1_ref[li]                   # (BS, INTER)
        h1 = _gelu(h1)
        ffn = jnp.dot(h1.astype(bf16), w2_ref[li],
                      preferred_element_type=f32) + b2                          # (BS, H)
        x = _layer_norm(x1 + ffn, g2, be2)

    # ----- classifier (lane-dense padded output) -----
    logits = jnp.dot(x.astype(bf16), clsw_ref[...],
                     preferred_element_type=f32) + clsb_ref[...]                # (BS, CLS_PAD)
    o_ref[...] = logits


# ---------------- pallas_call wrapper ----------------
def bert_forward_fused(input_ids, p):
    ids2 = input_ids.reshape(BS, 1).astype(jnp.int32)

    operands = (ids2, p["word_emb"], p["pos_typ"], p["emb_ln"],
                p["wqkv"], p["bqkv"], p["wo"], p["lvec"],
                p["w1"], p["b1"], p["w2"],
                p["cls_w"], p["cls_b"])

    # advisory cost hint for XLA's scheduler
    flops = (
        2 * BS * VOCAB_PAD * H                       # embedding one-hot matmul
        + NUM_LAYERS * (
            2 * BS * H * (3 * H)                     # fused QKV
            + B * NH * (4 * S * S * HD)              # scores + context
            + 2 * BS * H * H                         # output projection
            + 2 * BS * H * INTER                     # FFN up
            + 2 * BS * INTER * H)                    # FFN down
        + 2 * BS * H * CLS_PAD)                      # classifier
    transcendentals = NUM_LAYERS * (B * NH * S * S + BS * INTER) + 4 * BS
    bytes_accessed = (sum(int(t.size) * t.dtype.itemsize for t in operands)
                      + BS * CLS_PAD * 4)

    vmem_spec = lambda: pl.BlockSpec(memory_space=pltpu.MemorySpace.VMEM)

    out = pl.pallas_call(
        bert_fused_kernel,
        out_shape=jax.ShapeDtypeStruct((BS, CLS_PAD), jnp.float32),
        in_specs=[vmem_spec() for _ in operands],
        out_specs=vmem_spec(),
        cost_estimate=pl.CostEstimate(flops=flops,
                                      transcendentals=transcendentals,
                                      bytes_accessed=bytes_accessed),
    )(*operands)
    return out.reshape(B, S, CLS_PAD)[:, :, :CLASS_NUM]


# ---------------- deterministic parameter construction ----------------
def init_params(key):
    def nrm(k, shape):
        return (0.02 * jax.random.normal(k, shape)).astype(jnp.float32)

    keys = jax.random.split(key, 4 + NUM_LAYERS)
    bf16 = jnp.bfloat16

    word = nrm(keys[0], (VOCAB, H))
    word_pad = jnp.zeros((VOCAB_PAD, H), jnp.float32).at[:VOCAB].set(word)
    pos = nrm(keys[1], (MAX_POS, H))[:S]                              # (S, H)
    typ = nrm(keys[2], (2, H))[0:1]                                   # (1, H)
    pos_typ = jnp.tile(pos, (B, 1)) + typ                             # (B*S, H)
    emb_ln = jnp.stack([jnp.ones((H,), jnp.float32),
                        jnp.zeros((H,), jnp.float32)], axis=0)        # (2, H)

    cls_w = nrm(keys[3], (H, CLASS_NUM))
    cls_w_pad = jnp.zeros((H, CLS_PAD), jnp.float32).at[:, :CLASS_NUM].set(cls_w)
    cls_b_pad = jnp.zeros((1, CLS_PAD), jnp.float32)

    inv_sqrt_hd = 1.0 / (HD ** 0.5)

    wqkv_l, bqkv_l, wo_l, lvec_l, w1_l, b1_l, w2_l = [], [], [], [], [], [], []
    for li in range(NUM_LAYERS):
        lk = jax.random.split(keys[4 + li], 6)
        wq, wk, wv, wo = (nrm(lk[0], (H, H)), nrm(lk[1], (H, H)),
                          nrm(lk[2], (H, H)), nrm(lk[3], (H, H)))
        w1, w2 = nrm(lk[4], (H, INTER)), nrm(lk[5], (INTER, H))

        # fused QKV weight (H, 3H) = [Wq/sqrt(HD) | Wk | Wv]; bias likewise.
        wqkv_l.append(jnp.concatenate([wq * inv_sqrt_hd, wk, wv], axis=1))
        bq = jnp.zeros((1, H), jnp.float32) * inv_sqrt_hd
        bqkv_l.append(jnp.concatenate([bq,
                                       jnp.zeros((1, H), jnp.float32),
                                       jnp.zeros((1, H), jnp.float32)], axis=1))
        wo_l.append(wo)                                               # (H, H), rows head-major
        lvec_l.append(jnp.stack([jnp.zeros((H,)),   # bo
                                 jnp.ones((H,)),    # ln1 gamma
                                 jnp.zeros((H,)),   # ln1 beta
                                 jnp.zeros((H,)),   # ffn out bias
                                 jnp.ones((H,)),    # ln2 gamma
                                 jnp.zeros((H,))],  # ln2 beta
                                axis=0).astype(jnp.float32))
        w1_l.append(w1)
        b1_l.append(jnp.zeros((1, INTER), jnp.float32))
        w2_l.append(w2)

    return {
        "word_emb": word_pad.astype(bf16),                      # (VOCAB_PAD, H) bf16
        "pos_typ": pos_typ,                                     # (B*S, H) f32
        "emb_ln": emb_ln,                                       # (2, H) f32
        "wqkv": jnp.stack(wqkv_l).astype(bf16),                 # (L, H, 3H) bf16
        "bqkv": jnp.stack(bqkv_l),                              # (L, 1, 3H) f32
        "wo": jnp.stack(wo_l).astype(bf16),                     # (L, H, H) bf16
        "lvec": jnp.stack(lvec_l),                              # (L, 6, H) f32
        "w1": jnp.stack(w1_l).astype(bf16),                     # (L, H, INTER) bf16
        "b1": jnp.stack(b1_l),                                  # (L, 1, INTER) f32
        "w2": jnp.stack(w2_l).astype(bf16),                     # (L, INTER, H) bf16
        "cls_w": cls_w_pad.astype(bf16),                        # (H, CLS_PAD) bf16
        "cls_b": cls_b_pad,                                     # (1, CLS_PAD) f32
    }


# ---------------- model forward (inference path of TorchModel) ----------------
@jax.jit
def torch_model_forward(input_ids, params):
    # target is None and use_crf is False -> return logits y = classify(BERT(x)[0])
    return bert_forward_fused(input_ids, params)


if __name__ == "__main__":
    key = jax.random.PRNGKey(0)
    pkey, dkey = jax.random.split(key)
    params = init_params(pkey)
    input_ids = jax.random.randint(dkey, (B, S), minval=0, maxval=VOCAB, dtype=jnp.int32)

    logits = torch_model_forward(input_ids, params)
    logits = jax.block_until_ready(logits)
    assert logits.shape == (B, S, CLASS_NUM)
    assert logits.dtype == jnp.float32
    print("KERNEL_OK")
</pallas_src>

<mosaic_0001>
module attributes {stable_mosaic.version = 11 : i64} {
  func.func @bert_fused_kernel(%arg0: memref<16x1xi32, #tpu.memory_space<vmem>>, %arg1: memref<32x32xbf16, #tpu.memory_space<vmem>>, %arg2: memref<16x32xf32, #tpu.memory_space<vmem>>, %arg3: memref<2x32xf32, #tpu.memory_space<vmem>>, %arg4: memref<2x32x96xbf16, #tpu.memory_space<vmem>>, %arg5: memref<2x1x96xf32, #tpu.memory_space<vmem>>, %arg6: memref<2x32x32xbf16, #tpu.memory_space<vmem>>, %arg7: memref<2x6x32xf32, #tpu.memory_space<vmem>>, %arg8: memref<2x32x64xbf16, #tpu.memory_space<vmem>>, %arg9: memref<2x1x64xf32, #tpu.memory_space<vmem>>, %arg10: memref<2x64x32xbf16, #tpu.memory_space<vmem>>, %arg11: memref<32x128xbf16, #tpu.memory_space<vmem>>, %arg12: memref<1x128xf32, #tpu.memory_space<vmem>>, %arg13: memref<16x128xf32, #tpu.memory_space<vmem>>) attributes {dimension_semantics = [], scalar_prefetch = 0 : i64, scratch_operands = 0 : i64, tpu.core_type = #tpu.core_type<tc>} {
    %c0 = arith.constant 0 : index
    %c0_0 = arith.constant 0 : index
    %0 = vector.load %arg0[%c0, %c0_0] : memref<16x1xi32, #tpu.memory_space<vmem>>, vector<16x1xi32>
    %1 = tpu.iota {dimensions = array<i32: 1>} : vector<16x32xi32>
    %2 = vector.broadcast %0 : vector<16x1xi32> to vector<16x32xi32>
    %3 = arith.cmpi eq, %1, %2 : vector<16x32xi32>
    %4 = arith.extui %3 : vector<16x32xi1> to vector<16x32xi32>
    %5 = arith.sitofp %4 : vector<16x32xi32> to vector<16x32xf32>
    %6 = arith.truncf %5 : vector<16x32xf32> to vector<16x32xbf16>
    %c0_1 = arith.constant 0 : index
    %c0_2 = arith.constant 0 : index
    %7 = vector.load %arg1[%c0_1, %c0_2] : memref<32x32xbf16, #tpu.memory_space<vmem>>, vector<32x32xbf16>
    %cst = arith.constant dense<0.000000e+00> : vector<16x32xf32>
    %8 = tpu.matmul %6, %7, %cst {dimension_numbers = #tpu.dot_dimension_numbers<[1], [0], [0], [1], [0, 0, 1, 1], [], []>} : vector<16x32xbf16>, vector<32x32xbf16>, vector<16x32xf32> -> vector<16x32xf32>
    %c0_3 = arith.constant 0 : index
    %c0_4 = arith.constant 0 : index
    %9 = vector.load %arg2[%c0_3, %c0_4] : memref<16x32xf32, #tpu.memory_space<vmem>>, vector<16x32xf32>
    %10 = arith.addf %8, %9 : vector<16x32xf32>
    %c0_5 = arith.constant 0 : index
    %c0_6 = arith.constant 0 : index
    %11 = vector.load %arg3[%c0_5, %c0_6] : memref<2x32xf32, #tpu.memory_space<vmem>>, vector<1x32xf32>
    %c1 = arith.constant 1 : index
    %c0_7 = arith.constant 0 : index
    %12 = vector.load %arg3[%c1, %c0_7] : memref<2x32xf32, #tpu.memory_space<vmem>>, vector<1x32xf32>
    %cst_8 = arith.constant dense<0.000000e+00> : vector<16xf32>
    %13 = vector.multi_reduction <add>, %10, %cst_8 [1] : vector<16x32xf32> to vector<16xf32>
    %14 = vector.shape_cast %13 : vector<16xf32> to vector<16x1xf32>
    %cst_9 = arith.constant 3.200000e+01 : f32
    %15 = vector.broadcast %cst_9 : f32 to vector<16x1xf32>
    %16 = arith.divf %14, %15 : vector<16x1xf32>
    %17 = vector.broadcast %16 : vector<16x1xf32> to vector<16x32xf32>
    %18 = arith.subf %10, %17 : vector<16x32xf32>
    %19 = arith.mulf %18, %18 : vector<16x32xf32>
    %cst_10 = arith.constant dense<0.000000e+00> : vector<16xf32>
    %20 = vector.multi_reduction <add>, %19, %cst_10 [1] : vector<16x32xf32> to vector<16xf32>
    %21 = vector.shape_cast %20 : vector<16xf32> to vector<16x1xf32>
    %cst_11 = arith.constant 3.200000e+01 : f32
    %22 = vector.broadcast %cst_11 : f32 to vector<16x1xf32>
    %23 = arith.divf %21, %22 : vector<16x1xf32>
    %24 = vector.broadcast %16 : vector<16x1xf32> to vector<16x32xf32>
    %25 = arith.subf %10, %24 : vector<16x32xf32>
    %cst_12 = arith.constant 9.99999996E-13 : f32
    %26 = vector.broadcast %cst_12 : f32 to vector<16x1xf32>
    %27 = arith.addf %23, %26 : vector<16x1xf32>
    %28 = math.rsqrt %27 : vector<16x1xf32>
    %29 = vector.broadcast %28 : vector<16x1xf32> to vector<16x32xf32>
    %30 = arith.mulf %25, %29 : vector<16x32xf32>
    %31 = vector.broadcast %11 : vector<1x32xf32> to vector<16x32xf32>
    %32 = arith.mulf %30, %31 : vector<16x32xf32>
    %33 = vector.broadcast %12 : vector<1x32xf32> to vector<16x32xf32>
    %34 = arith.addf %32, %33 : vector<16x32xf32>
    %c0_13 = arith.constant 0 : index
    %c0_14 = arith.constant 0 : index
    %c0_15 = arith.constant 0 : index
    %35 = vector.load %arg7[%c0_13, %c0_14, %c0_15] : memref<2x6x32xf32, #tpu.memory_space<vmem>>, vector<1x6x32xf32>
    %36 = vector.shape_cast %35 : vector<1x6x32xf32> to vector<6x32xf32>
    %37 = vector.extract_strided_slice %36 {offsets = [0, 0], sizes = [1, 32], strides = [1, 1]} : vector<6x32xf32> to vector<1x32xf32>
    %38 = vector.extract_strided_slice %36 {offsets = [1, 0], sizes = [1, 32], strides = [1, 1]} : vector<6x32xf32> to vector<1x32xf32>
    %39 = vector.extract_strided_slice %36 {offsets = [2, 0], sizes = [1, 32], strides = [1, 1]} : vector<6x32xf32> to vector<1x32xf32>
    %40 = vector.extract_strided_slice %36 {offsets = [3, 0], sizes = [1, 32], strides = [1, 1]} : vector<6x32xf32> to vector<1x32xf32>
    %41 = vector.extract_strided_slice %36 {offsets = [4, 0], sizes = [1, 32], strides = [1, 1]} : vector<6x32xf32> to vector<1x32xf32>
    %42 = vector.extract_strided_slice %36 {offsets = [5, 0], sizes = [1, 32], strides = [1, 1]} : vector<6x32xf32> to vector<1x32xf32>
    %43 = arith.truncf %34 : vector<16x32xf32> to vector<16x32xbf16>
    %c0_16 = arith.constant 0 : index
    %c0_17 = arith.constant 0 : index
    %c0_18 = arith.constant 0 : index
    %44 = vector.load %arg4[%c0_16, %c0_17, %c0_18] : memref<2x32x96xbf16, #tpu.memory_space<vmem>>, vector<1x32x96xbf16>
    %45 = vector.shape_cast %44 : vector<1x32x96xbf16> to vector<32x96xbf16>
    %cst_19 = arith.constant dense<0.000000e+00> : vector<16x96xf32>
    %46 = tpu.matmul %43, %45, %cst_19 {dimension_numbers = #tpu.dot_dimension_numbers<[1], [0], [0], [1], [0, 0, 1, 1], [], []>} : vector<16x32xbf16>, vector<32x96xbf16>, vector<16x96xf32> -> vector<16x96xf32>
    %c0_20 = arith.constant 0 : index
    %c0_21 = arith.constant 0 : index
    %c0_22 = arith.constant 0 : index
    %47 = vector.load %arg5[%c0_20, %c0_21, %c0_22] : memref<2x1x96xf32, #tpu.memory_space<vmem>>, vector<1x1x96xf32>
    %48 = vector.shape_cast %47 : vector<1x1x96xf32> to vector<1x96xf32>
    %49 = vector.broadcast %48 : vector<1x96xf32> to vector<16x96xf32>
    %50 = arith.addf %46, %49 : vector<16x96xf32>
    %51 = vector.extract_strided_slice %50 {offsets = [0, 0], sizes = [8, 8], strides = [1, 1]} : vector<16x96xf32> to vector<8x8xf32>
    %52 = arith.truncf %51 : vector<8x8xf32> to vector<8x8xbf16>
    %53 = vector.extract_strided_slice %50 {offsets = [0, 32], sizes = [8, 8], strides = [1, 1]} : vector<16x96xf32> to vector<8x8xf32>
    %54 = arith.truncf %53 : vector<8x8xf32> to vector<8x8xbf16>
    %55 = vector.extract_strided_slice %50 {offsets = [0, 64], sizes = [8, 8], strides = [1, 1]} : vector<16x96xf32> to vector<8x8xf32>
    %56 = arith.truncf %55 : vector<8x8xf32> to vector<8x8xbf16>
    "tpu.trace_start"() <{level = 10 : i32, message = "sd,td->st"}> : () -> ()
    %cst_23 = arith.constant dense<0.000000e+00> : vector<8x8xf32>
    %57 = tpu.matmul %52, %54, %cst_23 {dimension_numbers = #tpu.dot_dimension_numbers<[1], [1], [0], [0], [0, 0, 1, 0], [], []>} : vector<8x8xbf16>, vector<8x8xbf16>, vector<8x8xf32> -> vector<8x8xf32>
    "tpu.trace_stop"() : () -> ()
    %cst_24 = arith.constant dense<0xFF800000> : vector<8xf32>
    %58 = vector.multi_reduction <maximumf>, %57, %cst_24 [1] : vector<8x8xf32> to vector<8xf32>
    %59 = vector.shape_cast %58 : vector<8xf32> to vector<8x1xf32>
    %60 = vector.broadcast %59 : vector<8x1xf32> to vector<8x8xf32>
    %61 = arith.subf %57, %60 : vector<8x8xf32>
    %62 = math.exp %61 : vector<8x8xf32>
    %cst_25 = arith.constant dense<0.000000e+00> : vector<8xf32>
    %63 = vector.multi_reduction <add>, %62, %cst_25 [1] : vector<8x8xf32> to vector<8xf32>
    %64 = vector.shape_cast %63 : vector<8xf32> to vector<8x1xf32>
    %65 = tpu.reciprocal %64 {approx = true} : vector<8x1xf32> -> vector<8x1xf32>
    %66 = vector.broadcast %65 : vector<8x1xf32> to vector<8x8xf32>
    %67 = arith.mulf %62, %66 : vector<8x8xf32>
    %68 = arith.truncf %67 : vector<8x8xf32> to vector<8x8xbf16>
    %cst_26 = arith.constant dense<0.000000e+00> : vector<8x8xf32>
    %69 = tpu.matmul %68, %56, %cst_26 {dimension_numbers = #tpu.dot_dimension_numbers<[1], [0], [0], [1], [0, 0, 1, 1], [], []>} : vector<8x8xbf16>, vector<8x8xbf16>, vector<8x8xf32> -> vector<8x8xf32>
    %70 = vector.extract_strided_slice %50 {offsets = [0, 8], sizes = [8, 8], strides = [1, 1]} : vector<16x96xf32> to vector<8x8xf32>
    %71 = arith.truncf %70 : vector<8x8xf32> to vector<8x8xbf16>
    %72 = vector.extract_strided_slice %50 {offsets = [0, 40], sizes = [8, 8], strides = [1, 1]} : vector<16x96xf32> to vector<8x8xf32>
    %73 = arith.truncf %72 : vector<8x8xf32> to vector<8x8xbf16>
    %74 = vector.extract_strided_slice %50 {offsets = [0, 72], sizes = [8, 8], strides = [1, 1]} : vector<16x96xf32> to vector<8x8xf32>
    %75 = arith.truncf %74 : vector<8x8xf32> to vector<8x8xbf16>
    "tpu.trace_start"() <{level = 10 : i32, message = "sd,td->st"}> : () -> ()
    %cst_27 = arith.constant dense<0.000000e+00> : vector<8x8xf32>
    %76 = tpu.matmul %71, %73, %cst_27 {dimension_numbers = #tpu.dot_dimension_numbers<[1], [1], [0], [0], [0, 0, 1, 0], [], []>} : vector<8x8xbf16>, vector<8x8xbf16>, vector<8x8xf32> -> vector<8x8xf32>
    "tpu.trace_stop"() : () -> ()
    %cst_28 = arith.constant dense<0xFF800000> : vector<8xf32>
    %77 = vector.multi_reduction <maximumf>, %76, %cst_28 [1] : vector<8x8xf32> to vector<8xf32>
    %78 = vector.shape_cast %77 : vector<8xf32> to vector<8x1xf32>
    %79 = vector.broadcast %78 : vector<8x1xf32> to vector<8x8xf32>
    %80 = arith.subf %76, %79 : vector<8x8xf32>
    %81 = math.exp %80 : vector<8x8xf32>
    %cst_29 = arith.constant dense<0.000000e+00> : vector<8xf32>
    %82 = vector.multi_reduction <add>, %81, %cst_29 [1] : vector<8x8xf32> to vector<8xf32>
    %83 = vector.shape_cast %82 : vector<8xf32> to vector<8x1xf32>
    %84 = tpu.reciprocal %83 {approx = true} : vector<8x1xf32> -> vector<8x1xf32>
    %85 = vector.broadcast %84 : vector<8x1xf32> to vector<8x8xf32>
    %86 = arith.mulf %81, %85 : vector<8x8xf32>
    %87 = arith.truncf %86 : vector<8x8xf32> to vector<8x8xbf16>
    %cst_30 = arith.constant dense<0.000000e+00> : vector<8x8xf32>
    %88 = tpu.matmul %87, %75, %cst_30 {dimension_numbers = #tpu.dot_dimension_numbers<[1], [0], [0], [1], [0, 0, 1, 1], [], []>} : vector<8x8xbf16>, vector<8x8xbf16>, vector<8x8xf32> -> vector<8x8xf32>
    %89 = vector.extract_strided_slice %50 {offsets = [0, 16], sizes = [8, 8], strides = [1, 1]} : vector<16x96xf32> to vector<8x8xf32>
    %90 = arith.truncf %89 : vector<8x8xf32> to vector<8x8xbf16>
    %91 = vector.extract_strided_slice %50 {offsets = [0, 48], sizes = [8, 8], strides = [1, 1]} : vector<16x96xf32> to vector<8x8xf32>
    %92 = arith.truncf %91 : vector<8x8xf32> to vector<8x8xbf16>
    %93 = vector.extract_strided_slice %50 {offsets = [0, 80], sizes = [8, 8], strides = [1, 1]} : vector<16x96xf32> to vector<8x8xf32>
    %94 = arith.truncf %93 : vector<8x8xf32> to vector<8x8xbf16>
    "tpu.trace_start"() <{level = 10 : i32, message = "sd,td->st"}> : () -> ()
    %cst_31 = arith.constant dense<0.000000e+00> : vector<8x8xf32>
    %95 = tpu.matmul %90, %92, %cst_31 {dimension_numbers = #tpu.dot_dimension_numbers<[1], [1], [0], [0], [0, 0, 1, 0], [], []>} : vector<8x8xbf16>, vector<8x8xbf16>, vector<8x8xf32> -> vector<8x8xf32>
    "tpu.trace_stop"() : () -> ()
    %cst_32 = arith.constant dense<0xFF800000> : vector<8xf32>
    %96 = vector.multi_reduction <maximumf>, %95, %cst_32 [1] : vector<8x8xf32> to vector<8xf32>
    %97 = vector.shape_cast %96 : vector<8xf32> to vector<8x1xf32>
    %98 = vector.broadcast %97 : vector<8x1xf32> to vector<8x8xf32>
    %99 = arith.subf %95, %98 : vector<8x8xf32>
    %100 = math.exp %99 : vector<8x8xf32>
    %cst_33 = arith.constant dense<0.000000e+00> : vector<8xf32>
    %101 = vector.multi_reduction <add>, %100, %cst_33 [1] : vector<8x8xf32> to vector<8xf32>
    %102 = vector.shape_cast %101 : vector<8xf32> to vector<8x1xf32>
    %103 = tpu.reciprocal %102 {approx = true} : vector<8x1xf32> -> vector<8x1xf32>
    %104 = vector.broadcast %103 : vector<8x1xf32> to vector<8x8xf32>
    %105 = arith.mulf %100, %104 : vector<8x8xf32>
    %106 = arith.truncf %105 : vector<8x8xf32> to vector<8x8xbf16>
    %cst_34 = arith.constant dense<0.000000e+00> : vector<8x8xf32>
    %107 = tpu.matmul %106, %94, %cst_34 {dimension_numbers = #tpu.dot_dimension_numbers<[1], [0], [0], [1], [0, 0, 1, 1], [], []>} : vector<8x8xbf16>, vector<8x8xbf16>, vector<8x8xf32> -> vector<8x8xf32>
    %108 = vector.extract_strided_slice %50 {offsets = [0, 24], sizes = [8, 8], strides = [1, 1]} : vector<16x96xf32> to vector<8x8xf32>
    %109 = arith.truncf %108 : vector<8x8xf32> to vector<8x8xbf16>
    %110 = vector.extract_strided_slice %50 {offsets = [0, 56], sizes = [8, 8], strides = [1, 1]} : vector<16x96xf32> to vector<8x8xf32>
    %111 = arith.truncf %110 : vector<8x8xf32> to vector<8x8xbf16>
    %112 = vector.extract_strided_slice %50 {offsets = [0, 88], sizes = [8, 8], strides = [1, 1]} : vector<16x96xf32> to vector<8x8xf32>
    %113 = arith.truncf %112 : vector<8x8xf32> to vector<8x8xbf16>
    "tpu.trace_start"() <{level = 10 : i32, message = "sd,td->st"}> : () -> ()
    %cst_35 = arith.constant dense<0.000000e+00> : vector<8x8xf32>
    %114 = tpu.matmul %109, %111, %cst_35 {dimension_numbers = #tpu.dot_dimension_numbers<[1], [1], [0], [0], [0, 0, 1, 0], [], []>} : vector<8x8xbf16>, vector<8x8xbf16>, vector<8x8xf32> -> vector<8x8xf32>
    "tpu.trace_stop"() : () -> ()
    %cst_36 = arith.constant dense<0xFF800000> : vector<8xf32>
    %115 = vector.multi_reduction <maximumf>, %114, %cst_36 [1] : vector<8x8xf32> to vector<8xf32>
    %116 = vector.shape_cast %115 : vector<8xf32> to vector<8x1xf32>
    %117 = vector.broadcast %116 : vector<8x1xf32> to vector<8x8xf32>
    %118 = arith.subf %114, %117 : vector<8x8xf32>
    %119 = math.exp %118 : vector<8x8xf32>
    %cst_37 = arith.constant dense<0.000000e+00> : vector<8xf32>
    %120 = vector.multi_reduction <add>, %119, %cst_37 [1] : vector<8x8xf32> to vector<8xf32>
    %121 = vector.shape_cast %120 : vector<8xf32> to vector<8x1xf32>
    %122 = tpu.reciprocal %121 {approx = true} : vector<8x1xf32> -> vector<8x1xf32>
    %123 = vector.broadcast %122 : vector<8x1xf32> to vector<8x8xf32>
    %124 = arith.mulf %119, %123 : vector<8x8xf32>
    %125 = arith.truncf %124 : vector<8x8xf32> to vector<8x8xbf16>
    %cst_38 = arith.constant dense<0.000000e+00> : vector<8x8xf32>
    %126 = tpu.matmul %125, %113, %cst_38 {dimension_numbers = #tpu.dot_dimension_numbers<[1], [0], [0], [1], [0, 0, 1, 1], [], []>} : vector<8x8xbf16>, vector<8x8xbf16>, vector<8x8xf32> -> vector<8x8xf32>
    %127 = tpu.concatenate %69, %88, %107, %126 in 1 : vector<8x8xf32>, vector<8x8xf32>, vector<8x8xf32>, vector<8x8xf32> -> vector<8x32xf32>
    %128 = vector.extract_strided_slice %50 {offsets = [8, 0], sizes = [8, 8], strides = [1, 1]} : vector<16x96xf32> to vector<8x8xf32>
    %129 = arith.truncf %128 : vector<8x8xf32> to vector<8x8xbf16>
    %130 = vector.extract_strided_slice %50 {offsets = [8, 32], sizes = [8, 8], strides = [1, 1]} : vector<16x96xf32> to vector<8x8xf32>
    %131 = arith.truncf %130 : vector<8x8xf32> to vector<8x8xbf16>
    %132 = vector.extract_strided_slice %50 {offsets = [8, 64], sizes = [8, 8], strides = [1, 1]} : vector<16x96xf32> to vector<8x8xf32>
    %133 = arith.truncf %132 : vector<8x8xf32> to vector<8x8xbf16>
    "tpu.trace_start"() <{level = 10 : i32, message = "sd,td->st"}> : () -> ()
    %cst_39 = arith.constant dense<0.000000e+00> : vector<8x8xf32>
    %134 = tpu.matmul %129, %131, %cst_39 {dimension_numbers = #tpu.dot_dimension_numbers<[1], [1], [0], [0], [0, 0, 1, 0], [], []>} : vector<8x8xbf16>, vector<8x8xbf16>, vector<8x8xf32> -> vector<8x8xf32>
    "tpu.trace_stop"() : () -> ()
    %cst_40 = arith.constant dense<0xFF800000> : vector<8xf32>
    %135 = vector.multi_reduction <maximumf>, %134, %cst_40 [1] : vector<8x8xf32> to vector<8xf32>
    %136 = vector.shape_cast %135 : vector<8xf32> to vector<8x1xf32>
    %137 = vector.broadcast %136 : vector<8x1xf32> to vector<8x8xf32>
    %138 = arith.subf %134, %137 : vector<8x8xf32>
    %139 = math.exp %138 : vector<8x8xf32>
    %cst_41 = arith.constant dense<0.000000e+00> : vector<8xf32>
    %140 = vector.multi_reduction <add>, %139, %cst_41 [1] : vector<8x8xf32> to vector<8xf32>
    %141 = vector.shape_cast %140 : vector<8xf32> to vector<8x1xf32>
    %142 = tpu.reciprocal %141 {approx = true} : vector<8x1xf32> -> vector<8x1xf32>
    %143 = vector.broadcast %142 : vector<8x1xf32> to vector<8x8xf32>
    %144 = arith.mulf %139, %143 : vector<8x8xf32>
    %145 = arith.truncf %144 : vector<8x8xf32> to vector<8x8xbf16>
    %cst_42 = arith.constant dense<0.000000e+00> : vector<8x8xf32>
    %146 = tpu.matmul %145, %133, %cst_42 {dimension_numbers = #tpu.dot_dimension_numbers<[1], [0], [0], [1], [0, 0, 1, 1], [], []>} : vector<8x8xbf16>, vector<8x8xbf16>, vector<8x8xf32> -> vector<8x8xf32>
    %147 = vector.extract_strided_slice %50 {offsets = [8, 8], sizes = [8, 8], strides = [1, 1]} : vector<16x96xf32> to vector<8x8xf32>
    %148 = arith.truncf %147 : vector<8x8xf32> to vector<8x8xbf16>
    %149 = vector.extract_strided_slice %50 {offsets = [8, 40], sizes = [8, 8], strides = [1, 1]} : vector<16x96xf32> to vector<8x8xf32>
    %150 = arith.truncf %149 : vector<8x8xf32> to vector<8x8xbf16>
    %151 = vector.extract_strided_slice %50 {offsets = [8, 72], sizes = [8, 8], strides = [1, 1]} : vector<16x96xf32> to vector<8x8xf32>
    %152 = arith.truncf %151 : vector<8x8xf32> to vector<8x8xbf16>
    "tpu.trace_start"() <{level = 10 : i32, message = "sd,td->st"}> : () -> ()
    %cst_43 = arith.constant dense<0.000000e+00> : vector<8x8xf32>
    %153 = tpu.matmul %148, %150, %cst_43 {dimension_numbers = #tpu.dot_dimension_numbers<[1], [1], [0], [0], [0, 0, 1, 0], [], []>} : vector<8x8xbf16>, vector<8x8xbf16>, vector<8x8xf32> -> vector<8x8xf32>
    "tpu.trace_stop"() : () -> ()
    %cst_44 = arith.constant dense<0xFF800000> : vector<8xf32>
    %154 = vector.multi_reduction <maximumf>, %153, %cst_44 [1] : vector<8x8xf32> to vector<8xf32>
    %155 = vector.shape_cast %154 : vector<8xf32> to vector<8x1xf32>
    %156 = vector.broadcast %155 : vector<8x1xf32> to vector<8x8xf32>
    %157 = arith.subf %153, %156 : vector<8x8xf32>
    %158 = math.exp %157 : vector<8x8xf32>
    %cst_45 = arith.constant dense<0.000000e+00> : vector<8xf32>
    %159 = vector.multi_reduction <add>, %158, %cst_45 [1] : vector<8x8xf32> to vector<8xf32>
    %160 = vector.shape_cast %159 : vector<8xf32> to vector<8x1xf32>
    %161 = tpu.reciprocal %160 {approx = true} : vector<8x1xf32> -> vector<8x1xf32>
    %162 = vector.broadcast %161 : vector<8x1xf32> to vector<8x8xf32>
    %163 = arith.mulf %158, %162 : vector<8x8xf32>
    %164 = arith.truncf %163 : vector<8x8xf32> to vector<8x8xbf16>
    %cst_46 = arith.constant dense<0.000000e+00> : vector<8x8xf32>
    %165 = tpu.matmul %164, %152, %cst_46 {dimension_numbers = #tpu.dot_dimension_numbers<[1], [0], [0], [1], [0, 0, 1, 1], [], []>} : vector<8x8xbf16>, vector<8x8xbf16>, vector<8x8xf32> -> vector<8x8xf32>
    %166 = vector.extract_strided_slice %50 {offsets = [8, 16], sizes = [8, 8], strides = [1, 1]} : vector<16x96xf32> to vector<8x8xf32>
    %167 = arith.truncf %166 : vector<8x8xf32> to vector<8x8xbf16>
    %168 = vector.extract_strided_slice %50 {offsets = [8, 48], sizes = [8, 8], strides = [1, 1]} : vector<16x96xf32> to vector<8x8xf32>
    %169 = arith.truncf %168 : vector<8x8xf32> to vector<8x8xbf16>
    %170 = vector.extract_strided_slice %50 {offsets = [8, 80], sizes = [8, 8], strides = [1, 1]} : vector<16x96xf32> to vector<8x8xf32>
    %171 = arith.truncf %170 : vector<8x8xf32> to vector<8x8xbf16>
    "tpu.trace_start"() <{level = 10 : i32, message = "sd,td->st"}> : () -> ()
    %cst_47 = arith.constant dense<0.000000e+00> : vector<8x8xf32>
    %172 = tpu.matmul %167, %169, %cst_47 {dimension_numbers = #tpu.dot_dimension_numbers<[1], [1], [0], [0], [0, 0, 1, 0], [], []>} : vector<8x8xbf16>, vector<8x8xbf16>, vector<8x8xf32> -> vector<8x8xf32>
    "tpu.trace_stop"() : () -> ()
    %cst_48 = arith.constant dense<0xFF800000> : vector<8xf32>
    %173 = vector.multi_reduction <maximumf>, %172, %cst_48 [1] : vector<8x8xf32> to vector<8xf32>
    %174 = vector.shape_cast %173 : vector<8xf32> to vector<8x1xf32>
    %175 = vector.broadcast %174 : vector<8x1xf32> to vector<8x8xf32>
    %176 = arith.subf %172, %175 : vector<8x8xf32>
    %177 = math.exp %176 : vector<8x8xf32>
    %cst_49 = arith.constant dense<0.000000e+00> : vector<8xf32>
    %178 = vector.multi_reduction <add>, %177, %cst_49 [1] : vector<8x8xf32> to vector<8xf32>
    %179 = vector.shape_cast %178 : vector<8xf32> to vector<8x1xf32>
    %180 = tpu.reciprocal %179 {approx = true} : vector<8x1xf32> -> vector<8x1xf32>
    %181 = vector.broadcast %180 : vector<8x1xf32> to vector<8x8xf32>
    %182 = arith.mulf %177, %181 : vector<8x8xf32>
    %183 = arith.truncf %182 : vector<8x8xf32> to vector<8x8xbf16>
    %cst_50 = arith.constant dense<0.000000e+00> : vector<8x8xf32>
    %184 = tpu.matmul %183, %171, %cst_50 {dimension_numbers = #tpu.dot_dimension_numbers<[1], [0], [0], [1], [0, 0, 1, 1], [], []>} : vector<8x8xbf16>, vector<8x8xbf16>, vector<8x8xf32> -> vector<8x8xf32>
    %185 = vector.extract_strided_slice %50 {offsets = [8, 24], sizes = [8, 8], strides = [1, 1]} : vector<16x96xf32> to vector<8x8xf32>
    %186 = arith.truncf %185 : vector<8x8xf32> to vector<8x8xbf16>
    %187 = vector.extract_strided_slice %50 {offsets = [8, 56], sizes = [8, 8], strides = [1, 1]} : vector<16x96xf32> to vector<8x8xf32>
    %188 = arith.truncf %187 : vector<8x8xf32> to vector<8x8xbf16>
    %189 = vector.extract_strided_slice %50 {offsets = [8, 88], sizes = [8, 8], strides = [1, 1]} : vector<16x96xf32> to vector<8x8xf32>
    %190 = arith.truncf %189 : vector<8x8xf32> to vector<8x8xbf16>
    "tpu.trace_start"() <{level = 10 : i32, message = "sd,td->st"}> : () -> ()
    %cst_51 = arith.constant dense<0.000000e+00> : vector<8x8xf32>
    %191 = tpu.matmul %186, %188, %cst_51 {dimension_numbers = #tpu.dot_dimension_numbers<[1], [1], [0], [0], [0, 0, 1, 0], [], []>} : vector<8x8xbf16>, vector<8x8xbf16>, vector<8x8xf32> -> vector<8x8xf32>
    "tpu.trace_stop"() : () -> ()
    %cst_52 = arith.constant dense<0xFF800000> : vector<8xf32>
    %192 = vector.multi_reduction <maximumf>, %191, %cst_52 [1] : vector<8x8xf32> to vector<8xf32>
    %193 = vector.shape_cast %192 : vector<8xf32> to vector<8x1xf32>
    %194 = vector.broadcast %193 : vector<8x1xf32> to vector<8x8xf32>
    %195 = arith.subf %191, %194 : vector<8x8xf32>
    %196 = math.exp %195 : vector<8x8xf32>
    %cst_53 = arith.constant dense<0.000000e+00> : vector<8xf32>
    %197 = vector.multi_reduction <add>, %196, %cst_53 [1] : vector<8x8xf32> to vector<8xf32>
    %198 = vector.shape_cast %197 : vector<8xf32> to vector<8x1xf32>
    %199 = tpu.reciprocal %198 {approx = true} : vector<8x1xf32> -> vector<8x1xf32>
    %200 = vector.broadcast %199 : vector<8x1xf32> to vector<8x8xf32>
    %201 = arith.mulf %196, %200 : vector<8x8xf32>
    %202 = arith.truncf %201 : vector<8x8xf32> to vector<8x8xbf16>
    %cst_54 = arith.constant dense<0.000000e+00> : vector<8x8xf32>
    %203 = tpu.matmul %202, %190, %cst_54 {dimension_numbers = #tpu.dot_dimension_numbers<[1], [0], [0], [1], [0, 0, 1, 1], [], []>} : vector<8x8xbf16>, vector<8x8xbf16>, vector<8x8xf32> -> vector<8x8xf32>
    %204 = tpu.concatenate %146, %165, %184, %203 in 1 : vector<8x8xf32>, vector<8x8xf32>, vector<8x8xf32>, vector<8x8xf32> -> vector<8x32xf32>
    %205 = tpu.concatenate %127, %204 in 0 : vector<8x32xf32>, vector<8x32xf32> -> vector<16x32xf32>
    %206 = arith.truncf %205 : vector<16x32xf32> to vector<16x32xbf16>
    %c0_55 = arith.constant 0 : index
    %c0_56 = arith.constant 0 : index
    %c0_57 = arith.constant 0 : index
    %207 = vector.load %arg6[%c0_55, %c0_56, %c0_57] : memref<2x32x32xbf16, #tpu.memory_space<vmem>>, vector<1x32x32xbf16>
    %208 = vector.shape_cast %207 : vector<1x32x32xbf16> to vector<32x32xbf16>
    %cst_58 = arith.constant dense<0.000000e+00> : vector<16x32xf32>
    %209 = tpu.matmul %206, %208, %cst_58 {dimension_numbers = #tpu.dot_dimension_numbers<[1], [0], [0], [1], [0, 0, 1, 1], [], []>} : vector<16x32xbf16>, vector<32x32xbf16>, vector<16x32xf32> -> vector<16x32xf32>
    %210 = vector.broadcast %37 : vector<1x32xf32> to vector<16x32xf32>
    %211 = arith.addf %209, %210 : vector<16x32xf32>
    %212 = arith.addf %34, %211 : vector<16x32xf32>
    %cst_59 = arith.constant dense<0.000000e+00> : vector<16xf32>
    %213 = vector.multi_reduction <add>, %212, %cst_59 [1] : vector<16x32xf32> to vector<16xf32>
    %214 = vector.shape_cast %213 : vector<16xf32> to vector<16x1xf32>
    %cst_60 = arith.constant 3.200000e+01 : f32
    %215 = vector.broadcast %cst_60 : f32 to vector<16x1xf32>
    %216 = arith.divf %214, %215 : vector<16x1xf32>
    %217 = vector.broadcast %216 : vector<16x1xf32> to vector<16x32xf32>
    %218 = arith.subf %212, %217 : vector<16x32xf32>
    %219 = arith.mulf %218, %218 : vector<16x32xf32>
    %cst_61 = arith.constant dense<0.000000e+00> : vector<16xf32>
    %220 = vector.multi_reduction <add>, %219, %cst_61 [1] : vector<16x32xf32> to vector<16xf32>
    %221 = vector.shape_cast %220 : vector<16xf32> to vector<16x1xf32>
    %cst_62 = arith.constant 3.200000e+01 : f32
    %222 = vector.broadcast %cst_62 : f32 to vector<16x1xf32>
    %223 = arith.divf %221, %222 : vector<16x1xf32>
    %224 = vector.broadcast %216 : vector<16x1xf32> to vector<16x32xf32>
    %225 = arith.subf %212, %224 : vector<16x32xf32>
    %cst_63 = arith.constant 9.99999996E-13 : f32
    %226 = vector.broadcast %cst_63 : f32 to vector<16x1xf32>
    %227 = arith.addf %223, %226 : vector<16x1xf32>
    %228 = math.rsqrt %227 : vector<16x1xf32>
    %229 = vector.broadcast %228 : vector<16x1xf32> to vector<16x32xf32>
    %230 = arith.mulf %225, %229 : vector<16x32xf32>
    %231 = vector.broadcast %38 : vector<1x32xf32> to vector<16x32xf32>
    %232 = arith.mulf %230, %231 : vector<16x32xf32>
    %233 = vector.broadcast %39 : vector<1x32xf32> to vector<16x32xf32>
    %234 = arith.addf %232, %233 : vector<16x32xf32>
    %235 = arith.truncf %234 : vector<16x32xf32> to vector<16x32xbf16>
    %c0_64 = arith.constant 0 : index
    %c0_65 = arith.constant 0 : index
    %c0_66 = arith.constant 0 : index
    %236 = vector.load %arg8[%c0_64, %c0_65, %c0_66] : memref<2x32x64xbf16, #tpu.memory_space<vmem>>, vector<1x32x64xbf16>
    %237 = vector.shape_cast %236 : vector<1x32x64xbf16> to vector<32x64xbf16>
    %cst_67 = arith.constant dense<0.000000e+00> : vector<16x64xf32>
    %238 = tpu.matmul %235, %237, %cst_67 {dimension_numbers = #tpu.dot_dimension_numbers<[1], [0], [0], [1], [0, 0, 1, 1], [], []>} : vector<16x32xbf16>, vector<32x64xbf16>, vector<16x64xf32> -> vector<16x64xf32>
    %c0_68 = arith.constant 0 : index
    %c0_69 = arith.constant 0 : index
    %c0_70 = arith.constant 0 : index
    %239 = vector.load %arg9[%c0_68, %c0_69, %c0_70] : memref<2x1x64xf32, #tpu.memory_space<vmem>>, vector<1x1x64xf32>
    %240 = vector.shape_cast %239 : vector<1x1x64xf32> to vector<1x64xf32>
    %241 = vector.broadcast %240 : vector<1x64xf32> to vector<16x64xf32>
    %242 = arith.addf %238, %241 : vector<16x64xf32>
    %cst_71 = arith.constant 5.000000e-01 : f32
    %243 = vector.broadcast %cst_71 : f32 to vector<16x64xf32>
    %244 = arith.mulf %243, %242 : vector<16x64xf32>
    %cst_72 = arith.constant 4.471500e-02 : f32
    %245 = vector.broadcast %cst_72 : f32 to vector<16x64xf32>
    %246 = arith.mulf %245, %242 : vector<16x64xf32>
    %247 = arith.mulf %246, %242 : vector<16x64xf32>
    %248 = arith.mulf %247, %242 : vector<16x64xf32>
    %249 = arith.addf %242, %248 : vector<16x64xf32>
    %cst_73 = arith.constant 0.797884583 : f32
    %250 = vector.broadcast %cst_73 : f32 to vector<16x64xf32>
    %251 = arith.mulf %250, %249 : vector<16x64xf32>
    %252 = math.tanh %251 : vector<16x64xf32>
    %cst_74 = arith.constant 1.000000e+00 : f32
    %253 = vector.broadcast %cst_74 : f32 to vector<16x64xf32>
    %254 = arith.addf %253, %252 : vector<16x64xf32>
    %255 = arith.mulf %244, %254 : vector<16x64xf32>
    %256 = arith.truncf %255 : vector<16x64xf32> to vector<16x64xbf16>
    %c0_75 = arith.constant 0 : index
    %c0_76 = arith.constant 0 : index
    %c0_77 = arith.constant 0 : index
    %257 = vector.load %arg10[%c0_75, %c0_76, %c0_77] : memref<2x64x32xbf16, #tpu.memory_space<vmem>>, vector<1x64x32xbf16>
    %258 = vector.shape_cast %257 : vector<1x64x32xbf16> to vector<64x32xbf16>
    %cst_78 = arith.constant dense<0.000000e+00> : vector<16x32xf32>
    %259 = tpu.matmul %256, %258, %cst_78 {dimension_numbers = #tpu.dot_dimension_numbers<[1], [0], [0], [1], [0, 0, 1, 1], [], []>} : vector<16x64xbf16>, vector<64x32xbf16>, vector<16x32xf32> -> vector<16x32xf32>
    %260 = vector.broadcast %40 : vector<1x32xf32> to vector<16x32xf32>
    %261 = arith.addf %259, %260 : vector<16x32xf32>
    %262 = arith.addf %234, %261 : vector<16x32xf32>
    %cst_79 = arith.constant dense<0.000000e+00> : vector<16xf32>
    %263 = vector.multi_reduction <add>, %262, %cst_79 [1] : vector<16x32xf32> to vector<16xf32>
    %264 = vector.shape_cast %263 : vector<16xf32> to vector<16x1xf32>
    %cst_80 = arith.constant 3.200000e+01 : f32
    %265 = vector.broadcast %cst_80 : f32 to vector<16x1xf32>
    %266 = arith.divf %264, %265 : vector<16x1xf32>
    %267 = vector.broadcast %266 : vector<16x1xf32> to vector<16x32xf32>
    %268 = arith.subf %262, %267 : vector<16x32xf32>
    %269 = arith.mulf %268, %268 : vector<16x32xf32>
    %cst_81 = arith.constant dense<0.000000e+00> : vector<16xf32>
    %270 = vector.multi_reduction <add>, %269, %cst_81 [1] : vector<16x32xf32> to vector<16xf32>
    %271 = vector.shape_cast %270 : vector<16xf32> to vector<16x1xf32>
    %cst_82 = arith.constant 3.200000e+01 : f32
    %272 = vector.broadcast %cst_82 : f32 to vector<16x1xf32>
    %273 = arith.divf %271, %272 : vector<16x1xf32>
    %274 = vector.broadcast %266 : vector<16x1xf32> to vector<16x32xf32>
    %275 = arith.subf %262, %274 : vector<16x32xf32>
    %cst_83 = arith.constant 9.99999996E-13 : f32
    %276 = vector.broadcast %cst_83 : f32 to vector<16x1xf32>
    %277 = arith.addf %273, %276 : vector<16x1xf32>
    %278 = math.rsqrt %277 : vector<16x1xf32>
    %279 = vector.broadcast %278 : vector<16x1xf32> to vector<16x32xf32>
    %280 = arith.mulf %275, %279 : vector<16x32xf32>
    %281 = vector.broadcast %41 : vector<1x32xf32> to vector<16x32xf32>
    %282 = arith.mulf %280, %281 : vector<16x32xf32>
    %283 = vector.broadcast %42 : vector<1x32xf32> to vector<16x32xf32>
    %284 = arith.addf %282, %283 : vector<16x32xf32>
    %c1_84 = arith.constant 1 : index
    %c0_85 = arith.constant 0 : index
    %c0_86 = arith.constant 0 : index
    %285 = vector.load %arg7[%c1_84, %c0_85, %c0_86] : memref<2x6x32xf32, #tpu.memory_space<vmem>>, vector<1x6x32xf32>
    %286 = vector.shape_cast %285 : vector<1x6x32xf32> to vector<6x32xf32>
    %287 = vector.extract_strided_slice %286 {offsets = [0, 0], sizes = [1, 32], strides = [1, 1]} : vector<6x32xf32> to vector<1x32xf32>
    %288 = vector.extract_strided_slice %286 {offsets = [1, 0], sizes = [1, 32], strides = [1, 1]} : vector<6x32xf32> to vector<1x32xf32>
    %289 = vector.extract_strided_slice %286 {offsets = [2, 0], sizes = [1, 32], strides = [1, 1]} : vector<6x32xf32> to vector<1x32xf32>
    %290 = vector.extract_strided_slice %286 {offsets = [3, 0], sizes = [1, 32], strides = [1, 1]} : vector<6x32xf32> to vector<1x32xf32>
    %291 = vector.extract_strided_slice %286 {offsets = [4, 0], sizes = [1, 32], strides = [1, 1]} : vector<6x32xf32> to vector<1x32xf32>
    %292 = vector.extract_strided_slice %286 {offsets = [5, 0], sizes = [1, 32], strides = [1, 1]} : vector<6x32xf32> to vector<1x32xf32>
    %293 = arith.truncf %284 : vector<16x32xf32> to vector<16x32xbf16>
    %c1_87 = arith.constant 1 : index
    %c0_88 = arith.constant 0 : index
    %c0_89 = arith.constant 0 : index
    %294 = vector.load %arg4[%c1_87, %c0_88, %c0_89] : memref<2x32x96xbf16, #tpu.memory_space<vmem>>, vector<1x32x96xbf16>
    %295 = vector.shape_cast %294 : vector<1x32x96xbf16> to vector<32x96xbf16>
    %cst_90 = arith.constant dense<0.000000e+00> : vector<16x96xf32>
    %296 = tpu.matmul %293, %295, %cst_90 {dimension_numbers = #tpu.dot_dimension_numbers<[1], [0], [0], [1], [0, 0, 1, 1], [], []>} : vector<16x32xbf16>, vector<32x96xbf16>, vector<16x96xf32> -> vector<16x96xf32>
    %c1_91 = arith.constant 1 : index
    %c0_92 = arith.constant 0 : index
    %c0_93 = arith.constant 0 : index
    %297 = vector.load %arg5[%c1_91, %c0_92, %c0_93] : memref<2x1x96xf32, #tpu.memory_space<vmem>>, vector<1x1x96xf32>
    %298 = vector.shape_cast %297 : vector<1x1x96xf32> to vector<1x96xf32>
    %299 = vector.broadcast %298 : vector<1x96xf32> to vector<16x96xf32>
    %300 = arith.addf %296, %299 : vector<16x96xf32>
    %301 = vector.extract_strided_slice %300 {offsets = [0, 0], sizes = [8, 8], strides = [1, 1]} : vector<16x96xf32> to vector<8x8xf32>
    %302 = arith.truncf %301 : vector<8x8xf32> to vector<8x8xbf16>
    %303 = vector.extract_strided_slice %300 {offsets = [0, 32], sizes = [8, 8], strides = [1, 1]} : vector<16x96xf32> to vector<8x8xf32>
    %304 = arith.truncf %303 : vector<8x8xf32> to vector<8x8xbf16>
    %305 = vector.extract_strided_slice %300 {offsets = [0, 64], sizes = [8, 8], strides = [1, 1]} : vector<16x96xf32> to vector<8x8xf32>
    %306 = arith.truncf %305 : vector<8x8xf32> to vector<8x8xbf16>
    "tpu.trace_start"() <{level = 10 : i32, message = "sd,td->st"}> : () -> ()
    %cst_94 = arith.constant dense<0.000000e+00> : vector<8x8xf32>
    %307 = tpu.matmul %302, %304, %cst_94 {dimension_numbers = #tpu.dot_dimension_numbers<[1], [1], [0], [0], [0, 0, 1, 0], [], []>} : vector<8x8xbf16>, vector<8x8xbf16>, vector<8x8xf32> -> vector<8x8xf32>
    "tpu.trace_stop"() : () -> ()
    %cst_95 = arith.constant dense<0xFF800000> : vector<8xf32>
    %308 = vector.multi_reduction <maximumf>, %307, %cst_95 [1] : vector<8x8xf32> to vector<8xf32>
    %309 = vector.shape_cast %308 : vector<8xf32> to vector<8x1xf32>
    %310 = vector.broadcast %309 : vector<8x1xf32> to vector<8x8xf32>
    %311 = arith.subf %307, %310 : vector<8x8xf32>
    %312 = math.exp %311 : vector<8x8xf32>
    %cst_96 = arith.constant dense<0.000000e+00> : vector<8xf32>
    %313 = vector.multi_reduction <add>, %312, %cst_96 [1] : vector<8x8xf32> to vector<8xf32>
    %314 = vector.shape_cast %313 : vector<8xf32> to vector<8x1xf32>
    %315 = tpu.reciprocal %314 {approx = true} : vector<8x1xf32> -> vector<8x1xf32>
    %316 = vector.broadcast %315 : vector<8x1xf32> to vector<8x8xf32>
    %317 = arith.mulf %312, %316 : vector<8x8xf32>
    %318 = arith.truncf %317 : vector<8x8xf32> to vector<8x8xbf16>
    %cst_97 = arith.constant dense<0.000000e+00> : vector<8x8xf32>
    %319 = tpu.matmul %318, %306, %cst_97 {dimension_numbers = #tpu.dot_dimension_numbers<[1], [0], [0], [1], [0, 0, 1, 1], [], []>} : vector<8x8xbf16>, vector<8x8xbf16>, vector<8x8xf32> -> vector<8x8xf32>
    %320 = vector.extract_strided_slice %300 {offsets = [0, 8], sizes = [8, 8], strides = [1, 1]} : vector<16x96xf32> to vector<8x8xf32>
    %321 = arith.truncf %320 : vector<8x8xf32> to vector<8x8xbf16>
    %322 = vector.extract_strided_slice %300 {offsets = [0, 40], sizes = [8, 8], strides = [1, 1]} : vector<16x96xf32> to vector<8x8xf32>
    %323 = arith.truncf %322 : vector<8x8xf32> to vector<8x8xbf16>
    %324 = vector.extract_strided_slice %300 {offsets = [0, 72], sizes = [8, 8], strides = [1, 1]} : vector<16x96xf32> to vector<8x8xf32>
    %325 = arith.truncf %324 : vector<8x8xf32> to vector<8x8xbf16>
    "tpu.trace_start"() <{level = 10 : i32, message = "sd,td->st"}> : () -> ()
    %cst_98 = arith.constant dense<0.000000e+00> : vector<8x8xf32>
    %326 = tpu.matmul %321, %323, %cst_98 {dimension_numbers = #tpu.dot_dimension_numbers<[1], [1], [0], [0], [0, 0, 1, 0], [], []>} : vector<8x8xbf16>, vector<8x8xbf16>, vector<8x8xf32> -> vector<8x8xf32>
    "tpu.trace_stop"() : () -> ()
    %cst_99 = arith.constant dense<0xFF800000> : vector<8xf32>
    %327 = vector.multi_reduction <maximumf>, %326, %cst_99 [1] : vector<8x8xf32> to vector<8xf32>
    %328 = vector.shape_cast %327 : vector<8xf32> to vector<8x1xf32>
    %329 = vector.broadcast %328 : vector<8x1xf32> to vector<8x8xf32>
    %330 = arith.subf %326, %329 : vector<8x8xf32>
    %331 = math.exp %330 : vector<8x8xf32>
    %cst_100 = arith.constant dense<0.000000e+00> : vector<8xf32>
    %332 = vector.multi_reduction <add>, %331, %cst_100 [1] : vector<8x8xf32> to vector<8xf32>
    %333 = vector.shape_cast %332 : vector<8xf32> to vector<8x1xf32>
    %334 = tpu.reciprocal %333 {approx = true} : vector<8x1xf32> -> vector<8x1xf32>
    %335 = vector.broadcast %334 : vector<8x1xf32> to vector<8x8xf32>
    %336 = arith.mulf %331, %335 : vector<8x8xf32>
    %337 = arith.truncf %336 : vector<8x8xf32> to vector<8x8xbf16>
    %cst_101 = arith.constant dense<0.000000e+00> : vector<8x8xf32>
    %338 = tpu.matmul %337, %325, %cst_101 {dimension_numbers = #tpu.dot_dimension_numbers<[1], [0], [0], [1], [0, 0, 1, 1], [], []>} : vector<8x8xbf16>, vector<8x8xbf16>, vector<8x8xf32> -> vector<8x8xf32>
    %339 = vector.extract_strided_slice %300 {offsets = [0, 16], sizes = [8, 8], strides = [1, 1]} : vector<16x96xf32> to vector<8x8xf32>
    %340 = arith.truncf %339 : vector<8x8xf32> to vector<8x8xbf16>
    %341 = vector.extract_strided_slice %300 {offsets = [0, 48], sizes = [8, 8], strides = [1, 1]} : vector<16x96xf32> to vector<8x8xf32>
    %342 = arith.truncf %341 : vector<8x8xf32> to vector<8x8xbf16>
    %343 = vector.extract_strided_slice %300 {offsets = [0, 80], sizes = [8, 8], strides = [1, 1]} : vector<16x96xf32> to vector<8x8xf32>
    %344 = arith.truncf %343 : vector<8x8xf32> to vector<8x8xbf16>
    "tpu.trace_start"() <{level = 10 : i32, message = "sd,td->st"}> : () -> ()
    %cst_102 = arith.constant dense<0.000000e+00> : vector<8x8xf32>
    %345 = tpu.matmul %340, %342, %cst_102 {dimension_numbers = #tpu.dot_dimension_numbers<[1], [1], [0], [0], [0, 0, 1, 0], [], []>} : vector<8x8xbf16>, vector<8x8xbf16>, vector<8x8xf32> -> vector<8x8xf32>
    "tpu.trace_stop"() : () -> ()
    %cst_103 = arith.constant dense<0xFF800000> : vector<8xf32>
    %346 = vector.multi_reduction <maximumf>, %345, %cst_103 [1] : vector<8x8xf32> to vector<8xf32>
    %347 = vector.shape_cast %346 : vector<8xf32> to vector<8x1xf32>
    %348 = vector.broadcast %347 : vector<8x1xf32> to vector<8x8xf32>
    %349 = arith.subf %345, %348 : vector<8x8xf32>
    %350 = math.exp %349 : vector<8x8xf32>
    %cst_104 = arith.constant dense<0.000000e+00> : vector<8xf32>
    %351 = vector.multi_reduction <add>, %350, %cst_104 [1] : vector<8x8xf32> to vector<8xf32>
    %352 = vector.shape_cast %351 : vector<8xf32> to vector<8x1xf32>
    %353 = tpu.reciprocal %352 {approx = true} : vector<8x1xf32> -> vector<8x1xf32>
    %354 = vector.broadcast %353 : vector<8x1xf32> to vector<8x8xf32>
    %355 = arith.mulf %350, %354 : vector<8x8xf32>
    %356 = arith.truncf %355 : vector<8x8xf32> to vector<8x8xbf16>
    %cst_105 = arith.constant dense<0.000000e+00> : vector<8x8xf32>
    %357 = tpu.matmul %356, %344, %cst_105 {dimension_numbers = #tpu.dot_dimension_numbers<[1], [0], [0], [1], [0, 0, 1, 1], [], []>} : vector<8x8xbf16>, vector<8x8xbf16>, vector<8x8xf32> -> vector<8x8xf32>
    %358 = vector.extract_strided_slice %300 {offsets = [0, 24], sizes = [8, 8], strides = [1, 1]} : vector<16x96xf32> to vector<8x8xf32>
    %359 = arith.truncf %358 : vector<8x8xf32> to vector<8x8xbf16>
    %360 = vector.extract_strided_slice %300 {offsets = [0, 56], sizes = [8, 8], strides = [1, 1]} : vector<16x96xf32> to vector<8x8xf32>
    %361 = arith.truncf %360 : vector<8x8xf32> to vector<8x8xbf16>
    %362 = vector.extract_strided_slice %300 {offsets = [0, 88], sizes = [8, 8], strides = [1, 1]} : vector<16x96xf32> to vector<8x8xf32>
    %363 = arith.truncf %362 : vector<8x8xf32> to vector<8x8xbf16>
    "tpu.trace_start"() <{level = 10 : i32, message = "sd,td->st"}> : () -> ()
    %cst_106 = arith.constant dense<0.000000e+00> : vector<8x8xf32>
    %364 = tpu.matmul %359, %361, %cst_106 {dimension_numbers = #tpu.dot_dimension_numbers<[1], [1], [0], [0], [0, 0, 1, 0], [], []>} : vector<8x8xbf16>, vector<8x8xbf16>, vector<8x8xf32> -> vector<8x8xf32>
    "tpu.trace_stop"() : () -> ()
    %cst_107 = arith.constant dense<0xFF800000> : vector<8xf32>
    %365 = vector.multi_reduction <maximumf>, %364, %cst_107 [1] : vector<8x8xf32> to vector<8xf32>
    %366 = vector.shape_cast %365 : vector<8xf32> to vector<8x1xf32>
    %367 = vector.broadcast %366 : vector<8x1xf32> to vector<8x8xf32>
    %368 = arith.subf %364, %367 : vector<8x8xf32>
    %369 = math.exp %368 : vector<8x8xf32>
    %cst_108 = arith.constant dense<0.000000e+00> : vector<8xf32>
    %370 = vector.multi_reduction <add>, %369, %cst_108 [1] : vector<8x8xf32> to vector<8xf32>
    %371 = vector.shape_cast %370 : vector<8xf32> to vector<8x1xf32>
    %372 = tpu.reciprocal %371 {approx = true} : vector<8x1xf32> -> vector<8x1xf32>
    %373 = vector.broadcast %372 : vector<8x1xf32> to vector<8x8xf32>
    %374 = arith.mulf %369, %373 : vector<8x8xf32>
    %375 = arith.truncf %374 : vector<8x8xf32> to vector<8x8xbf16>
    %cst_109 = arith.constant dense<0.000000e+00> : vector<8x8xf32>
    %376 = tpu.matmul %375, %363, %cst_109 {dimension_numbers = #tpu.dot_dimension_numbers<[1], [0], [0], [1], [0, 0, 1, 1], [], []>} : vector<8x8xbf16>, vector<8x8xbf16>, vector<8x8xf32> -> vector<8x8xf32>
    %377 = tpu.concatenate %319, %338, %357, %376 in 1 : vector<8x8xf32>, vector<8x8xf32>, vector<8x8xf32>, vector<8x8xf32> -> vector<8x32xf32>
    %378 = vector.extract_strided_slice %300 {offsets = [8, 0], sizes = [8, 8], strides = [1, 1]} : vector<16x96xf32> to vector<8x8xf32>
    %379 = arith.truncf %378 : vector<8x8xf32> to vector<8x8xbf16>
    %380 = vector.extract_strided_slice %300 {offsets = [8, 32], sizes = [8, 8], strides = [1, 1]} : vector<16x96xf32> to vector<8x8xf32>
    %381 = arith.truncf %380 : vector<8x8xf32> to vector<8x8xbf16>
    %382 = vector.extract_strided_slice %300 {offsets = [8, 64], sizes = [8, 8], strides = [1, 1]} : vector<16x96xf32> to vector<8x8xf32>
    %383 = arith.truncf %382 : vector<8x8xf32> to vector<8x8xbf16>
    "tpu.trace_start"() <{level = 10 : i32, message = "sd,td->st"}> : () -> ()
    %cst_110 = arith.constant dense<0.000000e+00> : vector<8x8xf32>
    %384 = tpu.matmul %379, %381, %cst_110 {dimension_numbers = #tpu.dot_dimension_numbers<[1], [1], [0], [0], [0, 0, 1, 0], [], []>} : vector<8x8xbf16>, vector<8x8xbf16>, vector<8x8xf32> -> vector<8x8xf32>
    "tpu.trace_stop"() : () -> ()
    %cst_111 = arith.constant dense<0xFF800000> : vector<8xf32>
    %385 = vector.multi_reduction <maximumf>, %384, %cst_111 [1] : vector<8x8xf32> to vector<8xf32>
    %386 = vector.shape_cast %385 : vector<8xf32> to vector<8x1xf32>
    %387 = vector.broadcast %386 : vector<8x1xf32> to vector<8x8xf32>
    %388 = arith.subf %384, %387 : vector<8x8xf32>
    %389 = math.exp %388 : vector<8x8xf32>
    %cst_112 = arith.constant dense<0.000000e+00> : vector<8xf32>
    %390 = vector.multi_reduction <add>, %389, %cst_112 [1] : vector<8x8xf32> to vector<8xf32>
    %391 = vector.shape_cast %390 : vector<8xf32> to vector<8x1xf32>
    %392 = tpu.reciprocal %391 {approx = true} : vector<8x1xf32> -> vector<8x1xf32>
    %393 = vector.broadcast %392 : vector<8x1xf32> to vector<8x8xf32>
    %394 = arith.mulf %389, %393 : vector<8x8xf32>
    %395 = arith.truncf %394 : vector<8x8xf32> to vector<8x8xbf16>
    %cst_113 = arith.constant dense<0.000000e+00> : vector<8x8xf32>
    %396 = tpu.matmul %395, %383, %cst_113 {dimension_numbers = #tpu.dot_dimension_numbers<[1], [0], [0], [1], [0, 0, 1, 1], [], []>} : vector<8x8xbf16>, vector<8x8xbf16>, vector<8x8xf32> -> vector<8x8xf32>
    %397 = vector.extract_strided_slice %300 {offsets = [8, 8], sizes = [8, 8], strides = [1, 1]} : vector<16x96xf32> to vector<8x8xf32>
    %398 = arith.truncf %397 : vector<8x8xf32> to vector<8x8xbf16>
    %399 = vector.extract_strided_slice %300 {offsets = [8, 40], sizes = [8, 8], strides = [1, 1]} : vector<16x96xf32> to vector<8x8xf32>
    %400 = arith.truncf %399 : vector<8x8xf32> to vector<8x8xbf16>
    %401 = vector.extract_strided_slice %300 {offsets = [8, 72], sizes = [8, 8], strides = [1, 1]} : vector<16x96xf32> to vector<8x8xf32>
    %402 = arith.truncf %401 : vector<8x8xf32> to vector<8x8xbf16>
    "tpu.trace_start"() <{level = 10 : i32, message = "sd,td->st"}> : () -> ()
    %cst_114 = arith.constant dense<0.000000e+00> : vector<8x8xf32>
    %403 = tpu.matmul %398, %400, %cst_114 {dimension_numbers = #tpu.dot_dimension_numbers<[1], [1], [0], [0], [0, 0, 1, 0], [], []>} : vector<8x8xbf16>, vector<8x8xbf16>, vector<8x8xf32> -> vector<8x8xf32>
    "tpu.trace_stop"() : () -> ()
    %cst_115 = arith.constant dense<0xFF800000> : vector<8xf32>
    %404 = vector.multi_reduction <maximumf>, %403, %cst_115 [1] : vector<8x8xf32> to vector<8xf32>
    %405 = vector.shape_cast %404 : vector<8xf32> to vector<8x1xf32>
    %406 = vector.broadcast %405 : vector<8x1xf32> to vector<8x8xf32>
    %407 = arith.subf %403, %406 : vector<8x8xf32>
    %408 = math.exp %407 : vector<8x8xf32>
    %cst_116 = arith.constant dense<0.000000e+00> : vector<8xf32>
    %409 = vector.multi_reduction <add>, %408, %cst_116 [1] : vector<8x8xf32> to vector<8xf32>
    %410 = vector.shape_cast %409 : vector<8xf32> to vector<8x1xf32>
    %411 = tpu.reciprocal %410 {approx = true} : vector<8x1xf32> -> vector<8x1xf32>
    %412 = vector.broadcast %411 : vector<8x1xf32> to vector<8x8xf32>
    %413 = arith.mulf %408, %412 : vector<8x8xf32>
    %414 = arith.truncf %413 : vector<8x8xf32> to vector<8x8xbf16>
    %cst_117 = arith.constant dense<0.000000e+00> : vector<8x8xf32>
    %415 = tpu.matmul %414, %402, %cst_117 {dimension_numbers = #tpu.dot_dimension_numbers<[1], [0], [0], [1], [0, 0, 1, 1], [], []>} : vector<8x8xbf16>, vector<8x8xbf16>, vector<8x8xf32> -> vector<8x8xf32>
    %416 = vector.extract_strided_slice %300 {offsets = [8, 16], sizes = [8, 8], strides = [1, 1]} : vector<16x96xf32> to vector<8x8xf32>
    %417 = arith.truncf %416 : vector<8x8xf32> to vector<8x8xbf16>
    %418 = vector.extract_strided_slice %300 {offsets = [8, 48], sizes = [8, 8], strides = [1, 1]} : vector<16x96xf32> to vector<8x8xf32>
    %419 = arith.truncf %418 : vector<8x8xf32> to vector<8x8xbf16>
    %420 = vector.extract_strided_slice %300 {offsets = [8, 80], sizes = [8, 8], strides = [1, 1]} : vector<16x96xf32> to vector<8x8xf32>
    %421 = arith.truncf %420 : vector<8x8xf32> to vector<8x8xbf16>
    "tpu.trace_start"() <{level = 10 : i32, message = "sd,td->st"}> : () -> ()
    %cst_118 = arith.constant dense<0.000000e+00> : vector<8x8xf32>
    %422 = tpu.matmul %417, %419, %cst_118 {dimension_numbers = #tpu.dot_dimension_numbers<[1], [1], [0], [0], [0, 0, 1, 0], [], []>} : vector<8x8xbf16>, vector<8x8xbf16>, vector<8x8xf32> -> vector<8x8xf32>
    "tpu.trace_stop"() : () -> ()
    %cst_119 = arith.constant dense<0xFF800000> : vector<8xf32>
    %423 = vector.multi_reduction <maximumf>, %422, %cst_119 [1] : vector<8x8xf32> to vector<8xf32>
    %424 = vector.shape_cast %423 : vector<8xf32> to vector<8x1xf32>
    %425 = vector.broadcast %424 : vector<8x1xf32> to vector<8x8xf32>
    %426 = arith.subf %422, %425 : vector<8x8xf32>
    %427 = math.exp %426 : vector<8x8xf32>
    %cst_120 = arith.constant dense<0.000000e+00> : vector<8xf32>
    %428 = vector.multi_reduction <add>, %427, %cst_120 [1] : vector<8x8xf32> to vector<8xf32>
    %429 = vector.shape_cast %428 : vector<8xf32> to vector<8x1xf32>
    %430 = tpu.reciprocal %429 {approx = true} : vector<8x1xf32> -> vector<8x1xf32>
    %431 = vector.broadcast %430 : vector<8x1xf32> to vector<8x8xf32>
    %432 = arith.mulf %427, %431 : vector<8x8xf32>
    %433 = arith.truncf %432 : vector<8x8xf32> to vector<8x8xbf16>
    %cst_121 = arith.constant dense<0.000000e+00> : vector<8x8xf32>
    %434 = tpu.matmul %433, %421, %cst_121 {dimension_numbers = #tpu.dot_dimension_numbers<[1], [0], [0], [1], [0, 0, 1, 1], [], []>} : vector<8x8xbf16>, vector<8x8xbf16>, vector<8x8xf32> -> vector<8x8xf32>
    %435 = vector.extract_strided_slice %300 {offsets = [8, 24], sizes = [8, 8], strides = [1, 1]} : vector<16x96xf32> to vector<8x8xf32>
    %436 = arith.truncf %435 : vector<8x8xf32> to vector<8x8xbf16>
    %437 = vector.extract_strided_slice %300 {offsets = [8, 56], sizes = [8, 8], strides = [1, 1]} : vector<16x96xf32> to vector<8x8xf32>
    %438 = arith.truncf %437 : vector<8x8xf32> to vector<8x8xbf16>
    %439 = vector.extract_strided_slice %300 {offsets = [8, 88], sizes = [8, 8], strides = [1, 1]} : vector<16x96xf32> to vector<8x8xf32>
    %440 = arith.truncf %439 : vector<8x8xf32> to vector<8x8xbf16>
    "tpu.trace_start"() <{level = 10 : i32, message = "sd,td->st"}> : () -> ()
    %cst_122 = arith.constant dense<0.000000e+00> : vector<8x8xf32>
    %441 = tpu.matmul %436, %438, %cst_122 {dimension_numbers = #tpu.dot_dimension_numbers<[1], [1], [0], [0], [0, 0, 1, 0], [], []>} : vector<8x8xbf16>, vector<8x8xbf16>, vector<8x8xf32> -> vector<8x8xf32>
    "tpu.trace_stop"() : () -> ()
    %cst_123 = arith.constant dense<0xFF800000> : vector<8xf32>
    %442 = vector.multi_reduction <maximumf>, %441, %cst_123 [1] : vector<8x8xf32> to vector<8xf32>
    %443 = vector.shape_cast %442 : vector<8xf32> to vector<8x1xf32>
    %444 = vector.broadcast %443 : vector<8x1xf32> to vector<8x8xf32>
    %445 = arith.subf %441, %444 : vector<8x8xf32>
    %446 = math.exp %445 : vector<8x8xf32>
    %cst_124 = arith.constant dense<0.000000e+00> : vector<8xf32>
    %447 = vector.multi_reduction <add>, %446, %cst_124 [1] : vector<8x8xf32> to vector<8xf32>
    %448 = vector.shape_cast %447 : vector<8xf32> to vector<8x1xf32>
    %449 = tpu.reciprocal %448 {approx = true} : vector<8x1xf32> -> vector<8x1xf32>
    %450 = vector.broadcast %449 : vector<8x1xf32> to vector<8x8xf32>
    %451 = arith.mulf %446, %450 : vector<8x8xf32>
    %452 = arith.truncf %451 : vector<8x8xf32> to vector<8x8xbf16>
    %cst_125 = arith.constant dense<0.000000e+00> : vector<8x8xf32>
    %453 = tpu.matmul %452, %440, %cst_125 {dimension_numbers = #tpu.dot_dimension_numbers<[1], [0], [0], [1], [0, 0, 1, 1], [], []>} : vector<8x8xbf16>, vector<8x8xbf16>, vector<8x8xf32> -> vector<8x8xf32>
    %454 = tpu.concatenate %396, %415, %434, %453 in 1 : vector<8x8xf32>, vector<8x8xf32>, vector<8x8xf32>, vector<8x8xf32> -> vector<8x32xf32>
    %455 = tpu.concatenate %377, %454 in 0 : vector<8x32xf32>, vector<8x32xf32> -> vector<16x32xf32>
    %456 = arith.truncf %455 : vector<16x32xf32> to vector<16x32xbf16>
    %c1_126 = arith.constant 1 : index
    %c0_127 = arith.constant 0 : index
    %c0_128 = arith.constant 0 : index
    %457 = vector.load %arg6[%c1_126, %c0_127, %c0_128] : memref<2x32x32xbf16, #tpu.memory_space<vmem>>, vector<1x32x32xbf16>
    %458 = vector.shape_cast %457 : vector<1x32x32xbf16> to vector<32x32xbf16>
    %cst_129 = arith.constant dense<0.000000e+00> : vector<16x32xf32>
    %459 = tpu.matmul %456, %458, %cst_129 {dimension_numbers = #tpu.dot_dimension_numbers<[1], [0], [0], [1], [0, 0, 1, 1], [], []>} : vector<16x32xbf16>, vector<32x32xbf16>, vector<16x32xf32> -> vector<16x32xf32>
    %460 = vector.broadcast %287 : vector<1x32xf32> to vector<16x32xf32>
    %461 = arith.addf %459, %460 : vector<16x32xf32>
    %462 = arith.addf %284, %461 : vector<16x32xf32>
    %cst_130 = arith.constant dense<0.000000e+00> : vector<16xf32>
    %463 = vector.multi_reduction <add>, %462, %cst_130 [1] : vector<16x32xf32> to vector<16xf32>
    %464 = vector.shape_cast %463 : vector<16xf32> to vector<16x1xf32>
    %cst_131 = arith.constant 3.200000e+01 : f32
    %465 = vector.broadcast %cst_131 : f32 to vector<16x1xf32>
    %466 = arith.divf %464, %465 : vector<16x1xf32>
    %467 = vector.broadcast %466 : vector<16x1xf32> to vector<16x32xf32>
    %468 = arith.subf %462, %467 : vector<16x32xf32>
    %469 = arith.mulf %468, %468 : vector<16x32xf32>
    %cst_132 = arith.constant dense<0.000000e+00> : vector<16xf32>
    %470 = vector.multi_reduction <add>, %469, %cst_132 [1] : vector<16x32xf32> to vector<16xf32>
    %471 = vector.shape_cast %470 : vector<16xf32> to vector<16x1xf32>
    %cst_133 = arith.constant 3.200000e+01 : f32
    %472 = vector.broadcast %cst_133 : f32 to vector<16x1xf32>
    %473 = arith.divf %471, %472 : vector<16x1xf32>
    %474 = vector.broadcast %466 : vector<16x1xf32> to vector<16x32xf32>
    %475 = arith.subf %462, %474 : vector<16x32xf32>
    %cst_134 = arith.constant 9.99999996E-13 : f32
    %476 = vector.broadcast %cst_134 : f32 to vector<16x1xf32>
    %477 = arith.addf %473, %476 : vector<16x1xf32>
    %478 = math.rsqrt %477 : vector<16x1xf32>
    %479 = vector.broadcast %478 : vector<16x1xf32> to vector<16x32xf32>
    %480 = arith.mulf %475, %479 : vector<16x32xf32>
    %481 = vector.broadcast %288 : vector<1x32xf32> to vector<16x32xf32>
    %482 = arith.mulf %480, %481 : vector<16x32xf32>
    %483 = vector.broadcast %289 : vector<1x32xf32> to vector<16x32xf32>
    %484 = arith.addf %482, %483 : vector<16x32xf32>
    %485 = arith.truncf %484 : vector<16x32xf32> to vector<16x32xbf16>
    %c1_135 = arith.constant 1 : index
    %c0_136 = arith.constant 0 : index
    %c0_137 = arith.constant 0 : index
    %486 = vector.load %arg8[%c1_135, %c0_136, %c0_137] : memref<2x32x64xbf16, #tpu.memory_space<vmem>>, vector<1x32x64xbf16>
    %487 = vector.shape_cast %486 : vector<1x32x64xbf16> to vector<32x64xbf16>
    %cst_138 = arith.constant dense<0.000000e+00> : vector<16x64xf32>
    %488 = tpu.matmul %485, %487, %cst_138 {dimension_numbers = #tpu.dot_dimension_numbers<[1], [0], [0], [1], [0, 0, 1, 1], [], []>} : vector<16x32xbf16>, vector<32x64xbf16>, vector<16x64xf32> -> vector<16x64xf32>
    %c1_139 = arith.constant 1 : index
    %c0_140 = arith.constant 0 : index
    %c0_141 = arith.constant 0 : index
    %489 = vector.load %arg9[%c1_139, %c0_140, %c0_141] : memref<2x1x64xf32, #tpu.memory_space<vmem>>, vector<1x1x64xf32>
    %490 = vector.shape_cast %489 : vector<1x1x64xf32> to vector<1x64xf32>
    %491 = vector.broadcast %490 : vector<1x64xf32> to vector<16x64xf32>
    %492 = arith.addf %488, %491 : vector<16x64xf32>
    %cst_142 = arith.constant 5.000000e-01 : f32
    %493 = vector.broadcast %cst_142 : f32 to vector<16x64xf32>
    %494 = arith.mulf %493, %492 : vector<16x64xf32>
    %cst_143 = arith.constant 4.471500e-02 : f32
    %495 = vector.broadcast %cst_143 : f32 to vector<16x64xf32>
    %496 = arith.mulf %495, %492 : vector<16x64xf32>
    %497 = arith.mulf %496, %492 : vector<16x64xf32>
    %498 = arith.mulf %497, %492 : vector<16x64xf32>
    %499 = arith.addf %492, %498 : vector<16x64xf32>
    %cst_144 = arith.constant 0.797884583 : f32
    %500 = vector.broadcast %cst_144 : f32 to vector<16x64xf32>
    %501 = arith.mulf %500, %499 : vector<16x64xf32>
    %502 = math.tanh %501 : vector<16x64xf32>
    %cst_145 = arith.constant 1.000000e+00 : f32
    %503 = vector.broadcast %cst_145 : f32 to vector<16x64xf32>
    %504 = arith.addf %503, %502 : vector<16x64xf32>
    %505 = arith.mulf %494, %504 : vector<16x64xf32>
    %506 = arith.truncf %505 : vector<16x64xf32> to vector<16x64xbf16>
    %c1_146 = arith.constant 1 : index
    %c0_147 = arith.constant 0 : index
    %c0_148 = arith.constant 0 : index
    %507 = vector.load %arg10[%c1_146, %c0_147, %c0_148] : memref<2x64x32xbf16, #tpu.memory_space<vmem>>, vector<1x64x32xbf16>
    %508 = vector.shape_cast %507 : vector<1x64x32xbf16> to vector<64x32xbf16>
    %cst_149 = arith.constant dense<0.000000e+00> : vector<16x32xf32>
    %509 = tpu.matmul %506, %508, %cst_149 {dimension_numbers = #tpu.dot_dimension_numbers<[1], [0], [0], [1], [0, 0, 1, 1], [], []>} : vector<16x64xbf16>, vector<64x32xbf16>, vector<16x32xf32> -> vector<16x32xf32>
    %510 = vector.broadcast %290 : vector<1x32xf32> to vector<16x32xf32>
    %511 = arith.addf %509, %510 : vector<16x32xf32>
    %512 = arith.addf %484, %511 : vector<16x32xf32>
    %cst_150 = arith.constant dense<0.000000e+00> : vector<16xf32>
    %513 = vector.multi_reduction <add>, %512, %cst_150 [1] : vector<16x32xf32> to vector<16xf32>
    %514 = vector.shape_cast %513 : vector<16xf32> to vector<16x1xf32>
    %cst_151 = arith.constant 3.200000e+01 : f32
    %515 = vector.broadcast %cst_151 : f32 to vector<16x1xf32>
    %516 = arith.divf %514, %515 : vector<16x1xf32>
    %517 = vector.broadcast %516 : vector<16x1xf32> to vector<16x32xf32>
    %518 = arith.subf %512, %517 : vector<16x32xf32>
    %519 = arith.mulf %518, %518 : vector<16x32xf32>
    %cst_152 = arith.constant dense<0.000000e+00> : vector<16xf32>
    %520 = vector.multi_reduction <add>, %519, %cst_152 [1] : vector<16x32xf32> to vector<16xf32>
    %521 = vector.shape_cast %520 : vector<16xf32> to vector<16x1xf32>
    %cst_153 = arith.constant 3.200000e+01 : f32
    %522 = vector.broadcast %cst_153 : f32 to vector<16x1xf32>
    %523 = arith.divf %521, %522 : vector<16x1xf32>
    %524 = vector.broadcast %516 : vector<16x1xf32> to vector<16x32xf32>
    %525 = arith.subf %512, %524 : vector<16x32xf32>
    %cst_154 = arith.constant 9.99999996E-13 : f32
    %526 = vector.broadcast %cst_154 : f32 to vector<16x1xf32>
    %527 = arith.addf %523, %526 : vector<16x1xf32>
    %528 = math.rsqrt %527 : vector<16x1xf32>
    %529 = vector.broadcast %528 : vector<16x1xf32> to vector<16x32xf32>
    %530 = arith.mulf %525, %529 : vector<16x32xf32>
    %531 = vector.broadcast %291 : vector<1x32xf32> to vector<16x32xf32>
    %532 = arith.mulf %530, %531 : vector<16x32xf32>
    %533 = vector.broadcast %292 : vector<1x32xf32> to vector<16x32xf32>
    %534 = arith.addf %532, %533 : vector<16x32xf32>
    %535 = arith.truncf %534 : vector<16x32xf32> to vector<16x32xbf16>
    %c0_155 = arith.constant 0 : index
    %c0_156 = arith.constant 0 : index
    %536 = vector.load %arg11[%c0_155, %c0_156] : memref<32x128xbf16, #tpu.memory_space<vmem>>, vector<32x128xbf16>
    %cst_157 = arith.constant dense<0.000000e+00> : vector<16x128xf32>
    %537 = tpu.matmul %535, %536, %cst_157 {dimension_numbers = #tpu.dot_dimension_numbers<[1], [0], [0], [1], [0, 0, 1, 1], [], []>} : vector<16x32xbf16>, vector<32x128xbf16>, vector<16x128xf32> -> vector<16x128xf32>
    %c0_158 = arith.constant 0 : index
    %c0_159 = arith.constant 0 : index
    %538 = vector.load %arg12[%c0_158, %c0_159] : memref<1x128xf32, #tpu.memory_space<vmem>>, vector<1x128xf32>
    %539 = vector.broadcast %538 : vector<1x128xf32> to vector<16x128xf32>
    %540 = arith.addf %537, %539 : vector<16x128xf32>
    %c0_160 = arith.constant 0 : index
    %c0_161 = arith.constant 0 : index
    %541 = vector.load %arg13[%c0_160, %c0_161] : memref<16x128xf32, #tpu.memory_space<vmem>>, vector<16x128xf32>
    tpu.vector_store %arg13[%c0_160, %c0_161], %540 {strides = array<i32>} : memref<16x128xf32, #tpu.memory_space<vmem>>, vector<16x128xf32>,
    return
  }
}

</mosaic_0001>

<llo_original>
// kernel: torch_model_forward.1
$region0: #{torch_model_forward.1}
  #allocation0 [shape = 'u32[]', space=smem, size = 0x4, offset = 0x4, fixed_abs, tag = 'smem constant byte address 0x4 - core index']
  #allocation1 [shape = 'u32[144,128]{1,0:T(1,128)}', space=vmem, size = 0x12000, scoped, tag = 'internal scratch']
  %s0 = inlined_call_operand.vmem [shape: s32[16,1], index: 0, kind: input, shape index: {}]
  %s1 = inlined_call_operand.vmem [shape: bf16[32,32], index: 1, kind: input, shape index: {}]
  %s2 = inlined_call_operand.hbm [shape: f32[16,32], index: 2, kind: input, shape index: {}]
  %s3 = inlined_call_operand.vmem [shape: f32[2,32], index: 3, kind: input, shape index: {}]
  %s4 = inlined_call_operand.vmem [shape: bf16[2,32,96], index: 4, kind: input, shape index: {}]
  %s5 = inlined_call_operand.vmem [shape: f32[2,1,96], index: 5, kind: input, shape index: {}]
  %s6 = inlined_call_operand.vmem [shape: bf16[2,32,32], index: 6, kind: input, shape index: {}]
  %s7 = inlined_call_operand.vmem [shape: f32[2,6,32], index: 7, kind: input, shape index: {}]
  %s8 = inlined_call_operand.vmem [shape: bf16[2,32,64], index: 8, kind: input, shape index: {}]
  %s9 = inlined_call_operand.vmem [shape: f32[2,1,64], index: 9, kind: input, shape index: {}]
  %s10 = inlined_call_operand.vmem [shape: bf16[2,64,32], index: 10, kind: input, shape index: {}]
  %s11 = inlined_call_operand.hbm [shape: bf16[32,128], index: 11, kind: input, shape index: {}]
  %s12 = inlined_call_operand.vmem [shape: f32[1,128], index: 12, kind: input, shape index: {}]
  %s13 = inlined_call_operand.hbm [shape: f32[16,128], index: 13, kind: output, shape index: {}]
  %s14 = sld [smem:[#allocation0]]
  $region70: #{torch_model_forward.1} parent=0
    _
  %s16 = ssub.s32 1, %s14
  %s17 = scalar_select 0, %s16, %s14
  $region1: #{torch_model_forward.1} parent=0
    #allocation2 [shape = 'u8[8192]{0}', space=vmem, size = 0x2000, scoped, tag = 'input window, operand 2, single buffered']
    #allocation3 [shape = 's32[1]{0}', space=sflag, size = 0x4, scoped, tag = 'scoped memory for torch_model_forward.1']
    #allocation4 [shape = 's32[1]{0}', space=sflag, size = 0x4, scoped, tag = 'scoped memory for torch_model_forward.1']
    #allocation5 [shape = 'u8[8192]{0}', space=vmem, size = 0x2000, scoped, tag = 'input window, operand 11, single buffered']
    #allocation6 [shape = 's32[1]{0}', space=sflag, size = 0x4, scoped, tag = 'scoped memory for torch_model_forward.1']
    #allocation7 [shape = 'u8[8192]{0}', space=vmem, size = 0x2000, scoped, tag = 'output window, operand 0, single buffered']
    %18 = vsyncpa [#allocation3], 0
    %19 = vsyncpa [#allocation6], 0
    %20 = vsyncpa [#allocation4], 0
    // Predicated region
    $region2: #{torch_model_forward.1} parent=1 // pred_check
      _
    $region3: #{torch_model_forward.1} parent=1 // pred_check_branch
      %22 = sbr.rel (0) target = $region5
    $region4: #{torch_model_forward.1} parent=1 // pred_region
      _
    $region5: #{torch_model_forward.1} parent=1 // pred_fallthru
      _
    // Predicated region
    $region6: #{torch_model_forward.1} parent=1 // pred_check
      _
    $region7: #{torch_model_forward.1} parent=1 // pred_check_branch
      %24 = sbr.rel (0) target = $region9
    $region8: #{torch_model_forward.1} parent=1 // pred_region
      _
    $region9: #{torch_model_forward.1} parent=1 // pred_fallthru
      _
    // Predicated region
    $region10: #{torch_model_forward.1} parent=1 // pred_check
      _
    $region11: #{torch_model_forward.1} parent=1 // pred_check_branch
      %26 = sbr.rel (0) target = $region13
    $region12: #{torch_model_forward.1} parent=1 // pred_region
      %s28 = ssub.s32 256, 256
      %29 = vsyncadd [#allocation3], %s28
      %s30 = sshll.u32 [#allocation2], 4
      %s31 = int_to_ptr.vmem [resolvable:$true] %s30
      %36 = dma.hbm_to_vmem [thread:$0]  %s2, 256, %s31, [#allocation3], 128, 128, 8
    $region13: #{torch_model_forward.1} parent=1 // pred_fallthru
      _
    // Predicated region
    $region14: #{torch_model_forward.1} parent=1 // pred_check
      _
    $region15: #{torch_model_forward.1} parent=1 // pred_check_branch
      %38 = sbr.rel (0) target = $region17
    $region16: #{torch_model_forward.1} parent=1 // pred_region
      _
    $region17: #{torch_model_forward.1} parent=1 // pred_fallthru
      _
    // Predicated region
    $region18: #{torch_model_forward.1} parent=1 // pred_check
      _
    $region19: #{torch_model_forward.1} parent=1 // pred_check_branch
      %40 = sbr.rel (0) target = $region21
    $region20: #{torch_model_forward.1} parent=1 // pred_region
      _
    $region21: #{torch_model_forward.1} parent=1 // pred_fallthru
      _
    // Predicated region
    $region22: #{torch_model_forward.1} parent=1 // pred_check
      _
    $region23: #{torch_model_forward.1} parent=1 // pred_check_branch
      %42 = sbr.rel (0) target = $region25
    $region24: #{torch_model_forward.1} parent=1 // pred_region
      _
    $region25: #{torch_model_forward.1} parent=1 // pred_fallthru
      _
    // Predicated region
    $region26: #{torch_model_forward.1} parent=1 // pred_check
      _
    $region27: #{torch_model_forward.1} parent=1 // pred_check_branch
      %44 = sbr.rel (0) target = $region29
    $region28: #{torch_model_forward.1} parent=1 // pred_region
      _
    $region29: #{torch_model_forward.1} parent=1 // pred_fallthru
      _
    // Predicated region
    $region30: #{torch_model_forward.1} parent=1 // pred_check
      _
    $region31: #{torch_model_forward.1} parent=1 // pred_check_branch
      %46 = sbr.rel (0) target = $region33
    $region32: #{torch_model_forward.1} parent=1 // pred_region
      _
    $region33: #{torch_model_forward.1} parent=1 // pred_fallthru
      _
    // Predicated region
    $region34: #{torch_model_forward.1} parent=1 // pred_check
      _
    $region35: #{torch_model_forward.1} parent=1 // pred_check_branch
      %48 = sbr.rel (0) target = $region37
    $region36: #{torch_model_forward.1} parent=1 // pred_region
      _
    $region37: #{torch_model_forward.1} parent=1 // pred_fallthru
      _
    // Predicated region
    $region38: #{torch_model_forward.1} parent=1 // pred_check
      _
    $region39: #{torch_model_forward.1} parent=1 // pred_check_branch
      %50 = sbr.rel (0) target = $region41
    $region40: #{torch_model_forward.1} parent=1 // pred_region
      _
    $region41: #{torch_model_forward.1} parent=1 // pred_fallthru
      _
    // Predicated region
    $region42: #{torch_model_forward.1} parent=1 // pred_check
      _
    $region43: #{torch_model_forward.1} parent=1 // pred_check_branch
      %52 = sbr.rel (0) target = $region45
    $region44: #{torch_model_forward.1} parent=1 // pred_region
      _
    $region45: #{torch_model_forward.1} parent=1 // pred_fallthru
      _
    // Predicated region
    $region46: #{torch_model_forward.1} parent=1 // pred_check
      _
    $region47: #{torch_model_forward.1} parent=1 // pred_check_branch
      %54 = sbr.rel (0) target = $region49
    $region48: #{torch_model_forward.1} parent=1 // pred_region
      %s56 = ssub.s32 256, 256
      %57 = vsyncadd [#allocation6], %s56
      %s58 = sshll.u32 [#allocation5], 4
      %s59 = int_to_ptr.vmem [resolvable:$true] %s58
      %64 = dma.hbm_to_vmem [thread:$0]  %s11, 256, %s59, [#allocation6], 64, 64, 4
    $region49: #{torch_model_forward.1} parent=1 // pred_fallthru
      _
    // Predicated region
    $region50: #{torch_model_forward.1} parent=1 // pred_check
      _
    $region51: #{torch_model_forward.1} parent=1 // pred_check_branch
      %66 = sbr.rel (0) target = $region53
    $region52: #{torch_model_forward.1} parent=1 // pred_region
      _
    $region53: #{torch_model_forward.1} parent=1 // pred_fallthru
      _
    // Predicated region
    $region54: #{torch_model_forward.1} parent=1 // pred_check
      _
    $region55: #{torch_model_forward.1} parent=1 // pred_check_branch
      %68 = sbr.rel (0) target = $region57
    $region56: #{torch_model_forward.1} parent=1 // pred_region
      %69 = dma.done [#allocation3], 256
    $region57: #{torch_model_forward.1} parent=1 // pred_fallthru
      _
    // Predicated region
    $region58: #{torch_model_forward.1} parent=1 // pred_check
      _
    $region59: #{torch_model_forward.1} parent=1 // pred_check_branch
      %71 = sbr.rel (0) target = $region61
    $region60: #{torch_model_forward.1} parent=1 // pred_region
      %72 = dma.done [#allocation6], 256
    $region61: #{torch_model_forward.1} parent=1 // pred_fallthru
      _
    %v74 = vld [vmem:[%s0] sm:$0xff]
    %v75 = vld [vmem:[%s0 + $0x8] sm:$0xff]
    %v76 = vlaneseq
    %v77 = vand.u32 %v76, 127
    %78 = vset.pattern.permute.xlu0 0
    %79 = vperm.xlu0 %78, %v74
    %v80 = vpop.permute.xlu0 %79
    %81 = vset.pattern.permute.xlu0 0
    %82 = vperm.xlu0 %81, %v75
    %v83 = vpop.permute.xlu0 %82
    %vm84 = vcmp.eq.s32.totalorder %v77, %v80
    %vm85 = vcmp.eq.s32.totalorder %v77, %v83
    %v86 = vsel %vm84, 1, 0
    %v87 = vsel %vm85, 1, 0
    %v88 = vcvt.s32.f32 %v86
    %v89 = vcvt.s32.f32 %v87
    %v90 = vpack.c.bf16 %v89, %v88
    %v91 = vld [vmem:[%s1] sm:$0xf]
    %v92 = vld [vmem:[%s1 + $0x4] sm:$0xf]
    %v93 = vld [vmem:[%s1 + $0x8] sm:$0xf]
    %v94 = vld [vmem:[%s1 + $0xc] sm:$0xf]
    %v95 = vld [vmem:[#allocation2] sm:$0xff]
    %v96 = vld [vmem:[#allocation2 + $0x8] sm:$0xff]
    %v101 = vunpack.c.l.b16 %v91
    %v102 = vunpack.c.l.b16 %v92
    %v103 = vunpack.c.l.b16 %v93
    %v104 = vunpack.c.l.b16 %v94
    %v105 = vpack.c.b16 %v102, %v101
    %v106 = vpack.c.b16 %v104, %v103
    %vm109 = vcmask 261120
    %v111 = vsel %vm109, %v90, 0
    %113 = vmatprep.subr.bf16.mxu0 0
    %114 = vmatpush1.bf16.msra.mxu0 0
    %115 = vmatprep.subr.bf16.mxu0 0
    %116 = vmatpush1.bf16.msra.mxu0 0
    %117 = vmatprep.subr.bf16.mxu0 0
    %118 = vmatpush1.bf16.msra.mxu0 0
    %119 = vmatprep.subr.bf16.mxu0 0
    %120 = vmatpush1.bf16.msra.mxu0 0
    %121 = vmatprep.subr.bf16.mxu0 0
    %122 = vmatpush1.bf16.msra.mxu0 0
    %123 = vmatprep.subr.bf16.mxu0 0
    %124 = vmatpush1.bf16.msra.mxu0 0
    %125 = vmatprep.subr.bf16.mxu0 0
    %126 = vmatpush1.bf16.msra.mxu0 %v106
    %127 = vmatprep.subr.bf16.mxu0 0
    %128 = vmatpush1.bf16.msra.mxu0 %v105
    %129 = vmatprep.subr.bf16.mxu0 0
    %130 = vmatpush2.bf16.msra.mxu0 0
    %131 = vmatprep.subr.bf16.mxu0 0
    %132 = vmatpush2.bf16.msra.mxu0 0
    %133 = vmatprep.subr.bf16.mxu0 0
    %134 = vmatpush2.bf16.msra.mxu0 0
    %135 = vmatprep.subr.bf16.mxu0 0
    %136 = vmatpush2.bf16.msra.mxu0 0
    %137 = vmatprep.subr.bf16.mxu0 0
    %138 = vmatpush2.bf16.msra.mxu0 0
    %139 = vmatprep.subr.bf16.mxu0 0
    %140 = vmatpush2.bf16.msra.mxu0 0
    %141 = vmatprep.subr.bf16.mxu0 0
    %142 = vmatpush2.bf16.msra.mxu0 0
    %143 = vmatprep.subr.bf16.mxu0 0
    %144 = vmatpush2.bf16.msra.mxu0 0
    %145 = vmatprep.mubr.bf16.mxu0 0
    %146 = vmatmul.mubr.bf16.gmra.mxu0 %v111
    %v147 = vpop.f32.mrf.mxu0
    %v148 = vadd.f32 %v95, %v147
    %v149 = vpop.f32.mrf.mxu0
    %v150 = vpop.f32.mrf.mxu0
    %v151 = vadd.f32 %v96, %v150
    %v152 = vpop.f32.mrf.mxu0
    %153 = vdwg.mxu0
    %v154 = vld [vmem:[%s3] sm:$0x1]
    %v155 = vld [vmem:[%s3 + $0x1] sm:$0x1]
    %v156 = vsel %vm109, %v148, 0.0
    %157 = vadd.xlane.f32.xlu0 %v156
    %v158 = vpop.xlane.xlu0 %157
    %v159 = vsel %vm109, %v151, 0.0
    %160 = vadd.xlane.f32.xlu0 %v159
    %v161 = vpop.xlane.xlu0 %160
    %v162 = vrcp.pop 32.0
    %v163 = vmul.f32 %v158, %v162
    %v164 = vmul.f32 %v161, %v162
    %v165 = vsub.f32 %v148, %v163
    %v166 = vsub.f32 %v151, %v164
    %v167 = vmul.f32 %v165, %v165
    %v168 = vmul.f32 %v166, %v166
    %v169 = vsel %vm109, %v167, 0.0
    %170 = vadd.xlane.f32.xlu0 %v169
    %v171 = vpop.xlane.xlu0 %170
    %v172 = vsel %vm109, %v168, 0.0
    %173 = vadd.xlane.f32.xlu0 %v172
    %v174 = vpop.xlane.xlu0 %173
    %v175 = vmul.f32 %v171, %v162
    %v176 = vmul.f32 %v174, %v162
    %v177 = vadd.f32 %v175, 1e-12
    %v178 = vadd.f32 %v176, 1e-12
    %v179 = vrsqrt.pop %v177
    %v180 = vrsqrt.pop %v178
    %v181 = vmul.f32 %v165, %v179
    %v182 = vmul.f32 %v166, %v180
    %v183 = vlaneseq
    %v184 = vshrl.u32 %v183, 7
    %v185 = vsub.s32 0, %v184
    %v186 = vrot.slane %v154, %v185
    %v187 = vmul.f32 %v181, %v186
    %v188 = vmul.f32 %v182, %v186
    %v189 = vlaneseq
    %v190 = vshrl.u32 %v189, 7
    %v191 = vsub.s32 0, %v190
    %v192 = vrot.slane %v155, %v191
    %v193 = vadd.f32 %v187, %v192
    %v194 = vadd.f32 %v188, %v192
    %v195 = vld [vmem:[%s7] sm:$0x3f]
    %v196 = vpack.c.bf16 %v194, %v193
    %v197 = vld [vmem:[%s4] sm:$0xf]
    %v198 = vld [vmem:[%s4 + $0x4] sm:$0xf]
    %v199 = vld [vmem:[%s4 + $0x8] sm:$0xf]
    %v200 = vld [vmem:[%s4 + $0xc] sm:$0xf]
    %v201 = vld [vmem:[%s5] sm:$0x1]
    %v203 = vlaneseq
    %v204 = vshrl.u32 %v203, 7
    %v205 = vsub.s32 0, %v204
    %v206 = vrot.slane %v201, %v205
    %v212 = vunpack.c.l.b16 %v197
    %v213 = vunpack.c.l.b16 %v198
    %v214 = vunpack.c.l.b16 %v199
    %v215 = vunpack.c.l.b16 %v200
    %v216 = vpack.c.b16 %v213, %v212
    %v217 = vpack.c.b16 %v215, %v214
    %v221 = vsel %vm109, %v196, 0
    %223 = vmatprep.subr.bf16.mxu0 0
    %224 = vmatpush1.bf16.msra.mxu0 0
    %225 = vmatprep.subr.bf16.mxu0 0
    %226 = vmatpush1.bf16.msra.mxu0 0
    %227 = vmatprep.subr.bf16.mxu0 0
    %228 = vmatpush1.bf16.msra.mxu0 0
    %229 = vmatprep.subr.bf16.mxu0 0
    %230 = vmatpush1.bf16.msra.mxu0 0
    %231 = vmatprep.subr.bf16.mxu0 0
    %232 = vmatpush1.bf16.msra.mxu0 0
    %233 = vmatprep.subr.bf16.mxu0 0
    %234 = vmatpush1.bf16.msra.mxu0 0
    %235 = vmatprep.subr.bf16.mxu0 0
    %236 = vmatpush1.bf16.msra.mxu0 %v217
    %237 = vmatprep.subr.bf16.mxu0 0
    %238 = vmatpush1.bf16.msra.mxu0 %v216
    %239 = vmatprep.subr.bf16.mxu0 0
    %240 = vmatpush2.bf16.msra.mxu0 0
    %241 = vmatprep.subr.bf16.mxu0 0
    %242 = vmatpush2.bf16.msra.mxu0 0
    %243 = vmatprep.subr.bf16.mxu0 0
    %244 = vmatpush2.bf16.msra.mxu0 0
    %245 = vmatprep.subr.bf16.mxu0 0
    %246 = vmatpush2.bf16.msra.mxu0 0
    %247 = vmatprep.subr.bf16.mxu0 0
    %248 = vmatpush2.bf16.msra.mxu0 0
    %249 = vmatprep.subr.bf16.mxu0 0
    %250 = vmatpush2.bf16.msra.mxu0 0
    %251 = vmatprep.subr.bf16.mxu0 0
    %252 = vmatpush2.bf16.msra.mxu0 0
    %253 = vmatprep.subr.bf16.mxu0 0
    %254 = vmatpush2.bf16.msra.mxu0 0
    %255 = vmatprep.mubr.bf16.mxu0 0
    %256 = vmatmul.mubr.bf16.gmra.mxu0 %v221
    %v257 = vpop.f32.mrf.mxu0
    %v258 = vadd.f32 %v206, %v257
    %v259 = vpop.f32.mrf.mxu0
    %v260 = vpop.f32.mrf.mxu0
    %v261 = vadd.f32 %v206, %v260
    %v262 = vpop.f32.mrf.mxu0
    %263 = vdwg.mxu0
    %v264 = vpack.c.bf16 %v258, %v258
    %266 = vrot.lane.b32.xlu0 %v264, 96
    %v267 = vpop.permute.xlu0 %266
    %vm268 = vcmask 64512
    %v270 = vsel %vm268, %v264, 0
    %v273 = vsel %vm268, %v267, 0
    %275 = vmatprep.subr.bf16.mxu0 0
    %276 = vmatpush1.bf16.xpose.msra.mxu0 0
    %277 = vmatprep.subr.bf16.mxu0 0
    %278 = vmatpush1.bf16.xpose.msra.mxu0 0
    %279 = vmatprep.subr.bf16.mxu0 0
    %280 = vmatpush1.bf16.xpose.msra.mxu0 0
    %281 = vmatprep.subr.bf16.mxu0 0
    %282 = vmatpush1.bf16.xpose.msra.mxu0 0
    %283 = vmatprep.subr.bf16.mxu0 0
    %284 = vmatpush1.bf16.xpose.msra.mxu0 0
    %285 = vmatprep.subr.bf16.mxu0 0
    %286 = vmatpush1.bf16.xpose.msra.mxu0 0
    %287 = vmatprep.subr.bf16.mxu0 0
    %288 = vmatpush1.bf16.xpose.msra.mxu0 0
    %289 = vmatprep.subr.bf16.mxu0 0
    %290 = vmatpush1.bf16.xpose.msra.mxu0 %v273
    %291 = vmatprep.subr.bf16.mxu0 0
    %292 = vmatpush2.bf16.xpose.msra.mxu0 0
    %293 = vmatprep.subr.bf16.mxu0 0
    %294 = vmatpush2.bf16.xpose.msra.mxu0 0
    %295 = vmatprep.subr.bf16.mxu0 0
    %296 = vmatpush2.bf16.xpose.msra.mxu0 0
    %297 = vmatprep.subr.bf16.mxu0 0
    %298 = vmatpush2.bf16.xpose.msra.mxu0 0
    %299 = vmatprep.subr.bf16.mxu0 0
    %300 = vmatpush2.bf16.xpose.msra.mxu0 0
    %301 = vmatprep.subr.bf16.mxu0 0
    %302 = vmatpush2.bf16.xpose.msra.mxu0 0
    %303 = vmatprep.subr.bf16.mxu0 0
    %304 = vmatpush2.bf16.xpose.msra.mxu0 0
    %305 = vmatprep.subr.bf16.mxu0 0
    %306 = vmatpush2.bf16.xpose.msra.mxu0 0
    %307 = vmatprep.mubr.bf16.mxu0 0
    %308 = vmatmul.mubr.bf16.gmra.mxu0 %v270
    %v309 = vpop.f32.mrf.mxu0
    %v310 = vadd.f32 0.0, %v309
    %v311 = vpop.f32.mrf.mxu0
    %v312 = vpop.f32.mrf.mxu0
    %v313 = vpop.f32.mrf.mxu0
    %314 = vdwg.mxu0
    %v315 = vsel %vm268, %v310, -inf
    %316 = vmax.xlane.f32.xlu0 %v315
    %v317 = vpop.xlane.xlu0 %316
    %v318 = vsub.f32 %v310, %v317
    %v319 = vmul.f32 %v318, 1.442695
    %v320 = vpow.pop %v319
    %v321 = vsel %vm268, %v320, 0.0
    %322 = vadd.xlane.f32.xlu0 %v321
    %v323 = vpop.xlane.xlu0 %322
    %v324 = vrcp.pop %v323
    %v325 = vmul.f32 %v320, %v324
    %v326 = vpack.c.bf16 %v325, %v325
    %327 = vrot.lane.b32.xlu0 %v264, 64
    %v328 = vpop.permute.xlu0 %327
    %v330 = vsel %vm268, %v326, 0
    %vm332 = vcmask 1043456
    %v334 = vsel %vm332, %v328, 0
    %336 = vmatprep.subr.bf16.mxu0 0
    %337 = vmatpush1.bf16.msra.mxu0 0
    %338 = vmatprep.subr.bf16.mxu0 0
    %339 = vmatpush1.bf16.msra.mxu0 0
    %340 = vmatprep.subr.bf16.mxu0 0
    %341 = vmatpush1.bf16.msra.mxu0 0
    %342 = vmatprep.subr.bf16.mxu0 0
    %343 = vmatpush1.bf16.msra.mxu0 0
    %344 = vmatprep.subr.bf16.mxu0 0
    %345 = vmatpush1.bf16.msra.mxu0 0
    %346 = vmatprep.subr.bf16.mxu0 0
    %347 = vmatpush1.bf16.msra.mxu0 0
    %348 = vmatprep.subr.bf16.mxu0 0
    %349 = vmatpush1.bf16.msra.mxu0 0
    %350 = vmatprep.subr.bf16.mxu0 0
    %351 = vmatpush1.bf16.msra.mxu0 %v334
    %352 = vmatprep.subr.bf16.mxu0 0
    %353 = vmatpush2.bf16.msra.mxu0 0
    %354 = vmatprep.subr.bf16.mxu0 0
    %355 = vmatpush2.bf16.msra.mxu0 0
    %356 = vmatprep.subr.bf16.mxu0 0
    %357 = vmatpush2.bf16.msra.mxu0 0
    %358 = vmatprep.subr.bf16.mxu0 0
    %359 = vmatpush2.bf16.msra.mxu0 0
    %360 = vmatprep.subr.bf16.mxu0 0
    %361 = vmatpush2.bf16.msra.mxu0 0
    %362 = vmatprep.subr.bf16.mxu0 0
    %363 = vmatpush2.bf16.msra.mxu0 0
    %364 = vmatprep.subr.bf16.mxu0 0
    %365 = vmatpush2.bf16.msra.mxu0 0
    %366 = vmatprep.subr.bf16.mxu0 0
    %367 = vmatpush2.bf16.msra.mxu0 0
    %368 = vmatprep.mubr.bf16.mxu0 0
    %369 = vmatmul.mubr.bf16.gmra.mxu0 %v330
    %v370 = vpop.f32.mrf.mxu0
    %v371 = vadd.f32 0.0, %v370
    %v372 = vpop.f32.mrf.mxu0
    %v373 = vpop.f32.mrf.mxu0
    %v374 = vpop.f32.mrf.mxu0
    %375 = vdwg.mxu0
    %376 = vrot.lane.b32.xlu0 %v264, 120
    %v377 = vpop.permute.xlu0 %376
    %378 = vrot.lane.b32.xlu0 %v264, 88
    %v379 = vpop.permute.xlu0 %378
    %v381 = vsel %vm268, %v377, 0
    %v384 = vsel %vm268, %v379, 0
    %386 = vmatprep.subr.bf16.mxu0 0
    %387 = vmatpush1.bf16.xpose.msra.mxu0 0
    %388 = vmatprep.subr.bf16.mxu0 0
    %389 = vmatpush1.bf16.xpose.msra.mxu0 0
    %390 = vmatprep.subr.bf16.mxu0 0
    %391 = vmatpush1.bf16.xpose.msra.mxu0 0
    %392 = vmatprep.subr.bf16.mxu0 0
    %393 = vmatpush1.bf16.xpose.msra.mxu0 0
    %394 = vmatprep.subr.bf16.mxu0 0
    %395 = vmatpush1.bf16.xpose.msra.mxu0 0
    %396 = vmatprep.subr.bf16.mxu0 0
    %397 = vmatpush1.bf16.xpose.msra.mxu0 0
    %398 = vmatprep.subr.bf16.mxu0 0
    %399 = vmatpush1.bf16.xpose.msra.mxu0 0
    %400 = vmatprep.subr.bf16.mxu0 0
    %401 = vmatpush1.bf16.xpose.msra.mxu0 %v384
    %402 = vmatprep.subr.bf16.mxu0 0
    %403 = vmatpush2.bf16.xpose.msra.mxu0 0
    %404 = vmatprep.subr.bf16.mxu0 0
    %405 = vmatpush2.bf16.xpose.msra.mxu0 0
    %406 = vmatprep.subr.bf16.mxu0 0
    %407 = vmatpush2.bf16.xpose.msra.mxu0 0
    %408 = vmatprep.subr.bf16.mxu0 0
    %409 = vmatpush2.bf16.xpose.msra.mxu0 0
    %410 = vmatprep.subr.bf16.mxu0 0
    %411 = vmatpush2.bf16.xpose.msra.mxu0 0
    %412 = vmatprep.subr.bf16.mxu0 0
    %413 = vmatpush2.bf16.xpose.msra.mxu0 0
    %414 = vmatprep.subr.bf16.mxu0 0
    %415 = vmatpush2.bf16.xpose.msra.mxu0 0
    %416 = vmatprep.subr.bf16.mxu0 0
    %417 = vmatpush2.bf16.xpose.msra.mxu0 0
    %418 = vmatprep.mubr.bf16.mxu0 0
    %419 = vmatmul.mubr.bf16.gmra.mxu0 %v381
    %v420 = vpop.f32.mrf.mxu0
    %v421 = vadd.f32 0.0, %v420
    %v422 = vpop.f32.mrf.mxu0
    %v423 = vpop.f32.mrf.mxu0
    %v424 = vpop.f32.mrf.mxu0
    %425 = vdwg.mxu0
    %v426 = vsel %vm268, %v421, -inf
    %427 = vmax.xlane.f32.xlu0 %v426
    %v428 = vpop.xlane.xlu0 %427
    %v429 = vsub.f32 %v421, %v428
    %v430 = vmul.f32 %v429, 1.442695
    %v431 = vpow.pop %v430
    %v432 = vsel %vm268, %v431, 0.0
    %433 = vadd.xlane.f32.xlu0 %v432
    %v434 = vpop.xlane.xlu0 %433
    %v435 = vrcp.pop %v434
    %v436 = vmul.f32 %v431, %v435
    %v437 = vpack.c.bf16 %v436, %v436
    %438 = vrot.lane.b32.xlu0 %v264, 56
    %v439 = vpop.permute.xlu0 %438
    %v441 = vsel %vm268, %v437, 0
    %v444 = vsel %vm332, %v439, 0
    %446 = vmatprep.subr.bf16.mxu0 0
    %447 = vmatpush1.bf16.msra.mxu0 0
    %448 = vmatprep.subr.bf16.mxu0 0
    %449 = vmatpush1.bf16.msra.mxu0 0
    %450 = vmatprep.subr.bf16.mxu0 0
    %451 = vmatpush1.bf16.msra.mxu0 0
    %452 = vmatprep.subr.bf16.mxu0 0
    %453 = vmatpush1.bf16.msra.mxu0 0
    %454 = vmatprep.subr.bf16.mxu0 0
    %455 = vmatpush1.bf16.msra.mxu0 0
    %456 = vmatprep.subr.bf16.mxu0 0
    %457 = vmatpush1.bf16.msra.mxu0 0
    %458 = vmatprep.subr.bf16.mxu0 0
    %459 = vmatpush1.bf16.msra.mxu0 0
    %460 = vmatprep.subr.bf16.mxu0 0
    %461 = vmatpush1.bf16.msra.mxu0 %v444
    %462 = vmatprep.subr.bf16.mxu0 0
    %463 = vmatpush2.bf16.msra.mxu0 0
    %464 = vmatprep.subr.bf16.mxu0 0
    %465 = vmatpush2.bf16.msra.mxu0 0
    %466 = vmatprep.subr.bf16.mxu0 0
    %467 = vmatpush2.bf16.msra.mxu0 0
    %468 = vmatprep.subr.bf16.mxu0 0
    %469 = vmatpush2.bf16.msra.mxu0 0
    %470 = vmatprep.subr.bf16.mxu0 0
    %471 = vmatpush2.bf16.msra.mxu0 0
    %472 = vmatprep.subr.bf16.mxu0 0
    %473 = vmatpush2.bf16.msra.mxu0 0
    %474 = vmatprep.subr.bf16.mxu0 0
    %475 = vmatpush2.bf16.msra.mxu0 0
    %476 = vmatprep.subr.bf16.mxu0 0
    %477 = vmatpush2.bf16.msra.mxu0 0
    %478 = vmatprep.mubr.bf16.mxu0 0
    %479 = vmatmul.mubr.bf16.gmra.mxu0 %v441
    %v480 = vpop.f32.mrf.mxu0
    %v481 = vadd.f32 0.0, %v480
    %v482 = vpop.f32.mrf.mxu0
    %v483 = vpop.f32.mrf.mxu0
    %v484 = vpop.f32.mrf.mxu0
    %485 = vdwg.mxu0
    %486 = vrot.lane.b32.xlu0 %v264, 112
    %v487 = vpop.permute.xlu0 %486
    %488 = vrot.lane.b32.xlu0 %v264, 80
    %v489 = vpop.permute.xlu0 %488
    %v491 = vsel %vm268, %v487, 0
    %v494 = vsel %vm268, %v489, 0
    %496 = vmatprep.subr.bf16.mxu0 0
    %497 = vmatpush1.bf16.xpose.msra.mxu0 0
    %498 = vmatprep.subr.bf16.mxu0 0
    %499 = vmatpush1.bf16.xpose.msra.mxu0 0
    %500 = vmatprep.subr.bf16.mxu0 0
    %501 = vmatpush1.bf16.xpose.msra.mxu0 0
    %502 = vmatprep.subr.bf16.mxu0 0
    %503 = vmatpush1.bf16.xpose.msra.mxu0 0
    %504 = vmatprep.subr.bf16.mxu0 0
    %505 = vmatpush1.bf16.xpose.msra.mxu0 0
    %506 = vmatprep.subr.bf16.mxu0 0
    %507 = vmatpush1.bf16.xpose.msra.mxu0 0
    %508 = vmatprep.subr.bf16.mxu0 0
    %509 = vmatpush1.bf16.xpose.msra.mxu0 0
    %510 = vmatprep.subr.bf16.mxu0 0
    %511 = vmatpush1.bf16.xpose.msra.mxu0 %v494
    %512 = vmatprep.subr.bf16.mxu0 0
    %513 = vmatpush2.bf16.xpose.msra.mxu0 0
    %514 = vmatprep.subr.bf16.mxu0 0
    %515 = vmatpush2.bf16.xpose.msra.mxu0 0
    %516 = vmatprep.subr.bf16.mxu0 0
    %517 = vmatpush2.bf16.xpose.msra.mxu0 0
    %518 = vmatprep.subr.bf16.mxu0 0
    %519 = vmatpush2.bf16.xpose.msra.mxu0 0
    %520 = vmatprep.subr.bf16.mxu0 0
    %521 = vmatpush2.bf16.xpose.msra.mxu0 0
    %522 = vmatprep.subr.bf16.mxu0 0
    %523 = vmatpush2.bf16.xpose.msra.mxu0 0
    %524 = vmatprep.subr.bf16.mxu0 0
    %525 = vmatpush2.bf16.xpose.msra.mxu0 0
    %526 = vmatprep.subr.bf16.mxu0 0
    %527 = vmatpush2.bf16.xpose.msra.mxu0 0
    %528 = vmatprep.mubr.bf16.mxu0 0
    %529 = vmatmul.mubr.bf16.gmra.mxu0 %v491
    %v530 = vpop.f32.mrf.mxu0
    %v531 = vadd.f32 0.0, %v530
    %v532 = vpop.f32.mrf.mxu0
    %v533 = vpop.f32.mrf.mxu0
    %v534 = vpop.f32.mrf.mxu0
    %535 = vdwg.mxu0
    %v536 = vsel %vm268, %v531, -inf
    %537 = vmax.xlane.f32.xlu0 %v536
    %v538 = vpop.xlane.xlu0 %537
    %v539 = vsub.f32 %v531, %v538
    %v540 = vmul.f32 %v539, 1.442695
    %v541 = vpow.pop %v540
    %v542 = vsel %vm268, %v541, 0.0
    %543 = vadd.xlane.f32.xlu0 %v542
    %v544 = vpop.xlane.xlu0 %543
    %v545 = vrcp.pop %v544
    %v546 = vmul.f32 %v541, %v545
    %v547 = vpack.c.bf16 %v546, %v546
    %548 = vrot.lane.b32.xlu0 %v264, 48
    %v549 = vpop.permute.xlu0 %548
    %v551 = vsel %vm268, %v547, 0
    %v554 = vsel %vm332, %v549, 0
    %556 = vmatprep.subr.bf16.mxu0 0
    %557 = vmatpush1.bf16.msra.mxu0 0
    %558 = vmatprep.subr.bf16.mxu0 0
    %559 = vmatpush1.bf16.msra.mxu0 0
    %560 = vmatprep.subr.bf16.mxu0 0
    %561 = vmatpush1.bf16.msra.mxu0 0
    %562 = vmatprep.subr.bf16.mxu0 0
    %563 = vmatpush1.bf16.msra.mxu0 0
    %564 = vmatprep.subr.bf16.mxu0 0
    %565 = vmatpush1.bf16.msra.mxu0 0
    %566 = vmatprep.subr.bf16.mxu0 0
    %567 = vmatpush1.bf16.msra.mxu0 0
    %568 = vmatprep.subr.bf16.mxu0 0
    %569 = vmatpush1.bf16.msra.mxu0 0
    %570 = vmatprep.subr.bf16.mxu0 0
    %571 = vmatpush1.bf16.msra.mxu0 %v554
    %572 = vmatprep.subr.bf16.mxu0 0
    %573 = vmatpush2.bf16.msra.mxu0 0
    %574 = vmatprep.subr.bf16.mxu0 0
    %575 = vmatpush2.bf16.msra.mxu0 0
    %576 = vmatprep.subr.bf16.mxu0 0
    %577 = vmatpush2.bf16.msra.mxu0 0
    %578 = vmatprep.subr.bf16.mxu0 0
    %579 = vmatpush2.bf16.msra.mxu0 0
    %580 = vmatprep.subr.bf16.mxu0 0
    %581 = vmatpush2.bf16.msra.mxu0 0
    %582 = vmatprep.subr.bf16.mxu0 0
    %583 = vmatpush2.bf16.msra.mxu0 0
    %584 = vmatprep.subr.bf16.mxu0 0
    %585 = vmatpush2.bf16.msra.mxu0 0
    %586 = vmatprep.subr.bf16.mxu0 0
    %587 = vmatpush2.bf16.msra.mxu0 0
    %588 = vmatprep.mubr.bf16.mxu0 0
    %589 = vmatmul.mubr.bf16.gmra.mxu0 %v551
    %v590 = vpop.f32.mrf.mxu0
    %v591 = vadd.f32 0.0, %v590
    %v592 = vpop.f32.mrf.mxu0
    %v593 = vpop.f32.mrf.mxu0
    %v594 = vpop.f32.mrf.mxu0
    %595 = vdwg.mxu0
    %596 = vrot.lane.b32.xlu0 %v264, 104
    %v597 = vpop.permute.xlu0 %596
    %598 = vrot.lane.b32.xlu0 %v264, 72
    %v599 = vpop.permute.xlu0 %598
    %v601 = vsel %vm268, %v597, 0
    %v604 = vsel %vm268, %v599, 0
    %606 = vmatprep.subr.bf16.mxu0 0
    %607 = vmatpush1.bf16.xpose.msra.mxu0 0
    %608 = vmatprep.subr.bf16.mxu0 0
    %609 = vmatpush1.bf16.xpose.msra.mxu0 0
    %610 = vmatprep.subr.bf16.mxu0 0
    %611 = vmatpush1.bf16.xpose.msra.mxu0 0
    %612 = vmatprep.subr.bf16.mxu0 0
    %613 = vmatpush1.bf16.xpose.msra.mxu0 0
    %614 = vmatprep.subr.bf16.mxu0 0
    %615 = vmatpush1.bf16.xpose.msra.mxu0 0
    %616 = vmatprep.subr.bf16.mxu0 0
    %617 = vmatpush1.bf16.xpose.msra.mxu0 0
    %618 = vmatprep.subr.bf16.mxu0 0
    %619 = vmatpush1.bf16.xpose.msra.mxu0 0
    %620 = vmatprep.subr.bf16.mxu0 0
    %621 = vmatpush1.bf16.xpose.msra.mxu0 %v604
    %622 = vmatprep.subr.bf16.mxu0 0
    %623 = vmatpush2.bf16.xpose.msra.mxu0 0
    %624 = vmatprep.subr.bf16.mxu0 0
    %625 = vmatpush2.bf16.xpose.msra.mxu0 0
    %626 = vmatprep.subr.bf16.mxu0 0
    %627 = vmatpush2.bf16.xpose.msra.mxu0 0
    %628 = vmatprep.subr.bf16.mxu0 0
    %629 = vmatpush2.bf16.xpose.msra.mxu0 0
    %630 = vmatprep.subr.bf16.mxu0 0
    %631 = vmatpush2.bf16.xpose.msra.mxu0 0
    %632 = vmatprep.subr.bf16.mxu0 0
    %633 = vmatpush2.bf16.xpose.msra.mxu0 0
    %634 = vmatprep.subr.bf16.mxu0 0
    %635 = vmatpush2.bf16.xpose.msra.mxu0 0
    %636 = vmatprep.subr.bf16.mxu0 0
    %637 = vmatpush2.bf16.xpose.msra.mxu0 0
    %638 = vmatprep.mubr.bf16.mxu0 0
    %639 = vmatmul.mubr.bf16.gmra.mxu0 %v601
    %v640 = vpop.f32.mrf.mxu0
    %v641 = vadd.f32 0.0, %v640
    %v642 = vpop.f32.mrf.mxu0
    %v643 = vpop.f32.mrf.mxu0
    %v644 = vpop.f32.mrf.mxu0
    %645 = vdwg.mxu0
    %v646 = vsel %vm268, %v641, -inf
    %647 = vmax.xlane.f32.xlu0 %v646
    %v648 = vpop.xlane.xlu0 %647
    %v649 = vsub.f32 %v641, %v648
    %v650 = vmul.f32 %v649, 1.442695
    %v651 = vpow.pop %v650
    %v652 = vsel %vm268, %v651, 0.0
    %653 = vadd.xlane.f32.xlu0 %v652
    %v654 = vpop.xlane.xlu0 %653
    %v655 = vrcp.pop %v654
    %v656 = vmul.f32 %v651, %v655
    %v657 = vpack.c.bf16 %v656, %v656
    %658 = vrot.lane.b32.xlu0 %v264, 40
    %v659 = vpop.permute.xlu0 %658
    %v661 = vsel %vm268, %v657, 0
    %v664 = vsel %vm332, %v659, 0
    %666 = vmatprep.subr.bf16.mxu0 0
    %667 = vmatpush1.bf16.msra.mxu0 0
    %668 = vmatprep.subr.bf16.mxu0 0
    %669 = vmatpush1.bf16.msra.mxu0 0
    %670 = vmatprep.subr.bf16.mxu0 0
    %671 = vmatpush1.bf16.msra.mxu0 0
    %672 = vmatprep.subr.bf16.mxu0 0
    %673 = vmatpush1.bf16.msra.mxu0 0
    %674 = vmatprep.subr.bf16.mxu0 0
    %675 = vmatpush1.bf16.msra.mxu0 0
    %676 = vmatprep.subr.bf16.mxu0 0
    %677 = vmatpush1.bf16.msra.mxu0 0
    %678 = vmatprep.subr.bf16.mxu0 0
    %679 = vmatpush1.bf16.msra.mxu0 0
    %680 = vmatprep.subr.bf16.mxu0 0
    %681 = vmatpush1.bf16.msra.mxu0 %v664
    %682 = vmatprep.subr.bf16.mxu0 0
    %683 = vmatpush2.bf16.msra.mxu0 0
    %684 = vmatprep.subr.bf16.mxu0 0
    %685 = vmatpush2.bf16.msra.mxu0 0
    %686 = vmatprep.subr.bf16.mxu0 0
    %687 = vmatpush2.bf16.msra.mxu0 0
    %688 = vmatprep.subr.bf16.mxu0 0
    %689 = vmatpush2.bf16.msra.mxu0 0
    %690 = vmatprep.subr.bf16.mxu0 0
    %691 = vmatpush2.bf16.msra.mxu0 0
    %692 = vmatprep.subr.bf16.mxu0 0
    %693 = vmatpush2.bf16.msra.mxu0 0
    %694 = vmatprep.subr.bf16.mxu0 0
    %695 = vmatpush2.bf16.msra.mxu0 0
    %696 = vmatprep.subr.bf16.mxu0 0
    %697 = vmatpush2.bf16.msra.mxu0 0
    %698 = vmatprep.mubr.bf16.mxu0 0
    %699 = vmatmul.mubr.bf16.gmra.mxu0 %v661
    %v700 = vpop.f32.mrf.mxu0
    %v701 = vadd.f32 0.0, %v700
    %v702 = vpop.f32.mrf.mxu0
    %v703 = vpop.f32.mrf.mxu0
    %v704 = vpop.f32.mrf.mxu0
    %705 = vdwg.mxu0
    %707 = vrot.lane.b32.xlu0 %v481, 8
    %v708 = vpop.permute.xlu0 %707
    %711 = vrot.lane.b32.xlu0 %v591, 16
    %v712 = vpop.permute.xlu0 %711
    %715 = vrot.lane.b32.xlu0 %v701, 24
    %v716 = vpop.permute.xlu0 %715
    %v718 = vsel %vm268, %v371, %v708
    %vm719 = vcmask 130048
    %v720 = vsel %vm719, %v718, %v712
    %vm721 = vcmask 195584
    %v722 = vsel %vm721, %v720, %v716
    %v723 = vpack.c.bf16 %v261, %v261
    %725 = vrot.lane.b32.xlu0 %v723, 96
    %v726 = vpop.permute.xlu0 %725
    %v728 = vsel %vm268, %v723, 0
    %v731 = vsel %vm268, %v726, 0
    %733 = vmatprep.subr.bf16.mxu0 0
    %734 = vmatpush1.bf16.xpose.msra.mxu0 0
    %735 = vmatprep.subr.bf16.mxu0 0
    %736 = vmatpush1.bf16.xpose.msra.mxu0 0
    %737 = vmatprep.subr.bf16.mxu0 0
    %738 = vmatpush1.bf16.xpose.msra.mxu0 0
    %739 = vmatprep.subr.bf16.mxu0 0
    %740 = vmatpush1.bf16.xpose.msra.mxu0 0
    %741 = vmatprep.subr.bf16.mxu0 0
    %742 = vmatpush1.bf16.xpose.msra.mxu0 0
    %743 = vmatprep.subr.bf16.mxu0 0
    %744 = vmatpush1.bf16.xpose.msra.mxu0 0
    %745 = vmatprep.subr.bf16.mxu0 0
    %746 = vmatpush1.bf16.xpose.msra.mxu0 0
    %747 = vmatprep.subr.bf16.mxu0 0
    %748 = vmatpush1.bf16.xpose.msra.mxu0 %v731
    %749 = vmatprep.subr.bf16.mxu0 0
    %750 = vmatpush2.bf16.xpose.msra.mxu0 0
    %751 = vmatprep.subr.bf16.mxu0 0
    %752 = vmatpush2.bf16.xpose.msra.mxu0 0
    %753 = vmatprep.subr.bf16.mxu0 0
    %754 = vmatpush2.bf16.xpose.msra.mxu0 0
    %755 = vmatprep.subr.bf16.mxu0 0
    %756 = vmatpush2.bf16.xpose.msra.mxu0 0
    %757 = vmatprep.subr.bf16.mxu0 0
    %758 = vmatpush2.bf16.xpose.msra.mxu0 0
    %759 = vmatprep.subr.bf16.mxu0 0
    %760 = vmatpush2.bf16.xpose.msra.mxu0 0
    %761 = vmatprep.subr.bf16.mxu0 0
    %762 = vmatpush2.bf16.xpose.msra.mxu0 0
    %763 = vmatprep.subr.bf16.mxu0 0
    %764 = vmatpush2.bf16.xpose.msra.mxu0 0
    %765 = vmatprep.mubr.bf16.mxu0 0
    %766 = vmatmul.mubr.bf16.gmra.mxu0 %v728
    %v767 = vpop.f32.mrf.mxu0
    %v768 = vadd.f32 0.0, %v767
    %v769 = vpop.f32.mrf.mxu0
    %v770 = vpop.f32.mrf.mxu0
    %v771 = vpop.f32.mrf.mxu0
    %772 = vdwg.mxu0
    %v773 = vsel %vm268, %v768, -inf
    %774 = vmax.xlane.f32.xlu0 %v773
    %v775 = vpop.xlane.xlu0 %774
    %v776 = vsub.f32 %v768, %v775
    %v777 = vmul.f32 %v776, 1.442695
    %v778 = vpow.pop %v777
    %v779 = vsel %vm268, %v778, 0.0
    %780 = vadd.xlane.f32.xlu0 %v779
    %v781 = vpop.xlane.xlu0 %780
    %v782 = vrcp.pop %v781
    %v783 = vmul.f32 %v778, %v782
    %v784 = vpack.c.bf16 %v783, %v783
    %785 = vrot.lane.b32.xlu0 %v723, 64
    %v786 = vpop.permute.xlu0 %785
    %v788 = vsel %vm268, %v784, 0
    %v791 = vsel %vm332, %v786, 0
    %793 = vmatprep.subr.bf16.mxu0 0
    %794 = vmatpush1.bf16.msra.mxu0 0
    %795 = vmatprep.subr.bf16.mxu0 0
    %796 = vmatpush1.bf16.msra.mxu0 0
    %797 = vmatprep.subr.bf16.mxu0 0
    %798 = vmatpush1.bf16.msra.mxu0 0
    %799 = vmatprep.subr.bf16.mxu0 0
    %800 = vmatpush1.bf16.msra.mxu0 0
    %801 = vmatprep.subr.bf16.mxu0 0
    %802 = vmatpush1.bf16.msra.mxu0 0
    %803 = vmatprep.subr.bf16.mxu0 0
    %804 = vmatpush1.bf16.msra.mxu0 0
    %805 = vmatprep.subr.bf16.mxu0 0
    %806 = vmatpush1.bf16.msra.mxu0 0
    %807 = vmatprep.subr.bf16.mxu0 0
    %808 = vmatpush1.bf16.msra.mxu0 %v791
    %809 = vmatprep.subr.bf16.mxu0 0
    %810 = vmatpush2.bf16.msra.mxu0 0
    %811 = vmatprep.subr.bf16.mxu0 0
    %812 = vmatpush2.bf16.msra.mxu0 0
    %813 = vmatprep.subr.bf16.mxu0 0
    %814 = vmatpush2.bf16.msra.mxu0 0
    %815 = vmatprep.subr.bf16.mxu0 0
    %816 = vmatpush2.bf16.msra.mxu0 0
    %817 = vmatprep.subr.bf16.mxu0 0
    %818 = vmatpush2.bf16.msra.mxu0 0
    %819 = vmatprep.subr.bf16.mxu0 0
    %820 = vmatpush2.bf16.msra.mxu0 0
    %821 = vmatprep.subr.bf16.mxu0 0
    %822 = vmatpush2.bf16.msra.mxu0 0
    %823 = vmatprep.subr.bf16.mxu0 0
    %824 = vmatpush2.bf16.msra.mxu0 0
    %825 = vmatprep.mubr.bf16.mxu0 0
    %826 = vmatmul.mubr.bf16.gmra.mxu0 %v788
    %v827 = vpop.f32.mrf.mxu0
    %v828 = vadd.f32 0.0, %v827
    %v829 = vpop.f32.mrf.mxu0
    %v830 = vpop.f32.mrf.mxu0
    %v831 = vpop.f32.mrf.mxu0
    %832 = vdwg.mxu0
    %833 = vrot.lane.b32.xlu0 %v723, 120
    %v834 = vpop.permute.xlu0 %833
    %835 = vrot.lane.b32.xlu0 %v723, 88
    %v836 = vpop.permute.xlu0 %835
    %v838 = vsel %vm268, %v834, 0
    %v841 = vsel %vm268, %v836, 0
    %843 = vmatprep.subr.bf16.mxu0 0
    %844 = vmatpush1.bf16.xpose.msra.mxu0 0
    %845 = vmatprep.subr.bf16.mxu0 0
    %846 = vmatpush1.bf16.xpose.msra.mxu0 0
    %847 = vmatprep.subr.bf16.mxu0 0
    %848 = vmatpush1.bf16.xpose.msra.mxu0 0
    %849 = vmatprep.subr.bf16.mxu0 0
    %850 = vmatpush1.bf16.xpose.msra.mxu0 0
    %851 = vmatprep.subr.bf16.mxu0 0
    %852 = vmatpush1.bf16.xpose.msra.mxu0 0
    %853 = vmatprep.subr.bf16.mxu0 0
    %854 = vmatpush1.bf16.xpose.msra.mxu0 0
    %855 = vmatprep.subr.bf16.mxu0 0
    %856 = vmatpush1.bf16.xpose.msra.mxu0 0
    %857 = vmatprep.subr.bf16.mxu0 0
    %858 = vmatpush1.bf16.xpose.msra.mxu0 %v841
    %859 = vmatprep.subr.bf16.mxu0 0
    %860 = vmatpush2.bf16.xpose.msra.mxu0 0
    %861 = vmatprep.subr.bf16.mxu0 0
    %862 = vmatpush2.bf16.xpose.msra.mxu0 0
    %863 = vmatprep.subr.bf16.mxu0 0
    %864 = vmatpush2.bf16.xpose.msra.mxu0 0
    %865 = vmatprep.subr.bf16.mxu0 0
    %866 = vmatpush2.bf16.xpose.msra.mxu0 0
    %867 = vmatprep.subr.bf16.mxu0 0
    %868 = vmatpush2.bf16.xpose.msra.mxu0 0
    %869 = vmatprep.subr.bf16.mxu0 0
    %870 = vmatpush2.bf16.xpose.msra.mxu0 0
    %871 = vmatprep.subr.bf16.mxu0 0
    %872 = vmatpush2.bf16.xpose.msra.mxu0 0
    %873 = vmatprep.subr.bf16.mxu0 0
    %874 = vmatpush2.bf16.xpose.msra.mxu0 0
    %875 = vmatprep.mubr.bf16.mxu0 0
    %876 = vmatmul.mubr.bf16.gmra.mxu0 %v838
    %v877 = vpop.f32.mrf.mxu0
    %v878 = vadd.f32 0.0, %v877
    %v879 = vpop.f32.mrf.mxu0
    %v880 = vpop.f32.mrf.mxu0
    %v881 = vpop.f32.mrf.mxu0
    %882 = vdwg.mxu0
    %v883 = vsel %vm268, %v878, -inf
    %884 = vmax.xlane.f32.xlu0 %v883
    %v885 = vpop.xlane.xlu0 %884
    %v886 = vsub.f32 %v878, %v885
    %v887 = vmul.f32 %v886, 1.442695
    %v888 = vpow.pop %v887
    %v889 = vsel %vm268, %v888, 0.0
    %890 = vadd.xlane.f32.xlu0 %v889
    %v891 = vpop.xlane.xlu0 %890
    %v892 = vrcp.pop %v891
    %v893 = vmul.f32 %v888, %v892
    %v894 = vpack.c.bf16 %v893, %v893
    %895 = vrot.lane.b32.xlu0 %v723, 56
    %v896 = vpop.permute.xlu0 %895
    %v898 = vsel %vm268, %v894, 0
    %v901 = vsel %vm332, %v896, 0
    %903 = vmatprep.subr.bf16.mxu0 0
    %904 = vmatpush1.bf16.msra.mxu0 0
    %905 = vmatprep.subr.bf16.mxu0 0
    %906 = vmatpush1.bf16.msra.mxu0 0
    %907 = vmatprep.subr.bf16.mxu0 0
    %908 = vmatpush1.bf16.msra.mxu0 0
    %909 = vmatprep.subr.bf16.mxu0 0
    %910 = vmatpush1.bf16.msra.mxu0 0
    %911 = vmatprep.subr.bf16.mxu0 0
    %912 = vmatpush1.bf16.msra.mxu0 0
    %913 = vmatprep.subr.bf16.mxu0 0
    %914 = vmatpush1.bf16.msra.mxu0 0
    %915 = vmatprep.subr.bf16.mxu0 0
    %916 = vmatpush1.bf16.msra.mxu0 0
    %917 = vmatprep.subr.bf16.mxu0 0
    %918 = vmatpush1.bf16.msra.mxu0 %v901
    %919 = vmatprep.subr.bf16.mxu0 0
    %920 = vmatpush2.bf16.msra.mxu0 0
    %921 = vmatprep.subr.bf16.mxu0 0
    %922 = vmatpush2.bf16.msra.mxu0 0
    %923 = vmatprep.subr.bf16.mxu0 0
    %924 = vmatpush2.bf16.msra.mxu0 0
    %925 = vmatprep.subr.bf16.mxu0 0
    %926 = vmatpush2.bf16.msra.mxu0 0
    %927 = vmatprep.subr.bf16.mxu0 0
    %928 = vmatpush2.bf16.msra.mxu0 0
    %929 = vmatprep.subr.bf16.mxu0 0
    %930 = vmatpush2.bf16.msra.mxu0 0
    %931 = vmatprep.subr.bf16.mxu0 0
    %932 = vmatpush2.bf16.msra.mxu0 0
    %933 = vmatprep.subr.bf16.mxu0 0
    %934 = vmatpush2.bf16.msra.mxu0 0
    %935 = vmatprep.mubr.bf16.mxu0 0
    %936 = vmatmul.mubr.bf16.gmra.mxu0 %v898
    %v937 = vpop.f32.mrf.mxu0
    %v938 = vadd.f32 0.0, %v937
    %v939 = vpop.f32.mrf.mxu0
    %v940 = vpop.f32.mrf.mxu0
    %v941 = vpop.f32.mrf.mxu0
    %942 = vdwg.mxu0
    %943 = vrot.lane.b32.xlu0 %v723, 112
    %v944 = vpop.permute.xlu0 %943
    %945 = vrot.lane.b32.xlu0 %v723, 80
    %v946 = vpop.permute.xlu0 %945
    %v948 = vsel %vm268, %v944, 0
    %v951 = vsel %vm268, %v946, 0
    %953 = vmatprep.subr.bf16.mxu0 0
    %954 = vmatpush1.bf16.xpose.msra.mxu0 0
    %955 = vmatprep.subr.bf16.mxu0 0
    %956 = vmatpush1.bf16.xpose.msra.mxu0 0
    %957 = vmatprep.subr.bf16.mxu0 0
    %958 = vmatpush1.bf16.xpose.msra.mxu0 0
    %959 = vmatprep.subr.bf16.mxu0 0
    %960 = vmatpush1.bf16.xpose.msra.mxu0 0
    %961 = vmatprep.subr.bf16.mxu0 0
    %962 = vmatpush1.bf16.xpose.msra.mxu0 0
    %963 = vmatprep.subr.bf16.mxu0 0
    %964 = vmatpush1.bf16.xpose.msra.mxu0 0
    %965 = vmatprep.subr.bf16.mxu0 0
    %966 = vmatpush1.bf16.xpose.msra.mxu0 0
    %967 = vmatprep.subr.bf16.mxu0 0
    %968 = vmatpush1.bf16.xpose.msra.mxu0 %v951
    %969 = vmatprep.subr.bf16.mxu0 0
    %970 = vmatpush2.bf16.xpose.msra.mxu0 0
    %971 = vmatprep.subr.bf16.mxu0 0
    %972 = vmatpush2.bf16.xpose.msra.mxu0 0
    %973 = vmatprep.subr.bf16.mxu0 0
    %974 = vmatpush2.bf16.xpose.msra.mxu0 0
    %975 = vmatprep.subr.bf16.mxu0 0
    %976 = vmatpush2.bf16.xpose.msra.mxu0 0
    %977 = vmatprep.subr.bf16.mxu0 0
    %978 = vmatpush2.bf16.xpose.msra.mxu0 0
    %979 = vmatprep.subr.bf16.mxu0 0
    %980 = vmatpush2.bf16.xpose.msra.mxu0 0
    %981 = vmatprep.subr.bf16.mxu0 0
    %982 = vmatpush2.bf16.xpose.msra.mxu0 0
    %983 = vmatprep.subr.bf16.mxu0 0
    %984 = vmatpush2.bf16.xpose.msra.mxu0 0
    %985 = vmatprep.mubr.bf16.mxu0 0
    %986 = vmatmul.mubr.bf16.gmra.mxu0 %v948
    %v987 = vpop.f32.mrf.mxu0
    %v988 = vadd.f32 0.0, %v987
    %v989 = vpop.f32.mrf.mxu0
    %v990 = vpop.f32.mrf.mxu0
    %v991 = vpop.f32.mrf.mxu0
    %992 = vdwg.mxu0
    %v993 = vsel %vm268, %v988, -inf
    %994 = vmax.xlane.f32.xlu0 %v993
    %v995 = vpop.xlane.xlu0 %994
    %v996 = vsub.f32 %v988, %v995
    %v997 = vmul.f32 %v996, 1.442695
    %v998 = vpow.pop %v997
    %v999 = vsel %vm268, %v998, 0.0
    %1000 = vadd.xlane.f32.xlu0 %v999
    %v1001 = vpop.xlane.xlu0 %1000
    %v1002 = vrcp.pop %v1001
    %v1003 = vmul.f32 %v998, %v1002
    %v1004 = vpack.c.bf16 %v1003, %v1003
    %1005 = vrot.lane.b32.xlu0 %v723, 48
    %v1006 = vpop.permute.xlu0 %1005
    %v1008 = vsel %vm268, %v1004, 0
    %v1011 = vsel %vm332, %v1006, 0
    %1013 = vmatprep.subr.bf16.mxu0 0
    %1014 = vmatpush1.bf16.msra.mxu0 0
    %1015 = vmatprep.subr.bf16.mxu0 0
    %1016 = vmatpush1.bf16.msra.mxu0 0
    %1017 = vmatprep.subr.bf16.mxu0 0
    %1018 = vmatpush1.bf16.msra.mxu0 0
    %1019 = vmatprep.subr.bf16.mxu0 0
    %1020 = vmatpush1.bf16.msra.mxu0 0
    %1021 = vmatprep.subr.bf16.mxu0 0
    %1022 = vmatpush1.bf16.msra.mxu0 0
    %1023 = vmatprep.subr.bf16.mxu0 0
    %1024 = vmatpush1.bf16.msra.mxu0 0
    %1025 = vmatprep.subr.bf16.mxu0 0
    %1026 = vmatpush1.bf16.msra.mxu0 0
    %1027 = vmatprep.subr.bf16.mxu0 0
    %1028 = vmatpush1.bf16.msra.mxu0 %v1011
    %1029 = vmatprep.subr.bf16.mxu0 0
    %1030 = vmatpush2.bf16.msra.mxu0 0
    %1031 = vmatprep.subr.bf16.mxu0 0
    %1032 = vmatpush2.bf16.msra.mxu0 0
    %1033 = vmatprep.subr.bf16.mxu0 0
    %1034 = vmatpush2.bf16.msra.mxu0 0
    %1035 = vmatprep.subr.bf16.mxu0 0
    %1036 = vmatpush2.bf16.msra.mxu0 0
    %1037 = vmatprep.subr.bf16.mxu0 0
    %1038 = vmatpush2.bf16.msra.mxu0 0
    %1039 = vmatprep.subr.bf16.mxu0 0
    %1040 = vmatpush2.bf16.msra.mxu0 0
    %1041 = vmatprep.subr.bf16.mxu0 0
    %1042 = vmatpush2.bf16.msra.mxu0 0
    %1043 = vmatprep.subr.bf16.mxu0 0
    %1044 = vmatpush2.bf16.msra.mxu0 0
    %1045 = vmatprep.mubr.bf16.mxu0 0
    %1046 = vmatmul.mubr.bf16.gmra.mxu0 %v1008
    %v1047 = vpop.f32.mrf.mxu0
    %v1048 = vadd.f32 0.0, %v1047
    %v1049 = vpop.f32.mrf.mxu0
    %v1050 = vpop.f32.mrf.mxu0
    %v1051 = vpop.f32.mrf.mxu0
    %1052 = vdwg.mxu0
    %1053 = vrot.lane.b32.xlu0 %v723, 104
    %v1054 = vpop.permute.xlu0 %1053
    %1055 = vrot.lane.b32.xlu0 %v723, 72
    %v1056 = vpop.permute.xlu0 %1055
    %v1058 = vsel %vm268, %v1054, 0
    %v1061 = vsel %vm268, %v1056, 0
    %1063 = vmatprep.subr.bf16.mxu0 0
    %1064 = vmatpush1.bf16.xpose.msra.mxu0 0
    %1065 = vmatprep.subr.bf16.mxu0 0
    %1066 = vmatpush1.bf16.xpose.msra.mxu0 0
    %1067 = vmatprep.subr.bf16.mxu0 0
    %1068 = vmatpush1.bf16.xpose.msra.mxu0 0
    %1069 = vmatprep.subr.bf16.mxu0 0
    %1070 = vmatpush1.bf16.xpose.msra.mxu0 0
    %1071 = vmatprep.subr.bf16.mxu0 0
    %1072 = vmatpush1.bf16.xpose.msra.mxu0 0
    %1073 = vmatprep.subr.bf16.mxu0 0
    %1074 = vmatpush1.bf16.xpose.msra.mxu0 0
    %1075 = vmatprep.subr.bf16.mxu0 0
    %1076 = vmatpush1.bf16.xpose.msra.mxu0 0
    %1077 = vmatprep.subr.bf16.mxu0 0
    %1078 = vmatpush1.bf16.xpose.msra.mxu0 %v1061
    %1079 = vmatprep.subr.bf16.mxu0 0
    %1080 = vmatpush2.bf16.xpose.msra.mxu0 0
    %1081 = vmatprep.subr.bf16.mxu0 0
    %1082 = vmatpush2.bf16.xpose.msra.mxu0 0
    %1083 = vmatprep.subr.bf16.mxu0 0
    %1084 = vmatpush2.bf16.xpose.msra.mxu0 0
    %1085 = vmatprep.subr.bf16.mxu0 0
    %1086 = vmatpush2.bf16.xpose.msra.mxu0 0
    %1087 = vmatprep.subr.bf16.mxu0 0
    %1088 = vmatpush2.bf16.xpose.msra.mxu0 0
    %1089 = vmatprep.subr.bf16.mxu0 0
    %1090 = vmatpush2.bf16.xpose.msra.mxu0 0
    %1091 = vmatprep.subr.bf16.mxu0 0
    %1092 = vmatpush2.bf16.xpose.msra.mxu0 0
    %1093 = vmatprep.subr.bf16.mxu0 0
    %1094 = vmatpush2.bf16.xpose.msra.mxu0 0
    %1095 = vmatprep.mubr.bf16.mxu0 0
    %1096 = vmatmul.mubr.bf16.gmra.mxu0 %v1058
    %v1097 = vpop.f32.mrf.mxu0
    %v1098 = vadd.f32 0.0, %v1097
    %v1099 = vpop.f32.mrf.mxu0
    %v1100 = vpop.f32.mrf.mxu0
    %v1101 = vpop.f32.mrf.mxu0
    %1102 = vdwg.mxu0
    %v1103 = vsel %vm268, %v1098, -inf
    %1104 = vmax.xlane.f32.xlu0 %v1103
    %v1105 = vpop.xlane.xlu0 %1104
    %v1106 = vsub.f32 %v1098, %v1105
    %v1107 = vmul.f32 %v1106, 1.442695
    %v1108 = vpow.pop %v1107
    %v1109 = vsel %vm268, %v1108, 0.0
    %1110 = vadd.xlane.f32.xlu0 %v1109
    %v1111 = vpop.xlane.xlu0 %1110
    %v1112 = vrcp.pop %v1111
    %v1113 = vmul.f32 %v1108, %v1112
    %v1114 = vpack.c.bf16 %v1113, %v1113
    %1115 = vrot.lane.b32.xlu0 %v723, 40
    %v1116 = vpop.permute.xlu0 %1115
    %v1118 = vsel %vm268, %v1114, 0
    %v1121 = vsel %vm332, %v1116, 0
    %1123 = vmatprep.subr.bf16.mxu0 0
    %1124 = vmatpush1.bf16.msra.mxu0 0
    %1125 = vmatprep.subr.bf16.mxu0 0
    %1126 = vmatpush1.bf16.msra.mxu0 0
    %1127 = vmatprep.subr.bf16.mxu0 0
    %1128 = vmatpush1.bf16.msra.mxu0 0
    %1129 = vmatprep.subr.bf16.mxu0 0
    %1130 = vmatpush1.bf16.msra.mxu0 0
    %1131 = vmatprep.subr.bf16.mxu0 0
    %1132 = vmatpush1.bf16.msra.mxu0 0
    %1133 = vmatprep.subr.bf16.mxu0 0
    %1134 = vmatpush1.bf16.msra.mxu0 0
    %1135 = vmatprep.subr.bf16.mxu0 0
    %1136 = vmatpush1.bf16.msra.mxu0 0
    %1137 = vmatprep.subr.bf16.mxu0 0
    %1138 = vmatpush1.bf16.msra.mxu0 %v1121
    %1139 = vmatprep.subr.bf16.mxu0 0
    %1140 = vmatpush2.bf16.msra.mxu0 0
    %1141 = vmatprep.subr.bf16.mxu0 0
    %1142 = vmatpush2.bf16.msra.mxu0 0
    %1143 = vmatprep.subr.bf16.mxu0 0
    %1144 = vmatpush2.bf16.msra.mxu0 0
    %1145 = vmatprep.subr.bf16.mxu0 0
    %1146 = vmatpush2.bf16.msra.mxu0 0
    %1147 = vmatprep.subr.bf16.mxu0 0
    %1148 = vmatpush2.bf16.msra.mxu0 0
    %1149 = vmatprep.subr.bf16.mxu0 0
    %1150 = vmatpush2.bf16.msra.mxu0 0
    %1151 = vmatprep.subr.bf16.mxu0 0
    %1152 = vmatpush2.bf16.msra.mxu0 0
    %1153 = vmatprep.subr.bf16.mxu0 0
    %1154 = vmatpush2.bf16.msra.mxu0 0
    %1155 = vmatprep.mubr.bf16.mxu0 0
    %1156 = vmatmul.mubr.bf16.gmra.mxu0 %v1118
    %v1157 = vpop.f32.mrf.mxu0
    %v1158 = vadd.f32 0.0, %v1157
    %v1159 = vpop.f32.mrf.mxu0
    %v1160 = vpop.f32.mrf.mxu0
    %v1161 = vpop.f32.mrf.mxu0
    %1162 = vdwg.mxu0
    %1164 = vrot.lane.b32.xlu0 %v938, 8
    %v1165 = vpop.permute.xlu0 %1164
    %1168 = vrot.lane.b32.xlu0 %v1048, 16
    %v1169 = vpop.permute.xlu0 %1168
    %1172 = vrot.lane.b32.xlu0 %v1158, 24
    %v1173 = vpop.permute.xlu0 %1172
    %v1175 = vsel %vm268, %v828, %v1165
    %v1176 = vsel %vm719, %v1175, %v1169
    %v1177 = vsel %vm721, %v1176, %v1173
    %v1178 = vpack.c.bf16 %v1177, %v722
    %v1179 = vld [vmem:[%s6] sm:$0xf]
    %v1180 = vld [vmem:[%s6 + $0x4] sm:$0xf]
    %v1181 = vld [vmem:[%s6 + $0x8] sm:$0xf]
    %v1182 = vld [vmem:[%s6 + $0xc] sm:$0xf]
    %v1183 = vlaneseq
    %v1184 = vshrl.u32 %v1183, 7
    %v1185 = vsub.s32 0, %v1184
    %v1186 = vrot.slane %v195, %v1185
    %v1191 = vunpack.c.l.b16 %v1179
    %v1192 = vunpack.c.l.b16 %v1180
    %v1193 = vunpack.c.l.b16 %v1181
    %v1194 = vunpack.c.l.b16 %v1182
    %v1195 = vpack.c.b16 %v1192, %v1191
    %v1196 = vpack.c.b16 %v1194, %v1193
    %v1200 = vsel %vm109, %v1178, 0
    %1202 = vmatprep.subr.bf16.mxu0 0
    %1203 = vmatpush1.bf16.msra.mxu0 0
    %1204 = vmatprep.subr.bf16.mxu0 0
    %1205 = vmatpush1.bf16.msra.mxu0 0
    %1206 = vmatprep.subr.bf16.mxu0 0
    %1207 = vmatpush1.bf16.msra.mxu0 0
    %1208 = vmatprep.subr.bf16.mxu0 0
    %1209 = vmatpush1.bf16.msra.mxu0 0
    %1210 = vmatprep.subr.bf16.mxu0 0
    %1211 = vmatpush1.bf16.msra.mxu0 0
    %1212 = vmatprep.subr.bf16.mxu0 0
    %1213 = vmatpush1.bf16.msra.mxu0 0
    %1214 = vmatprep.subr.bf16.mxu0 0
    %1215 = vmatpush1.bf16.msra.mxu0 %v1196
    %1216 = vmatprep.subr.bf16.mxu0 0
    %1217 = vmatpush1.bf16.msra.mxu0 %v1195
    %1218 = vmatprep.subr.bf16.mxu0 0
    %1219 = vmatpush2.bf16.msra.mxu0 0
    %1220 = vmatprep.subr.bf16.mxu0 0
    %1221 = vmatpush2.bf16.msra.mxu0 0
    %1222 = vmatprep.subr.bf16.mxu0 0
    %1223 = vmatpush2.bf16.msra.mxu0 0
    %1224 = vmatprep.subr.bf16.mxu0 0
    %1225 = vmatpush2.bf16.msra.mxu0 0
    %1226 = vmatprep.subr.bf16.mxu0 0
    %1227 = vmatpush2.bf16.msra.mxu0 0
    %1228 = vmatprep.subr.bf16.mxu0 0
    %1229 = vmatpush2.bf16.msra.mxu0 0
    %1230 = vmatprep.subr.bf16.mxu0 0
    %1231 = vmatpush2.bf16.msra.mxu0 0
    %1232 = vmatprep.subr.bf16.mxu0 0
    %1233 = vmatpush2.bf16.msra.mxu0 0
    %1234 = vmatprep.mubr.bf16.mxu0 0
    %1235 = vmatmul.mubr.bf16.gmra.mxu0 %v1200
    %v1236 = vpop.f32.mrf.mxu0
    %v1237 = vadd.f32 %v1186, %v1236
    %v1238 = vpop.f32.mrf.mxu0
    %v1239 = vpop.f32.mrf.mxu0
    %v1240 = vadd.f32 %v1186, %v1239
    %v1241 = vpop.f32.mrf.mxu0
    %1242 = vdwg.mxu0
    %v1243 = vadd.f32 %v193, %v1237
    %v1244 = vadd.f32 %v194, %v1240
    %v1245 = vsel %vm109, %v1243, 0.0
    %1246 = vadd.xlane.f32.xlu0 %v1245
    %v1247 = vpop.xlane.xlu0 %1246
    %v1248 = vsel %vm109, %v1244, 0.0
    %1249 = vadd.xlane.f32.xlu0 %v1248
    %v1250 = vpop.xlane.xlu0 %1249
    %v1251 = vmul.f32 %v1247, %v162
    %v1252 = vmul.f32 %v1250, %v162
    %v1253 = vsub.f32 %v1243, %v1251
    %v1254 = vsub.f32 %v1244, %v1252
    %v1255 = vmul.f32 %v1253, %v1253
    %v1256 = vmul.f32 %v1254, %v1254
    %v1257 = vsel %vm109, %v1255, 0.0
    %1258 = vadd.xlane.f32.xlu0 %v1257
    %v1259 = vpop.xlane.xlu0 %1258
    %v1260 = vsel %vm109, %v1256, 0.0
    %1261 = vadd.xlane.f32.xlu0 %v1260
    %v1262 = vpop.xlane.xlu0 %1261
    %v1263 = vmul.f32 %v1259, %v162
    %v1264 = vmul.f32 %v1262, %v162
    %v1265 = vadd.f32 %v1263, 1e-12
    %v1266 = vadd.f32 %v1264, 1e-12
    %v1267 = vrsqrt.pop %v1265
    %v1268 = vrsqrt.pop %v1266
    %v1269 = vmul.f32 %v1253, %v1267
    %v1270 = vmul.f32 %v1254, %v1268
    %v1271 = vlaneseq
    %v1272 = vshrl.u32 %v1271, 7
    %v1273 = vsub.s32 1, %v1272
    %v1274 = vrot.slane %v195, %v1273
    %v1275 = vmul.f32 %v1269, %v1274
    %v1276 = vmul.f32 %v1270, %v1274
    %v1277 = vlaneseq
    %v1278 = vshrl.u32 %v1277, 7
    %v1279 = vsub.s32 2, %v1278
    %v1280 = vrot.slane %v195, %v1279
    %v1281 = vadd.f32 %v1275, %v1280
    %v1282 = vadd.f32 %v1276, %v1280
    %v1283 = vpack.c.bf16 %v1282, %v1281
    %v1284 = vld [vmem:[%s8] sm:$0xf]
    %v1285 = vld [vmem:[%s8 + $0x4] sm:$0xf]
    %v1286 = vld [vmem:[%s8 + $0x8] sm:$0xf]
    %v1287 = vld [vmem:[%s8 + $0xc] sm:$0xf]
    %v1288 = vld [vmem:[%s9] sm:$0x1]
    %v1290 = vlaneseq
    %v1291 = vshrl.u32 %v1290, 7
    %v1292 = vsub.s32 0, %v1291
    %v1293 = vrot.slane %v1288, %v1292
    %v1299 = vunpack.c.l.b16 %v1284
    %v1300 = vunpack.c.l.b16 %v1285
    %v1301 = vunpack.c.l.b16 %v1286
    %v1302 = vunpack.c.l.b16 %v1287
    %v1303 = vpack.c.b16 %v1300, %v1299
    %v1304 = vpack.c.b16 %v1302, %v1301
    %v1308 = vsel %vm109, %v1283, 0
    %1310 = vmatprep.subr.bf16.mxu0 0
    %1311 = vmatpush1.bf16.msra.mxu0 0
    %1312 = vmatprep.subr.bf16.mxu0 0
    %1313 = vmatpush1.bf16.msra.mxu0 0
    %1314 = vmatprep.subr.bf16.mxu0 0
    %1315 = vmatpush1.bf16.msra.mxu0 0
    %1316 = vmatprep.subr.bf16.mxu0 0
    %1317 = vmatpush1.bf16.msra.mxu0 0
    %1318 = vmatprep.subr.bf16.mxu0 0
    %1319 = vmatpush1.bf16.msra.mxu0 0
    %1320 = vmatprep.subr.bf16.mxu0 0
    %1321 = vmatpush1.bf16.msra.mxu0 0
    %1322 = vmatprep.subr.bf16.mxu0 0
    %1323 = vmatpush1.bf16.msra.mxu0 %v1304
    %1324 = vmatprep.subr.bf16.mxu0 0
    %1325 = vmatpush1.bf16.msra.mxu0 %v1303
    %1326 = vmatprep.subr.bf16.mxu0 0
    %1327 = vmatpush2.bf16.msra.mxu0 0
    %1328 = vmatprep.subr.bf16.mxu0 0
    %1329 = vmatpush2.bf16.msra.mxu0 0
    %1330 = vmatprep.subr.bf16.mxu0 0
    %1331 = vmatpush2.bf16.msra.mxu0 0
    %1332 = vmatprep.subr.bf16.mxu0 0
    %1333 = vmatpush2.bf16.msra.mxu0 0
    %1334 = vmatprep.subr.bf16.mxu0 0
    %1335 = vmatpush2.bf16.msra.mxu0 0
    %1336 = vmatprep.subr.bf16.mxu0 0
    %1337 = vmatpush2.bf16.msra.mxu0 0
    %1338 = vmatprep.subr.bf16.mxu0 0
    %1339 = vmatpush2.bf16.msra.mxu0 0
    %1340 = vmatprep.subr.bf16.mxu0 0
    %1341 = vmatpush2.bf16.msra.mxu0 0
    %1342 = vmatprep.mubr.bf16.mxu0 0
    %1343 = vmatmul.mubr.bf16.gmra.mxu0 %v1308
    %v1344 = vpop.f32.mrf.mxu0
    %v1345 = vadd.f32 %v1293, %v1344
    %v1346 = vpop.f32.mrf.mxu0
    %v1347 = vpop.f32.mrf.mxu0
    %v1348 = vadd.f32 %v1293, %v1347
    %v1349 = vpop.f32.mrf.mxu0
    %1350 = vdwg.mxu0
    %v1351 = vmul.f32 %v1345, 0.5
    %v1352 = vmul.f32 %v1348, 0.5
    %v1353 = vmul.f32 %v1345, 0.044715
    %v1354 = vmul.f32 %v1348, 0.044715
    %v1355 = vmul.f32 %v1353, %v1345
    %v1356 = vmul.f32 %v1354, %v1348
    %v1357 = vmul.f32 %v1355, %v1345
    %v1358 = vmul.f32 %v1356, %v1348
    %v1359 = vadd.f32 %v1345, %v1357
    %v1360 = vadd.f32 %v1348, %v1358
    %v1361 = vmul.f32 %v1359, 0.7978846
    %v1362 = vmul.f32 %v1360, 0.7978846
    %v1363 = vtanh.pop %v1361
    %v1364 = vtanh.pop %v1362
    %v1365 = vadd.f32 %v1363, 1.0
    %v1366 = vadd.f32 %v1364, 1.0
    %v1367 = vmul.f32 %v1351, %v1365
    %v1368 = vmul.f32 %v1352, %v1366
    %v1369 = vpack.c.bf16 %v1368, %v1367
    %v1370 = vld [vmem:[%s10] sm:$0xf]
    %v1371 = vld [vmem:[%s10 + $0x4] sm:$0xf]
    %v1372 = vld [vmem:[%s10 + $0x8] sm:$0xf]
    %v1373 = vld [vmem:[%s10 + $0xc] sm:$0xf]
    %v1374 = vld [vmem:[%s10 + $0x10] sm:$0xf]
    %v1375 = vld [vmem:[%s10 + $0x14] sm:$0xf]
    %v1376 = vld [vmem:[%s10 + $0x18] sm:$0xf]
    %v1377 = vld [vmem:[%s10 + $0x1c] sm:$0xf]
    %v1378 = vlaneseq
    %v1379 = vshrl.u32 %v1378, 7
    %v1380 = vsub.s32 3, %v1379
    %v1381 = vrot.slane %v195, %v1380
    %v1390 = vunpack.c.l.b16 %v1370
    %v1391 = vunpack.c.l.b16 %v1371
    %v1392 = vunpack.c.l.b16 %v1372
    %v1393 = vunpack.c.l.b16 %v1373
    %v1394 = vunpack.c.l.b16 %v1374
    %v1395 = vunpack.c.l.b16 %v1375
    %v1396 = vunpack.c.l.b16 %v1376
    %v1397 = vunpack.c.l.b16 %v1377
    %v1398 = vpack.c.b16 %v1391, %v1390
    %v1399 = vpack.c.b16 %v1393, %v1392
    %v1400 = vpack.c.b16 %v1395, %v1394
    %v1401 = vpack.c.b16 %v1397, %v1396
    %vm1406 = vcmask 523264
    %v1408 = vsel %vm1406, %v1369, 0
    %1410 = vmatprep.subr.bf16.mxu0 0
    %1411 = vmatpush1.bf16.msra.mxu0 0
    %1412 = vmatprep.subr.bf16.mxu0 0
    %1413 = vmatpush1.bf16.msra.mxu0 0
    %1414 = vmatprep.subr.bf16.mxu0 0
    %1415 = vmatpush1.bf16.msra.mxu0 0
    %1416 = vmatprep.subr.bf16.mxu0 0
    %1417 = vmatpush1.bf16.msra.mxu0 0
    %1418 = vmatprep.subr.bf16.mxu0 0
    %1419 = vmatpush1.bf16.msra.mxu0 %v1401
    %1420 = vmatprep.subr.bf16.mxu0 0
    %1421 = vmatpush1.bf16.msra.mxu0 %v1400
    %1422 = vmatprep.subr.bf16.mxu0 0
    %1423 = vmatpush1.bf16.msra.mxu0 %v1399
    %1424 = vmatprep.subr.bf16.mxu0 0
    %1425 = vmatpush1.bf16.msra.mxu0 %v1398
    %1426 = vmatprep.subr.bf16.mxu0 0
    %1427 = vmatpush2.bf16.msra.mxu0 0
    %1428 = vmatprep.subr.bf16.mxu0 0
    %1429 = vmatpush2.bf16.msra.mxu0 0
    %1430 = vmatprep.subr.bf16.mxu0 0
    %1431 = vmatpush2.bf16.msra.mxu0 0
    %1432 = vmatprep.subr.bf16.mxu0 0
    %1433 = vmatpush2.bf16.msra.mxu0 0
    %1434 = vmatprep.subr.bf16.mxu0 0
    %1435 = vmatpush2.bf16.msra.mxu0 0
    %1436 = vmatprep.subr.bf16.mxu0 0
    %1437 = vmatpush2.bf16.msra.mxu0 0
    %1438 = vmatprep.subr.bf16.mxu0 0
    %1439 = vmatpush2.bf16.msra.mxu0 0
    %1440 = vmatprep.subr.bf16.mxu0 0
    %1441 = vmatpush2.bf16.msra.mxu0 0
    %1442 = vmatprep.mubr.bf16.mxu0 0
    %1443 = vmatmul.mubr.bf16.gmra.mxu0 %v1408
    %v1444 = vpop.f32.mrf.mxu0
    %v1445 = vadd.f32 %v1381, %v1444
    %v1446 = vpop.f32.mrf.mxu0
    %v1447 = vpop.f32.mrf.mxu0
    %v1448 = vadd.f32 %v1381, %v1447
    %v1449 = vpop.f32.mrf.mxu0
    %1450 = vdwg.mxu0
    %v1451 = vadd.f32 %v1281, %v1445
    %v1452 = vadd.f32 %v1282, %v1448
    %v1453 = vsel %vm109, %v1451, 0.0
    %1454 = vadd.xlane.f32.xlu0 %v1453
    %v1455 = vpop.xlane.xlu0 %1454
    %v1456 = vsel %vm109, %v1452, 0.0
    %1457 = vadd.xlane.f32.xlu0 %v1456
    %v1458 = vpop.xlane.xlu0 %1457
    %v1459 = vmul.f32 %v1455, %v162
    %v1460 = vmul.f32 %v1458, %v162
    %v1461 = vsub.f32 %v1451, %v1459
    %v1462 = vsub.f32 %v1452, %v1460
    %v1463 = vmul.f32 %v1461, %v1461
    %v1464 = vmul.f32 %v1462, %v1462
    %v1465 = vsel %vm109, %v1463, 0.0
    %1466 = vadd.xlane.f32.xlu0 %v1465
    %v1467 = vpop.xlane.xlu0 %1466
    %v1468 = vsel %vm109, %v1464, 0.0
    %1469 = vadd.xlane.f32.xlu0 %v1468
    %v1470 = vpop.xlane.xlu0 %1469
    %v1471 = vmul.f32 %v1467, %v162
    %v1472 = vmul.f32 %v1470, %v162
    %v1473 = vadd.f32 %v1471, 1e-12
    %v1474 = vadd.f32 %v1472, 1e-12
    %v1475 = vrsqrt.pop %v1473
    %v1476 = vrsqrt.pop %v1474
    %v1477 = vmul.f32 %v1461, %v1475
    %v1478 = vmul.f32 %v1462, %v1476
    %v1479 = vlaneseq
    %v1480 = vshrl.u32 %v1479, 7
    %v1481 = vsub.s32 4, %v1480
    %v1482 = vrot.slane %v195, %v1481
    %v1483 = vmul.f32 %v1477, %v1482
    %v1484 = vmul.f32 %v1478, %v1482
    %v1485 = vlaneseq
    %v1486 = vshrl.u32 %v1485, 7
    %v1487 = vsub.s32 5, %v1486
    %v1488 = vrot.slane %v195, %v1487
    %v1489 = vadd.f32 %v1483, %v1488
    %v1490 = vadd.f32 %v1484, %v1488
    %s1491 = scalar_lea.vmem %s7, 8
    %v1492 = vld [vmem:[%s1491] sm:$0x3f]
    %v1493 = vpack.c.bf16 %v1490, %v1489
    %s1494 = scalar_lea.vmem %s4, 16
    %v1495 = vld [vmem:[%s1494] sm:$0xf]
    %v1496 = vld [vmem:[%s1494 + $0x4] sm:$0xf]
    %v1497 = vld [vmem:[%s1494 + $0x8] sm:$0xf]
    %v1498 = vld [vmem:[%s1494 + $0xc] sm:$0xf]
    %s1499 = scalar_lea.vmem %s5, 1
    %v1500 = vld [vmem:[%s1499] sm:$0x1]
    %v1502 = vlaneseq
    %v1503 = vshrl.u32 %v1502, 7
    %v1504 = vsub.s32 0, %v1503
    %v1505 = vrot.slane %v1500, %v1504
    %v1511 = vunpack.c.l.b16 %v1495
    %v1512 = vunpack.c.l.b16 %v1496
    %v1513 = vunpack.c.l.b16 %v1497
    %v1514 = vunpack.c.l.b16 %v1498
    %v1515 = vpack.c.b16 %v1512, %v1511
    %v1516 = vpack.c.b16 %v1514, %v1513
    %v1520 = vsel %vm109, %v1493, 0
    %1522 = vmatprep.subr.bf16.mxu0 0
    %1523 = vmatpush1.bf16.msra.mxu0 0
    %1524 = vmatprep.subr.bf16.mxu0 0
    %1525 = vmatpush1.bf16.msra.mxu0 0
    %1526 = vmatprep.subr.bf16.mxu0 0
    %1527 = vmatpush1.bf16.msra.mxu0 0
    %1528 = vmatprep.subr.bf16.mxu0 0
    %1529 = vmatpush1.bf16.msra.mxu0 0
    %1530 = vmatprep.subr.bf16.mxu0 0
    %1531 = vmatpush1.bf16.msra.mxu0 0
    %1532 = vmatprep.subr.bf16.mxu0 0
    %1533 = vmatpush1.bf16.msra.mxu0 0
    %1534 = vmatprep.subr.bf16.mxu0 0
    %1535 = vmatpush1.bf16.msra.mxu0 %v1516
    %1536 = vmatprep.subr.bf16.mxu0 0
    %1537 = vmatpush1.bf16.msra.mxu0 %v1515
    %1538 = vmatprep.subr.bf16.mxu0 0
    %1539 = vmatpush2.bf16.msra.mxu0 0
    %1540 = vmatprep.subr.bf16.mxu0 0
    %1541 = vmatpush2.bf16.msra.mxu0 0
    %1542 = vmatprep.subr.bf16.mxu0 0
    %1543 = vmatpush2.bf16.msra.mxu0 0
    %1544 = vmatprep.subr.bf16.mxu0 0
    %1545 = vmatpush2.bf16.msra.mxu0 0
    %1546 = vmatprep.subr.bf16.mxu0 0
    %1547 = vmatpush2.bf16.msra.mxu0 0
    %1548 = vmatprep.subr.bf16.mxu0 0
    %1549 = vmatpush2.bf16.msra.mxu0 0
    %1550 = vmatprep.subr.bf16.mxu0 0
    %1551 = vmatpush2.bf16.msra.mxu0 0
    %1552 = vmatprep.subr.bf16.mxu0 0
    %1553 = vmatpush2.bf16.msra.mxu0 0
    %1554 = vmatprep.mubr.bf16.mxu0 0
    %1555 = vmatmul.mubr.bf16.gmra.mxu0 %v1520
    %v1556 = vpop.f32.mrf.mxu0
    %v1557 = vadd.f32 %v1505, %v1556
    %v1558 = vpop.f32.mrf.mxu0
    %v1559 = vpop.f32.mrf.mxu0
    %v1560 = vadd.f32 %v1505, %v1559
    %v1561 = vpop.f32.mrf.mxu0
    %1562 = vdwg.mxu0
    %v1563 = vpack.c.bf16 %v1557, %v1557
    %1565 = vrot.lane.b32.xlu0 %v1563, 96
    %v1566 = vpop.permute.xlu0 %1565
    %v1568 = vsel %vm268, %v1563, 0
    %v1571 = vsel %vm268, %v1566, 0
    %1573 = vmatprep.subr.bf16.mxu0 0
    %1574 = vmatpush1.bf16.xpose.msra.mxu0 0
    %1575 = vmatprep.subr.bf16.mxu0 0
    %1576 = vmatpush1.bf16.xpose.msra.mxu0 0
    %1577 = vmatprep.subr.bf16.mxu0 0
    %1578 = vmatpush1.bf16.xpose.msra.mxu0 0
    %1579 = vmatprep.subr.bf16.mxu0 0
    %1580 = vmatpush1.bf16.xpose.msra.mxu0 0
    %1581 = vmatprep.subr.bf16.mxu0 0
    %1582 = vmatpush1.bf16.xpose.msra.mxu0 0
    %1583 = vmatprep.subr.bf16.mxu0 0
    %1584 = vmatpush1.bf16.xpose.msra.mxu0 0
    %1585 = vmatprep.subr.bf16.mxu0 0
    %1586 = vmatpush1.bf16.xpose.msra.mxu0 0
    %1587 = vmatprep.subr.bf16.mxu0 0
    %1588 = vmatpush1.bf16.xpose.msra.mxu0 %v1571
    %1589 = vmatprep.subr.bf16.mxu0 0
    %1590 = vmatpush2.bf16.xpose.msra.mxu0 0
    %1591 = vmatprep.subr.bf16.mxu0 0
    %1592 = vmatpush2.bf16.xpose.msra.mxu0 0
    %1593 = vmatprep.subr.bf16.mxu0 0
    %1594 = vmatpush2.bf16.xpose.msra.mxu0 0
    %1595 = vmatprep.subr.bf16.mxu0 0
    %1596 = vmatpush2.bf16.xpose.msra.mxu0 0
    %1597 = vmatprep.subr.bf16.mxu0 0
    %1598 = vmatpush2.bf16.xpose.msra.mxu0 0
    %1599 = vmatprep.subr.bf16.mxu0 0
    %1600 = vmatpush2.bf16.xpose.msra.mxu0 0
    %1601 = vmatprep.subr.bf16.mxu0 0
    %1602 = vmatpush2.bf16.xpose.msra.mxu0 0
    %1603 = vmatprep.subr.bf16.mxu0 0
    %1604 = vmatpush2.bf16.xpose.msra.mxu0 0
    %1605 = vmatprep.mubr.bf16.mxu0 0
    %1606 = vmatmul.mubr.bf16.gmra.mxu0 %v1568
    %v1607 = vpop.f32.mrf.mxu0
    %v1608 = vadd.f32 0.0, %v1607
    %v1609 = vpop.f32.mrf.mxu0
    %v1610 = vpop.f32.mrf.mxu0
    %v1611 = vpop.f32.mrf.mxu0
    %1612 = vdwg.mxu0
    %v1613 = vsel %vm268, %v1608, -inf
    %1614 = vmax.xlane.f32.xlu0 %v1613
    %v1615 = vpop.xlane.xlu0 %1614
    %v1616 = vsub.f32 %v1608, %v1615
    %v1617 = vmul.f32 %v1616, 1.442695
    %v1618 = vpow.pop %v1617
    %v1619 = vsel %vm268, %v1618, 0.0
    %1620 = vadd.xlane.f32.xlu0 %v1619
    %v1621 = vpop.xlane.xlu0 %1620
    %v1622 = vrcp.pop %v1621
    %v1623 = vmul.f32 %v1618, %v1622
    %v1624 = vpack.c.bf16 %v1623, %v1623
    %1625 = vrot.lane.b32.xlu0 %v1563, 64
    %v1626 = vpop.permute.xlu0 %1625
    %v1628 = vsel %vm268, %v1624, 0
    %v1631 = vsel %vm332, %v1626, 0
    %1633 = vmatprep.subr.bf16.mxu0 0
    %1634 = vmatpush1.bf16.msra.mxu0 0
    %1635 = vmatprep.subr.bf16.mxu0 0
    %1636 = vmatpush1.bf16.msra.mxu0 0
    %1637 = vmatprep.subr.bf16.mxu0 0
    %1638 = vmatpush1.bf16.msra.mxu0 0
    %1639 = vmatprep.subr.bf16.mxu0 0
    %1640 = vmatpush1.bf16.msra.mxu0 0
    %1641 = vmatprep.subr.bf16.mxu0 0
    %1642 = vmatpush1.bf16.msra.mxu0 0
    %1643 = vmatprep.subr.bf16.mxu0 0
    %1644 = vmatpush1.bf16.msra.mxu0 0
    %1645 = vmatprep.subr.bf16.mxu0 0
    %1646 = vmatpush1.bf16.msra.mxu0 0
    %1647 = vmatprep.subr.bf16.mxu0 0
    %1648 = vmatpush1.bf16.msra.mxu0 %v1631
    %1649 = vmatprep.subr.bf16.mxu0 0
    %1650 = vmatpush2.bf16.msra.mxu0 0
    %1651 = vmatprep.subr.bf16.mxu0 0
    %1652 = vmatpush2.bf16.msra.mxu0 0
    %1653 = vmatprep.subr.bf16.mxu0 0
    %1654 = vmatpush2.bf16.msra.mxu0 0
    %1655 = vmatprep.subr.bf16.mxu0 0
    %1656 = vmatpush2.bf16.msra.mxu0 0
    %1657 = vmatprep.subr.bf16.mxu0 0
    %1658 = vmatpush2.bf16.msra.mxu0 0
    %1659 = vmatprep.subr.bf16.mxu0 0
    %1660 = vmatpush2.bf16.msra.mxu0 0
    %1661 = vmatprep.subr.bf16.mxu0 0
    %1662 = vmatpush2.bf16.msra.mxu0 0
    %1663 = vmatprep.subr.bf16.mxu0 0
    %1664 = vmatpush2.bf16.msra.mxu0 0
    %1665 = vmatprep.mubr.bf16.mxu0 0
    %1666 = vmatmul.mubr.bf16.gmra.mxu0 %v1628
    %v1667 = vpop.f32.mrf.mxu0
    %v1668 = vadd.f32 0.0, %v1667
    %v1669 = vpop.f32.mrf.mxu0
    %v1670 = vpop.f32.mrf.mxu0
    %v1671 = vpop.f32.mrf.mxu0
    %1672 = vdwg.mxu0
    %1673 = vrot.lane.b32.xlu0 %v1563, 120
    %v1674 = vpop.permute.xlu0 %1673
    %1675 = vrot.lane.b32.xlu0 %v1563, 88
    %v1676 = vpop.permute.xlu0 %1675
    %v1678 = vsel %vm268, %v1674, 0
    %v1681 = vsel %vm268, %v1676, 0
    %1683 = vmatprep.subr.bf16.mxu0 0
    %1684 = vmatpush1.bf16.xpose.msra.mxu0 0
    %1685 = vmatprep.subr.bf16.mxu0 0
    %1686 = vmatpush1.bf16.xpose.msra.mxu0 0
    %1687 = vmatprep.subr.bf16.mxu0 0
    %1688 = vmatpush1.bf16.xpose.msra.mxu0 0
    %1689 = vmatprep.subr.bf16.mxu0 0
    %1690 = vmatpush1.bf16.xpose.msra.mxu0 0
    %1691 = vmatprep.subr.bf16.mxu0 0
    %1692 = vmatpush1.bf16.xpose.msra.mxu0 0
    %1693 = vmatprep.subr.bf16.mxu0 0
    %1694 = vmatpush1.bf16.xpose.msra.mxu0 0
    %1695 = vmatprep.subr.bf16.mxu0 0
    %1696 = vmatpush1.bf16.xpose.msra.mxu0 0
    %1697 = vmatprep.subr.bf16.mxu0 0
    %1698 = vmatpush1.bf16.xpose.msra.mxu0 %v1681
    %1699 = vmatprep.subr.bf16.mxu0 0
    %1700 = vmatpush2.bf16.xpose.msra.mxu0 0
    %1701 = vmatprep.subr.bf16.mxu0 0
    %1702 = vmatpush2.bf16.xpose.msra.mxu0 0
    %1703 = vmatprep.subr.bf16.mxu0 0
    %1704 = vmatpush2.bf16.xpose.msra.mxu0 0
    %1705 = vmatprep.subr.bf16.mxu0 0
    %1706 = vmatpush2.bf16.xpose.msra.mxu0 0
    %1707 = vmatprep.subr.bf16.mxu0 0
    %1708 = vmatpush2.bf16.xpose.msra.mxu0 0
    %1709 = vmatprep.subr.bf16.mxu0 0
    %1710 = vmatpush2.bf16.xpose.msra.mxu0 0
    %1711 = vmatprep.subr.bf16.mxu0 0
    %1712 = vmatpush2.bf16.xpose.msra.mxu0 0
    %1713 = vmatprep.subr.bf16.mxu0 0
    %1714 = vmatpush2.bf16.xpose.msra.mxu0 0
    %1715 = vmatprep.mubr.bf16.mxu0 0
    %1716 = vmatmul.mubr.bf16.gmra.mxu0 %v1678
    %v1717 = vpop.f32.mrf.mxu0
    %v1718 = vadd.f32 0.0, %v1717
    %v1719 = vpop.f32.mrf.mxu0
    %v1720 = vpop.f32.mrf.mxu0
    %v1721 = vpop.f32.mrf.mxu0
    %1722 = vdwg.mxu0
    %v1723 = vsel %vm268, %v1718, -inf
    %1724 = vmax.xlane.f32.xlu0 %v1723
    %v1725 = vpop.xlane.xlu0 %1724
    %v1726 = vsub.f32 %v1718, %v1725
    %v1727 = vmul.f32 %v1726, 1.442695
    %v1728 = vpow.pop %v1727
    %v1729 = vsel %vm268, %v1728, 0.0
    %1730 = vadd.xlane.f32.xlu0 %v1729
    %v1731 = vpop.xlane.xlu0 %1730
    %v1732 = vrcp.pop %v1731
    %v1733 = vmul.f32 %v1728, %v1732
    %v1734 = vpack.c.bf16 %v1733, %v1733
    %1735 = vrot.lane.b32.xlu0 %v1563, 56
    %v1736 = vpop.permute.xlu0 %1735
    %v1738 = vsel %vm268, %v1734, 0
    %v1741 = vsel %vm332, %v1736, 0
    %1743 = vmatprep.subr.bf16.mxu0 0
    %1744 = vmatpush1.bf16.msra.mxu0 0
    %1745 = vmatprep.subr.bf16.mxu0 0
    %1746 = vmatpush1.bf16.msra.mxu0 0
    %1747 = vmatprep.subr.bf16.mxu0 0
    %1748 = vmatpush1.bf16.msra.mxu0 0
    %1749 = vmatprep.subr.bf16.mxu0 0
    %1750 = vmatpush1.bf16.msra.mxu0 0
    %1751 = vmatprep.subr.bf16.mxu0 0
    %1752 = vmatpush1.bf16.msra.mxu0 0
    %1753 = vmatprep.subr.bf16.mxu0 0
    %1754 = vmatpush1.bf16.msra.mxu0 0
    %1755 = vmatprep.subr.bf16.mxu0 0
    %1756 = vmatpush1.bf16.msra.mxu0 0
    %1757 = vmatprep.subr.bf16.mxu0 0
    %1758 = vmatpush1.bf16.msra.mxu0 %v1741
    %1759 = vmatprep.subr.bf16.mxu0 0
    %1760 = vmatpush2.bf16.msra.mxu0 0
    %1761 = vmatprep.subr.bf16.mxu0 0
    %1762 = vmatpush2.bf16.msra.mxu0 0
    %1763 = vmatprep.subr.bf16.mxu0 0
    %1764 = vmatpush2.bf16.msra.mxu0 0
    %1765 = vmatprep.subr.bf16.mxu0 0
    %1766 = vmatpush2.bf16.msra.mxu0 0
    %1767 = vmatprep.subr.bf16.mxu0 0
    %1768 = vmatpush2.bf16.msra.mxu0 0
    %1769 = vmatprep.subr.bf16.mxu0 0
    %1770 = vmatpush2.bf16.msra.mxu0 0
    %1771 = vmatprep.subr.bf16.mxu0 0
    %1772 = vmatpush2.bf16.msra.mxu0 0
    %1773 = vmatprep.subr.bf16.mxu0 0
    %1774 = vmatpush2.bf16.msra.mxu0 0
    %1775 = vmatprep.mubr.bf16.mxu0 0
    %1776 = vmatmul.mubr.bf16.gmra.mxu0 %v1738
    %v1777 = vpop.f32.mrf.mxu0
    %v1778 = vadd.f32 0.0, %v1777
    %v1779 = vpop.f32.mrf.mxu0
    %v1780 = vpop.f32.mrf.mxu0
    %v1781 = vpop.f32.mrf.mxu0
    %1782 = vdwg.mxu0
    %1783 = vrot.lane.b32.xlu0 %v1563, 112
    %v1784 = vpop.permute.xlu0 %1783
    %1785 = vrot.lane.b32.xlu0 %v1563, 80
    %v1786 = vpop.permute.xlu0 %1785
    %v1788 = vsel %vm268, %v1784, 0
    %v1791 = vsel %vm268, %v1786, 0
    %1793 = vmatprep.subr.bf16.mxu0 0
    %1794 = vmatpush1.bf16.xpose.msra.mxu0 0
    %1795 = vmatprep.subr.bf16.mxu0 0
    %1796 = vmatpush1.bf16.xpose.msra.mxu0 0
    %1797 = vmatprep.subr.bf16.mxu0 0
    %1798 = vmatpush1.bf16.xpose.msra.mxu0 0
    %1799 = vmatprep.subr.bf16.mxu0 0
    %1800 = vmatpush1.bf16.xpose.msra.mxu0 0
    %1801 = vmatprep.subr.bf16.mxu0 0
    %1802 = vmatpush1.bf16.xpose.msra.mxu0 0
    %1803 = vmatprep.subr.bf16.mxu0 0
    %1804 = vmatpush1.bf16.xpose.msra.mxu0 0
    %1805 = vmatprep.subr.bf16.mxu0 0
    %1806 = vmatpush1.bf16.xpose.msra.mxu0 0
    %1807 = vmatprep.subr.bf16.mxu0 0
    %1808 = vmatpush1.bf16.xpose.msra.mxu0 %v1791
    %1809 = vmatprep.subr.bf16.mxu0 0
    %1810 = vmatpush2.bf16.xpose.msra.mxu0 0
    %1811 = vmatprep.subr.bf16.mxu0 0
    %1812 = vmatpush2.bf16.xpose.msra.mxu0 0
    %1813 = vmatprep.subr.bf16.mxu0 0
    %1814 = vmatpush2.bf16.xpose.msra.mxu0 0
    %1815 = vmatprep.subr.bf16.mxu0 0
    %1816 = vmatpush2.bf16.xpose.msra.mxu0 0
    %1817 = vmatprep.subr.bf16.mxu0 0
    %1818 = vmatpush2.bf16.xpose.msra.mxu0 0
    %1819 = vmatprep.subr.bf16.mxu0 0
    %1820 = vmatpush2.bf16.xpose.msra.mxu0 0
    %1821 = vmatprep.subr.bf16.mxu0 0
    %1822 = vmatpush2.bf16.xpose.msra.mxu0 0
    %1823 = vmatprep.subr.bf16.mxu0 0
    %1824 = vmatpush2.bf16.xpose.msra.mxu0 0
    %1825 = vmatprep.mubr.bf16.mxu0 0
    %1826 = vmatmul.mubr.bf16.gmra.mxu0 %v1788
    %v1827 = vpop.f32.mrf.mxu0
    %v1828 = vadd.f32 0.0, %v1827
    %v1829 = vpop.f32.mrf.mxu0
    %v1830 = vpop.f32.mrf.mxu0
    %v1831 = vpop.f32.mrf.mxu0
    %1832 = vdwg.mxu0
    %v1833 = vsel %vm268, %v1828, -inf
    %1834 = vmax.xlane.f32.xlu0 %v1833
    %v1835 = vpop.xlane.xlu0 %1834
    %v1836 = vsub.f32 %v1828, %v1835
    %v1837 = vmul.f32 %v1836, 1.442695
    %v1838 = vpow.pop %v1837
    %v1839 = vsel %vm268, %v1838, 0.0
    %1840 = vadd.xlane.f32.xlu0 %v1839
    %v1841 = vpop.xlane.xlu0 %1840
    %v1842 = vrcp.pop %v1841
    %v1843 = vmul.f32 %v1838, %v1842
    %v1844 = vpack.c.bf16 %v1843, %v1843
    %1845 = vrot.lane.b32.xlu0 %v1563, 48
    %v1846 = vpop.permute.xlu0 %1845
    %v1848 = vsel %vm268, %v1844, 0
    %v1851 = vsel %vm332, %v1846, 0
    %1853 = vmatprep.subr.bf16.mxu0 0
    %1854 = vmatpush1.bf16.msra.mxu0 0
    %1855 = vmatprep.subr.bf16.mxu0 0
    %1856 = vmatpush1.bf16.msra.mxu0 0
    %1857 = vmatprep.subr.bf16.mxu0 0
    %1858 = vmatpush1.bf16.msra.mxu0 0
    %1859 = vmatprep.subr.bf16.mxu0 0
    %1860 = vmatpush1.bf16.msra.mxu0 0
    %1861 = vmatprep.subr.bf16.mxu0 0
    %1862 = vmatpush1.bf16.msra.mxu0 0
    %1863 = vmatprep.subr.bf16.mxu0 0
    %1864 = vmatpush1.bf16.msra.mxu0 0
    %1865 = vmatprep.subr.bf16.mxu0 0
    %1866 = vmatpush1.bf16.msra.mxu0 0
    %1867 = vmatprep.subr.bf16.mxu0 0
    %1868 = vmatpush1.bf16.msra.mxu0 %v1851
    %1869 = vmatprep.subr.bf16.mxu0 0
    %1870 = vmatpush2.bf16.msra.mxu0 0
    %1871 = vmatprep.subr.bf16.mxu0 0
    %1872 = vmatpush2.bf16.msra.mxu0 0
    %1873 = vmatprep.subr.bf16.mxu0 0
    %1874 = vmatpush2.bf16.msra.mxu0 0
    %1875 = vmatprep.subr.bf16.mxu0 0
    %1876 = vmatpush2.bf16.msra.mxu0 0
    %1877 = vmatprep.subr.bf16.mxu0 0
    %1878 = vmatpush2.bf16.msra.mxu0 0
    %1879 = vmatprep.subr.bf16.mxu0 0
    %1880 = vmatpush2.bf16.msra.mxu0 0
    %1881 = vmatprep.subr.bf16.mxu0 0
    %1882 = vmatpush2.bf16.msra.mxu0 0
    %1883 = vmatprep.subr.bf16.mxu0 0
    %1884 = vmatpush2.bf16.msra.mxu0 0
    %1885 = vmatprep.mubr.bf16.mxu0 0
    %1886 = vmatmul.mubr.bf16.gmra.mxu0 %v1848
    %v1887 = vpop.f32.mrf.mxu0
    %v1888 = vadd.f32 0.0, %v1887
    %v1889 = vpop.f32.mrf.mxu0
    %v1890 = vpop.f32.mrf.mxu0
    %v1891 = vpop.f32.mrf.mxu0
    %1892 = vdwg.mxu0
    %1893 = vrot.lane.b32.xlu0 %v1563, 104
    %v1894 = vpop.permute.xlu0 %1893
    %1895 = vrot.lane.b32.xlu0 %v1563, 72
    %v1896 = vpop.permute.xlu0 %1895
    %v1898 = vsel %vm268, %v1894, 0
    %v1901 = vsel %vm268, %v1896, 0
    %1903 = vmatprep.subr.bf16.mxu0 0
    %1904 = vmatpush1.bf16.xpose.msra.mxu0 0
    %1905 = vmatprep.subr.bf16.mxu0 0
    %1906 = vmatpush1.bf16.xpose.msra.mxu0 0
    %1907 = vmatprep.subr.bf16.mxu0 0
    %1908 = vmatpush1.bf16.xpose.msra.mxu0 0
    %1909 = vmatprep.subr.bf16.mxu0 0
    %1910 = vmatpush1.bf16.xpose.msra.mxu0 0
    %1911 = vmatprep.subr.bf16.mxu0 0
    %1912 = vmatpush1.bf16.xpose.msra.mxu0 0
    %1913 = vmatprep.subr.bf16.mxu0 0
    %1914 = vmatpush1.bf16.xpose.msra.mxu0 0
    %1915 = vmatprep.subr.bf16.mxu0 0
    %1916 = vmatpush1.bf16.xpose.msra.mxu0 0
    %1917 = vmatprep.subr.bf16.mxu0 0
    %1918 = vmatpush1.bf16.xpose.msra.mxu0 %v1901
    %1919 = vmatprep.subr.bf16.mxu0 0
    %1920 = vmatpush2.bf16.xpose.msra.mxu0 0
    %1921 = vmatprep.subr.bf16.mxu0 0
    %1922 = vmatpush2.bf16.xpose.msra.mxu0 0
    %1923 = vmatprep.subr.bf16.mxu0 0
    %1924 = vmatpush2.bf16.xpose.msra.mxu0 0
    %1925 = vmatprep.subr.bf16.mxu0 0
    %1926 = vmatpush2.bf16.xpose.msra.mxu0 0
    %1927 = vmatprep.subr.bf16.mxu0 0
    %1928 = vmatpush2.bf16.xpose.msra.mxu0 0
    %1929 = vmatprep.subr.bf16.mxu0 0
    %1930 = vmatpush2.bf16.xpose.msra.mxu0 0
    %1931 = vmatprep.subr.bf16.mxu0 0
    %1932 = vmatpush2.bf16.xpose.msra.mxu0 0
    %1933 = vmatprep.subr.bf16.mxu0 0
    %1934 = vmatpush2.bf16.xpose.msra.mxu0 0
    %1935 = vmatprep.mubr.bf16.mxu0 0
    %1936 = vmatmul.mubr.bf16.gmra.mxu0 %v1898
    %v1937 = vpop.f32.mrf.mxu0
    %v1938 = vadd.f32 0.0, %v1937
    %v1939 = vpop.f32.mrf.mxu0
    %v1940 = vpop.f32.mrf.mxu0
    %v1941 = vpop.f32.mrf.mxu0
    %1942 = vdwg.mxu0
    %v1943 = vsel %vm268, %v1938, -inf
    %1944 = vmax.xlane.f32.xlu0 %v1943
    %v1945 = vpop.xlane.xlu0 %1944
    %v1946 = vsub.f32 %v1938, %v1945
    %v1947 = vmul.f32 %v1946, 1.442695
    %v1948 = vpow.pop %v1947
    %v1949 = vsel %vm268, %v1948, 0.0
    %1950 = vadd.xlane.f32.xlu0 %v1949
    %v1951 = vpop.xlane.xlu0 %1950
    %v1952 = vrcp.pop %v1951
    %v1953 = vmul.f32 %v1948, %v1952
    %v1954 = vpack.c.bf16 %v1953, %v1953
    %1955 = vrot.lane.b32.xlu0 %v1563, 40
    %v1956 = vpop.permute.xlu0 %1955
    %v1958 = vsel %vm268, %v1954, 0
    %v1961 = vsel %vm332, %v1956, 0
    %1963 = vmatprep.subr.bf16.mxu0 0
    %1964 = vmatpush1.bf16.msra.mxu0 0
    %1965 = vmatprep.subr.bf16.mxu0 0
    %1966 = vmatpush1.bf16.msra.mxu0 0
    %1967 = vmatprep.subr.bf16.mxu0 0
    %1968 = vmatpush1.bf16.msra.mxu0 0
    %1969 = vmatprep.subr.bf16.mxu0 0
    %1970 = vmatpush1.bf16.msra.mxu0 0
    %1971 = vmatprep.subr.bf16.mxu0 0
    %1972 = vmatpush1.bf16.msra.mxu0 0
    %1973 = vmatprep.subr.bf16.mxu0 0
    %1974 = vmatpush1.bf16.msra.mxu0 0
    %1975 = vmatprep.subr.bf16.mxu0 0
    %1976 = vmatpush1.bf16.msra.mxu0 0
    %1977 = vmatprep.subr.bf16.mxu0 0
    %1978 = vmatpush1.bf16.msra.mxu0 %v1961
    %1979 = vmatprep.subr.bf16.mxu0 0
    %1980 = vmatpush2.bf16.msra.mxu0 0
    %1981 = vmatprep.subr.bf16.mxu0 0
    %1982 = vmatpush2.bf16.msra.mxu0 0
    %1983 = vmatprep.subr.bf16.mxu0 0
    %1984 = vmatpush2.bf16.msra.mxu0 0
    %1985 = vmatprep.subr.bf16.mxu0 0
    %1986 = vmatpush2.bf16.msra.mxu0 0
    %1987 = vmatprep.subr.bf16.mxu0 0
    %1988 = vmatpush2.bf16.msra.mxu0 0
    %1989 = vmatprep.subr.bf16.mxu0 0
    %1990 = vmatpush2.bf16.msra.mxu0 0
    %1991 = vmatprep.subr.bf16.mxu0 0
    %1992 = vmatpush2.bf16.msra.mxu0 0
    %1993 = vmatprep.subr.bf16.mxu0 0
    %1994 = vmatpush2.bf16.msra.mxu0 0
    %1995 = vmatprep.mubr.bf16.mxu0 0
    %1996 = vmatmul.mubr.bf16.gmra.mxu0 %v1958
    %v1997 = vpop.f32.mrf.mxu0
    %v1998 = vadd.f32 0.0, %v1997
    %v1999 = vpop.f32.mrf.mxu0
    %v2000 = vpop.f32.mrf.mxu0
    %v2001 = vpop.f32.mrf.mxu0
    %2002 = vdwg.mxu0
    %2004 = vrot.lane.b32.xlu0 %v1778, 8
    %v2005 = vpop.permute.xlu0 %2004
    %2008 = vrot.lane.b32.xlu0 %v1888, 16
    %v2009 = vpop.permute.xlu0 %2008
    %2012 = vrot.lane.b32.xlu0 %v1998, 24
    %v2013 = vpop.permute.xlu0 %2012
    %v2015 = vsel %vm268, %v1668, %v2005
    %v2016 = vsel %vm719, %v2015, %v2009
    %v2017 = vsel %vm721, %v2016, %v2013
    %v2018 = vpack.c.bf16 %v1560, %v1560
    %2020 = vrot.lane.b32.xlu0 %v2018, 96
    %v2021 = vpop.permute.xlu0 %2020
    %v2023 = vsel %vm268, %v2018, 0
    %v2026 = vsel %vm268, %v2021, 0
    %2028 = vmatprep.subr.bf16.mxu0 0
    %2029 = vmatpush1.bf16.xpose.msra.mxu0 0
    %2030 = vmatprep.subr.bf16.mxu0 0
    %2031 = vmatpush1.bf16.xpose.msra.mxu0 0
    %2032 = vmatprep.subr.bf16.mxu0 0
    %2033 = vmatpush1.bf16.xpose.msra.mxu0 0
    %2034 = vmatprep.subr.bf16.mxu0 0
    %2035 = vmatpush1.bf16.xpose.msra.mxu0 0
    %2036 = vmatprep.subr.bf16.mxu0 0
    %2037 = vmatpush1.bf16.xpose.msra.mxu0 0
    %2038 = vmatprep.subr.bf16.mxu0 0
    %2039 = vmatpush1.bf16.xpose.msra.mxu0 0
    %2040 = vmatprep.subr.bf16.mxu0 0
    %2041 = vmatpush1.bf16.xpose.msra.mxu0 0
    %2042 = vmatprep.subr.bf16.mxu0 0
    %2043 = vmatpush1.bf16.xpose.msra.mxu0 %v2026
    %2044 = vmatprep.subr.bf16.mxu0 0
    %2045 = vmatpush2.bf16.xpose.msra.mxu0 0
    %2046 = vmatprep.subr.bf16.mxu0 0
    %2047 = vmatpush2.bf16.xpose.msra.mxu0 0
    %2048 = vmatprep.subr.bf16.mxu0 0
    %2049 = vmatpush2.bf16.xpose.msra.mxu0 0
    %2050 = vmatprep.subr.bf16.mxu0 0
    %2051 = vmatpush2.bf16.xpose.msra.mxu0 0
    %2052 = vmatprep.subr.bf16.mxu0 0
    %2053 = vmatpush2.bf16.xpose.msra.mxu0 0
    %2054 = vmatprep.subr.bf16.mxu0 0
    %2055 = vmatpush2.bf16.xpose.msra.mxu0 0
    %2056 = vmatprep.subr.bf16.mxu0 0
    %2057 = vmatpush2.bf16.xpose.msra.mxu0 0
    %2058 = vmatprep.subr.bf16.mxu0 0
    %2059 = vmatpush2.bf16.xpose.msra.mxu0 0
    %2060 = vmatprep.mubr.bf16.mxu0 0
    %2061 = vmatmul.mubr.bf16.gmra.mxu0 %v2023
    %v2062 = vpop.f32.mrf.mxu0
    %v2063 = vadd.f32 0.0, %v2062
    %v2064 = vpop.f32.mrf.mxu0
    %v2065 = vpop.f32.mrf.mxu0
    %v2066 = vpop.f32.mrf.mxu0
    %2067 = vdwg.mxu0
    %v2068 = vsel %vm268, %v2063, -inf
    %2069 = vmax.xlane.f32.xlu0 %v2068
    %v2070 = vpop.xlane.xlu0 %2069
    %v2071 = vsub.f32 %v2063, %v2070
    %v2072 = vmul.f32 %v2071, 1.442695
    %v2073 = vpow.pop %v2072
    %v2074 = vsel %vm268, %v2073, 0.0
    %2075 = vadd.xlane.f32.xlu0 %v2074
    %v2076 = vpop.xlane.xlu0 %2075
    %v2077 = vrcp.pop %v2076
    %v2078 = vmul.f32 %v2073, %v2077
    %v2079 = vpack.c.bf16 %v2078, %v2078
    %2080 = vrot.lane.b32.xlu0 %v2018, 64
    %v2081 = vpop.permute.xlu0 %2080
    %v2083 = vsel %vm268, %v2079, 0
    %v2086 = vsel %vm332, %v2081, 0
    %2088 = vmatprep.subr.bf16.mxu0 0
    %2089 = vmatpush1.bf16.msra.mxu0 0
    %2090 = vmatprep.subr.bf16.mxu0 0
    %2091 = vmatpush1.bf16.msra.mxu0 0
    %2092 = vmatprep.subr.bf16.mxu0 0
    %2093 = vmatpush1.bf16.msra.mxu0 0
    %2094 = vmatprep.subr.bf16.mxu0 0
    %2095 = vmatpush1.bf16.msra.mxu0 0
    %2096 = vmatprep.subr.bf16.mxu0 0
    %2097 = vmatpush1.bf16.msra.mxu0 0
    %2098 = vmatprep.subr.bf16.mxu0 0
    %2099 = vmatpush1.bf16.msra.mxu0 0
    %2100 = vmatprep.subr.bf16.mxu0 0
    %2101 = vmatpush1.bf16.msra.mxu0 0
    %2102 = vmatprep.subr.bf16.mxu0 0
    %2103 = vmatpush1.bf16.msra.mxu0 %v2086
    %2104 = vmatprep.subr.bf16.mxu0 0
    %2105 = vmatpush2.bf16.msra.mxu0 0
    %2106 = vmatprep.subr.bf16.mxu0 0
    %2107 = vmatpush2.bf16.msra.mxu0 0
    %2108 = vmatprep.subr.bf16.mxu0 0
    %2109 = vmatpush2.bf16.msra.mxu0 0
    %2110 = vmatprep.subr.bf16.mxu0 0
    %2111 = vmatpush2.bf16.msra.mxu0 0
    %2112 = vmatprep.subr.bf16.mxu0 0
    %2113 = vmatpush2.bf16.msra.mxu0 0
    %2114 = vmatprep.subr.bf16.mxu0 0
    %2115 = vmatpush2.bf16.msra.mxu0 0
    %2116 = vmatprep.subr.bf16.mxu0 0
    %2117 = vmatpush2.bf16.msra.mxu0 0
    %2118 = vmatprep.subr.bf16.mxu0 0
    %2119 = vmatpush2.bf16.msra.mxu0 0
    %2120 = vmatprep.mubr.bf16.mxu0 0
    %2121 = vmatmul.mubr.bf16.gmra.mxu0 %v2083
    %v2122 = vpop.f32.mrf.mxu0
    %v2123 = vadd.f32 0.0, %v2122
    %v2124 = vpop.f32.mrf.mxu0
    %v2125 = vpop.f32.mrf.mxu0
    %v2126 = vpop.f32.mrf.mxu0
    %2127 = vdwg.mxu0
    %2128 = vrot.lane.b32.xlu0 %v2018, 120
    %v2129 = vpop.permute.xlu0 %2128
    %2130 = vrot.lane.b32.xlu0 %v2018, 88
    %v2131 = vpop.permute.xlu0 %2130
    %v2133 = vsel %vm268, %v2129, 0
    %v2136 = vsel %vm268, %v2131, 0
    %2138 = vmatprep.subr.bf16.mxu0 0
    %2139 = vmatpush1.bf16.xpose.msra.mxu0 0
    %2140 = vmatprep.subr.bf16.mxu0 0
    %2141 = vmatpush1.bf16.xpose.msra.mxu0 0
    %2142 = vmatprep.subr.bf16.mxu0 0
    %2143 = vmatpush1.bf16.xpose.msra.mxu0 0
    %2144 = vmatprep.subr.bf16.mxu0 0
    %2145 = vmatpush1.bf16.xpose.msra.mxu0 0
    %2146 = vmatprep.subr.bf16.mxu0 0
    %2147 = vmatpush1.bf16.xpose.msra.mxu0 0
    %2148 = vmatprep.subr.bf16.mxu0 0
    %2149 = vmatpush1.bf16.xpose.msra.mxu0 0
    %2150 = vmatprep.subr.bf16.mxu0 0
    %2151 = vmatpush1.bf16.xpose.msra.mxu0 0
    %2152 = vmatprep.subr.bf16.mxu0 0
    %2153 = vmatpush1.bf16.xpose.msra.mxu0 %v2136
    %2154 = vmatprep.subr.bf16.mxu0 0
    %2155 = vmatpush2.bf16.xpose.msra.mxu0 0
    %2156 = vmatprep.subr.bf16.mxu0 0
    %2157 = vmatpush2.bf16.xpose.msra.mxu0 0
    %2158 = vmatprep.subr.bf16.mxu0 0
    %2159 = vmatpush2.bf16.xpose.msra.mxu0 0
    %2160 = vmatprep.subr.bf16.mxu0 0
    %2161 = vmatpush2.bf16.xpose.msra.mxu0 0
    %2162 = vmatprep.subr.bf16.mxu0 0
    %2163 = vmatpush2.bf16.xpose.msra.mxu0 0
    %2164 = vmatprep.subr.bf16.mxu0 0
    %2165 = vmatpush2.bf16.xpose.msra.mxu0 0
    %2166 = vmatprep.subr.bf16.mxu0 0
    %2167 = vmatpush2.bf16.xpose.msra.mxu0 0
    %2168 = vmatprep.subr.bf16.mxu0 0
    %2169 = vmatpush2.bf16.xpose.msra.mxu0 0
    %2170 = vmatprep.mubr.bf16.mxu0 0
    %2171 = vmatmul.mubr.bf16.gmra.mxu0 %v2133
    %v2172 = vpop.f32.mrf.mxu0
    %v2173 = vadd.f32 0.0, %v2172
    %v2174 = vpop.f32.mrf.mxu0
    %v2175 = vpop.f32.mrf.mxu0
    %v2176 = vpop.f32.mrf.mxu0
    %2177 = vdwg.mxu0
    %v2178 = vsel %vm268, %v2173, -inf
    %2179 = vmax.xlane.f32.xlu0 %v2178
    %v2180 = vpop.xlane.xlu0 %2179
    %v2181 = vsub.f32 %v2173, %v2180
    %v2182 = vmul.f32 %v2181, 1.442695
    %v2183 = vpow.pop %v2182
    %v2184 = vsel %vm268, %v2183, 0.0
    %2185 = vadd.xlane.f32.xlu0 %v2184
    %v2186 = vpop.xlane.xlu0 %2185
    %v2187 = vrcp.pop %v2186
    %v2188 = vmul.f32 %v2183, %v2187
    %v2189 = vpack.c.bf16 %v2188, %v2188
    %2190 = vrot.lane.b32.xlu0 %v2018, 56
    %v2191 = vpop.permute.xlu0 %2190
    %v2193 = vsel %vm268, %v2189, 0
    %v2196 = vsel %vm332, %v2191, 0
    %2198 = vmatprep.subr.bf16.mxu0 0
    %2199 = vmatpush1.bf16.msra.mxu0 0
    %2200 = vmatprep.subr.bf16.mxu0 0
    %2201 = vmatpush1.bf16.msra.mxu0 0
    %2202 = vmatprep.subr.bf16.mxu0 0
    %2203 = vmatpush1.bf16.msra.mxu0 0
    %2204 = vmatprep.subr.bf16.mxu0 0
    %2205 = vmatpush1.bf16.msra.mxu0 0
    %2206 = vmatprep.subr.bf16.mxu0 0
    %2207 = vmatpush1.bf16.msra.mxu0 0
    %2208 = vmatprep.subr.bf16.mxu0 0
    %2209 = vmatpush1.bf16.msra.mxu0 0
    %2210 = vmatprep.subr.bf16.mxu0 0
    %2211 = vmatpush1.bf16.msra.mxu0 0
    %2212 = vmatprep.subr.bf16.mxu0 0
    %2213 = vmatpush1.bf16.msra.mxu0 %v2196
    %2214 = vmatprep.subr.bf16.mxu0 0
    %2215 = vmatpush2.bf16.msra.mxu0 0
    %2216 = vmatprep.subr.bf16.mxu0 0
    %2217 = vmatpush2.bf16.msra.mxu0 0
    %2218 = vmatprep.subr.bf16.mxu0 0
    %2219 = vmatpush2.bf16.msra.mxu0 0
    %2220 = vmatprep.subr.bf16.mxu0 0
    %2221 = vmatpush2.bf16.msra.mxu0 0
    %2222 = vmatprep.subr.bf16.mxu0 0
    %2223 = vmatpush2.bf16.msra.mxu0 0
    %2224 = vmatprep.subr.bf16.mxu0 0
    %2225 = vmatpush2.bf16.msra.mxu0 0
    %2226 = vmatprep.subr.bf16.mxu0 0
    %2227 = vmatpush2.bf16.msra.mxu0 0
    %2228 = vmatprep.subr.bf16.mxu0 0
    %2229 = vmatpush2.bf16.msra.mxu0 0
    %2230 = vmatprep.mubr.bf16.mxu0 0
    %2231 = vmatmul.mubr.bf16.gmra.mxu0 %v2193
    %v2232 = vpop.f32.mrf.mxu0
    %v2233 = vadd.f32 0.0, %v2232
    %v2234 = vpop.f32.mrf.mxu0
    %v2235 = vpop.f32.mrf.mxu0
    %v2236 = vpop.f32.mrf.mxu0
    %2237 = vdwg.mxu0
    %2238 = vrot.lane.b32.xlu0 %v2018, 112
    %v2239 = vpop.permute.xlu0 %2238
    %2240 = vrot.lane.b32.xlu0 %v2018, 80
    %v2241 = vpop.permute.xlu0 %2240
    %v2243 = vsel %vm268, %v2239, 0
    %v2246 = vsel %vm268, %v2241, 0
    %2248 = vmatprep.subr.bf16.mxu0 0
    %2249 = vmatpush1.bf16.xpose.msra.mxu0 0
    %2250 = vmatprep.subr.bf16.mxu0 0
    %2251 = vmatpush1.bf16.xpose.msra.mxu0 0
    %2252 = vmatprep.subr.bf16.mxu0 0
    %2253 = vmatpush1.bf16.xpose.msra.mxu0 0
    %2254 = vmatprep.subr.bf16.mxu0 0
    %2255 = vmatpush1.bf16.xpose.msra.mxu0 0
    %2256 = vmatprep.subr.bf16.mxu0 0
    %2257 = vmatpush1.bf16.xpose.msra.mxu0 0
    %2258 = vmatprep.subr.bf16.mxu0 0
    %2259 = vmatpush1.bf16.xpose.msra.mxu0 0
    %2260 = vmatprep.subr.bf16.mxu0 0
    %2261 = vmatpush1.bf16.xpose.msra.mxu0 0
    %2262 = vmatprep.subr.bf16.mxu0 0
    %2263 = vmatpush1.bf16.xpose.msra.mxu0 %v2246
    %2264 = vmatprep.subr.bf16.mxu0 0
    %2265 = vmatpush2.bf16.xpose.msra.mxu0 0
    %2266 = vmatprep.subr.bf16.mxu0 0
    %2267 = vmatpush2.bf16.xpose.msra.mxu0 0
    %2268 = vmatprep.subr.bf16.mxu0 0
    %2269 = vmatpush2.bf16.xpose.msra.mxu0 0
    %2270 = vmatprep.subr.bf16.mxu0 0
    %2271 = vmatpush2.bf16.xpose.msra.mxu0 0
    %2272 = vmatprep.subr.bf16.mxu0 0
    %2273 = vmatpush2.bf16.xpose.msra.mxu0 0
    %2274 = vmatprep.subr.bf16.mxu0 0
    %2275 = vmatpush2.bf16.xpose.msra.mxu0 0
    %2276 = vmatprep.subr.bf16.mxu0 0
    %2277 = vmatpush2.bf16.xpose.msra.mxu0 0
    %2278 = vmatprep.subr.bf16.mxu0 0
    %2279 = vmatpush2.bf16.xpose.msra.mxu0 0
    %2280 = vmatprep.mubr.bf16.mxu0 0
    %2281 = vmatmul.mubr.bf16.gmra.mxu0 %v2243
    %v2282 = vpop.f32.mrf.mxu0
    %v2283 = vadd.f32 0.0, %v2282
    %v2284 = vpop.f32.mrf.mxu0
    %v2285 = vpop.f32.mrf.mxu0
    %v2286 = vpop.f32.mrf.mxu0
    %2287 = vdwg.mxu0
    %v2288 = vsel %vm268, %v2283, -inf
    %2289 = vmax.xlane.f32.xlu0 %v2288
    %v2290 = vpop.xlane.xlu0 %2289
    %v2291 = vsub.f32 %v2283, %v2290
    %v2292 = vmul.f32 %v2291, 1.442695
    %v2293 = vpow.pop %v2292
    %v2294 = vsel %vm268, %v2293, 0.0
    %2295 = vadd.xlane.f32.xlu0 %v2294
    %v2296 = vpop.xlane.xlu0 %2295
    %v2297 = vrcp.pop %v2296
    %v2298 = vmul.f32 %v2293, %v2297
    %v2299 = vpack.c.bf16 %v2298, %v2298
    %2300 = vrot.lane.b32.xlu0 %v2018, 48
    %v2301 = vpop.permute.xlu0 %2300
    %v2303 = vsel %vm268, %v2299, 0
    %v2306 = vsel %vm332, %v2301, 0
    %2308 = vmatprep.subr.bf16.mxu0 0
    %2309 = vmatpush1.bf16.msra.mxu0 0
    %2310 = vmatprep.subr.bf16.mxu0 0
    %2311 = vmatpush1.bf16.msra.mxu0 0
    %2312 = vmatprep.subr.bf16.mxu0 0
    %2313 = vmatpush1.bf16.msra.mxu0 0
    %2314 = vmatprep.subr.bf16.mxu0 0
    %2315 = vmatpush1.bf16.msra.mxu0 0
    %2316 = vmatprep.subr.bf16.mxu0 0
    %2317 = vmatpush1.bf16.msra.mxu0 0
    %2318 = vmatprep.subr.bf16.mxu0 0
    %2319 = vmatpush1.bf16.msra.mxu0 0
    %2320 = vmatprep.subr.bf16.mxu0 0
    %2321 = vmatpush1.bf16.msra.mxu0 0
    %2322 = vmatprep.subr.bf16.mxu0 0
    %2323 = vmatpush1.bf16.msra.mxu0 %v2306
    %2324 = vmatprep.subr.bf16.mxu0 0
    %2325 = vmatpush2.bf16.msra.mxu0 0
    %2326 = vmatprep.subr.bf16.mxu0 0
    %2327 = vmatpush2.bf16.msra.mxu0 0
    %2328 = vmatprep.subr.bf16.mxu0 0
    %2329 = vmatpush2.bf16.msra.mxu0 0
    %2330 = vmatprep.subr.bf16.mxu0 0
    %2331 = vmatpush2.bf16.msra.mxu0 0
    %2332 = vmatprep.subr.bf16.mxu0 0
    %2333 = vmatpush2.bf16.msra.mxu0 0
    %2334 = vmatprep.subr.bf16.mxu0 0
    %2335 = vmatpush2.bf16.msra.mxu0 0
    %2336 = vmatprep.subr.bf16.mxu0 0
    %2337 = vmatpush2.bf16.msra.mxu0 0
    %2338 = vmatprep.subr.bf16.mxu0 0
    %2339 = vmatpush2.bf16.msra.mxu0 0
    %2340 = vmatprep.mubr.bf16.mxu0 0
    %2341 = vmatmul.mubr.bf16.gmra.mxu0 %v2303
    %v2342 = vpop.f32.mrf.mxu0
    %v2343 = vadd.f32 0.0, %v2342
    %v2344 = vpop.f32.mrf.mxu0
    %v2345 = vpop.f32.mrf.mxu0
    %v2346 = vpop.f32.mrf.mxu0
    %2347 = vdwg.mxu0
    %2348 = vrot.lane.b32.xlu0 %v2018, 104
    %v2349 = vpop.permute.xlu0 %2348
    %2350 = vrot.lane.b32.xlu0 %v2018, 72
    %v2351 = vpop.permute.xlu0 %2350
    %v2353 = vsel %vm268, %v2349, 0
    %v2356 = vsel %vm268, %v2351, 0
    %2358 = vmatprep.subr.bf16.mxu0 0
    %2359 = vmatpush1.bf16.xpose.msra.mxu0 0
    %2360 = vmatprep.subr.bf16.mxu0 0
    %2361 = vmatpush1.bf16.xpose.msra.mxu0 0
    %2362 = vmatprep.subr.bf16.mxu0 0
    %2363 = vmatpush1.bf16.xpose.msra.mxu0 0
    %2364 = vmatprep.subr.bf16.mxu0 0
    %2365 = vmatpush1.bf16.xpose.msra.mxu0 0
    %2366 = vmatprep.subr.bf16.mxu0 0
    %2367 = vmatpush1.bf16.xpose.msra.mxu0 0
    %2368 = vmatprep.subr.bf16.mxu0 0
    %2369 = vmatpush1.bf16.xpose.msra.mxu0 0
    %2370 = vmatprep.subr.bf16.mxu0 0
    %2371 = vmatpush1.bf16.xpose.msra.mxu0 0
    %2372 = vmatprep.subr.bf16.mxu0 0
    %2373 = vmatpush1.bf16.xpose.msra.mxu0 %v2356
    %2374 = vmatprep.subr.bf16.mxu0 0
    %2375 = vmatpush2.bf16.xpose.msra.mxu0 0
    %2376 = vmatprep.subr.bf16.mxu0 0
    %2377 = vmatpush2.bf16.xpose.msra.mxu0 0
    %2378 = vmatprep.subr.bf16.mxu0 0
    %2379 = vmatpush2.bf16.xpose.msra.mxu0 0
    %2380 = vmatprep.subr.bf16.mxu0 0
    %2381 = vmatpush2.bf16.xpose.msra.mxu0 0
    %2382 = vmatprep.subr.bf16.mxu0 0
    %2383 = vmatpush2.bf16.xpose.msra.mxu0 0
    %2384 = vmatprep.subr.bf16.mxu0 0
    %2385 = vmatpush2.bf16.xpose.msra.mxu0 0
    %2386 = vmatprep.subr.bf16.mxu0 0
    %2387 = vmatpush2.bf16.xpose.msra.mxu0 0
    %2388 = vmatprep.subr.bf16.mxu0 0
    %2389 = vmatpush2.bf16.xpose.msra.mxu0 0
    %2390 = vmatprep.mubr.bf16.mxu0 0
    %2391 = vmatmul.mubr.bf16.gmra.mxu0 %v2353
    %v2392 = vpop.f32.mrf.mxu0
    %v2393 = vadd.f32 0.0, %v2392
    %v2394 = vpop.f32.mrf.mxu0
    %v2395 = vpop.f32.mrf.mxu0
    %v2396 = vpop.f32.mrf.mxu0
    %2397 = vdwg.mxu0
    %v2398 = vsel %vm268, %v2393, -inf
    %2399 = vmax.xlane.f32.xlu0 %v2398
    %v2400 = vpop.xlane.xlu0 %2399
    %v2401 = vsub.f32 %v2393, %v2400
    %v2402 = vmul.f32 %v2401, 1.442695
    %v2403 = vpow.pop %v2402
    %v2404 = vsel %vm268, %v2403, 0.0
    %2405 = vadd.xlane.f32.xlu0 %v2404
    %v2406 = vpop.xlane.xlu0 %2405
    %v2407 = vrcp.pop %v2406
    %v2408 = vmul.f32 %v2403, %v2407
    %v2409 = vpack.c.bf16 %v2408, %v2408
    %2410 = vrot.lane.b32.xlu0 %v2018, 40
    %v2411 = vpop.permute.xlu0 %2410
    %v2413 = vsel %vm268, %v2409, 0
    %v2416 = vsel %vm332, %v2411, 0
    %2418 = vmatprep.subr.bf16.mxu0 0
    %2419 = vmatpush1.bf16.msra.mxu0 0
    %2420 = vmatprep.subr.bf16.mxu0 0
    %2421 = vmatpush1.bf16.msra.mxu0 0
    %2422 = vmatprep.subr.bf16.mxu0 0
    %2423 = vmatpush1.bf16.msra.mxu0 0
    %2424 = vmatprep.subr.bf16.mxu0 0
    %2425 = vmatpush1.bf16.msra.mxu0 0
    %2426 = vmatprep.subr.bf16.mxu0 0
    %2427 = vmatpush1.bf16.msra.mxu0 0
    %2428 = vmatprep.subr.bf16.mxu0 0
    %2429 = vmatpush1.bf16.msra.mxu0 0
    %2430 = vmatprep.subr.bf16.mxu0 0
    %2431 = vmatpush1.bf16.msra.mxu0 0
    %2432 = vmatprep.subr.bf16.mxu0 0
    %2433 = vmatpush1.bf16.msra.mxu0 %v2416
    %2434 = vmatprep.subr.bf16.mxu0 0
    %2435 = vmatpush2.bf16.msra.mxu0 0
    %2436 = vmatprep.subr.bf16.mxu0 0
    %2437 = vmatpush2.bf16.msra.mxu0 0
    %2438 = vmatprep.subr.bf16.mxu0 0
    %2439 = vmatpush2.bf16.msra.mxu0 0
    %2440 = vmatprep.subr.bf16.mxu0 0
    %2441 = vmatpush2.bf16.msra.mxu0 0
    %2442 = vmatprep.subr.bf16.mxu0 0
    %2443 = vmatpush2.bf16.msra.mxu0 0
    %2444 = vmatprep.subr.bf16.mxu0 0
    %2445 = vmatpush2.bf16.msra.mxu0 0
    %2446 = vmatprep.subr.bf16.mxu0 0
    %2447 = vmatpush2.bf16.msra.mxu0 0
    %2448 = vmatprep.subr.bf16.mxu0 0
    %2449 = vmatpush2.bf16.msra.mxu0 0
    %2450 = vmatprep.mubr.bf16.mxu0 0
    %2451 = vmatmul.mubr.bf16.gmra.mxu0 %v2413
    %v2452 = vpop.f32.mrf.mxu0
    %v2453 = vadd.f32 0.0, %v2452
    %v2454 = vpop.f32.mrf.mxu0
    %v2455 = vpop.f32.mrf.mxu0
    %v2456 = vpop.f32.mrf.mxu0
    %2457 = vdwg.mxu0
    %2459 = vrot.lane.b32.xlu0 %v2233, 8
    %v2460 = vpop.permute.xlu0 %2459
    %2463 = vrot.lane.b32.xlu0 %v2343, 16
    %v2464 = vpop.permute.xlu0 %2463
    %2467 = vrot.lane.b32.xlu0 %v2453, 24
    %v2468 = vpop.permute.xlu0 %2467
    %v2470 = vsel %vm268, %v2123, %v2460
    %v2471 = vsel %vm719, %v2470, %v2464
    %v2472 = vsel %vm721, %v2471, %v2468
    %v2473 = vpack.c.bf16 %v2472, %v2017
    %s2474 = scalar_lea.vmem %s6, 16
    %v2475 = vld [vmem:[%s2474] sm:$0xf]
    %v2476 = vld [vmem:[%s2474 + $0x4] sm:$0xf]
    %v2477 = vld [vmem:[%s2474 + $0x8] sm:$0xf]
    %v2478 = vld [vmem:[%s2474 + $0xc] sm:$0xf]
    %v2479 = vlaneseq
    %v2480 = vshrl.u32 %v2479, 7
    %v2481 = vsub.s32 0, %v2480
    %v2482 = vrot.slane %v1492, %v2481
    %v2487 = vunpack.c.l.b16 %v2475
    %v2488 = vunpack.c.l.b16 %v2476
    %v2489 = vunpack.c.l.b16 %v2477
    %v2490 = vunpack.c.l.b16 %v2478
    %v2491 = vpack.c.b16 %v2488, %v2487
    %v2492 = vpack.c.b16 %v2490, %v2489
    %v2496 = vsel %vm109, %v2473, 0
    %2498 = vmatprep.subr.bf16.mxu0 0
    %2499 = vmatpush1.bf16.msra.mxu0 0
    %2500 = vmatprep.subr.bf16.mxu0 0
    %2501 = vmatpush1.bf16.msra.mxu0 0
    %2502 = vmatprep.subr.bf16.mxu0 0
    %2503 = vmatpush1.bf16.msra.mxu0 0
    %2504 = vmatprep.subr.bf16.mxu0 0
    %2505 = vmatpush1.bf16.msra.mxu0 0
    %2506 = vmatprep.subr.bf16.mxu0 0
    %2507 = vmatpush1.bf16.msra.mxu0 0
    %2508 = vmatprep.subr.bf16.mxu0 0
    %2509 = vmatpush1.bf16.msra.mxu0 0
    %2510 = vmatprep.subr.bf16.mxu0 0
    %2511 = vmatpush1.bf16.msra.mxu0 %v2492
    %2512 = vmatprep.subr.bf16.mxu0 0
    %2513 = vmatpush1.bf16.msra.mxu0 %v2491
    %2514 = vmatprep.subr.bf16.mxu0 0
    %2515 = vmatpush2.bf16.msra.mxu0 0
    %2516 = vmatprep.subr.bf16.mxu0 0
    %2517 = vmatpush2.bf16.msra.mxu0 0
    %2518 = vmatprep.subr.bf16.mxu0 0
    %2519 = vmatpush2.bf16.msra.mxu0 0
    %2520 = vmatprep.subr.bf16.mxu0 0
    %2521 = vmatpush2.bf16.msra.mxu0 0
    %2522 = vmatprep.subr.bf16.mxu0 0
    %2523 = vmatpush2.bf16.msra.mxu0 0
    %2524 = vmatprep.subr.bf16.mxu0 0
    %2525 = vmatpush2.bf16.msra.mxu0 0
    %2526 = vmatprep.subr.bf16.mxu0 0
    %2527 = vmatpush2.bf16.msra.mxu0 0
    %2528 = vmatprep.subr.bf16.mxu0 0
    %2529 = vmatpush2.bf16.msra.mxu0 0
    %2530 = vmatprep.mubr.bf16.mxu0 0
    %2531 = vmatmul.mubr.bf16.gmra.mxu0 %v2496
    %v2532 = vpop.f32.mrf.mxu0
    %v2533 = vadd.f32 %v2482, %v2532
    %v2534 = vpop.f32.mrf.mxu0
    %v2535 = vpop.f32.mrf.mxu0
    %v2536 = vadd.f32 %v2482, %v2535
    %v2537 = vpop.f32.mrf.mxu0
    %2538 = vdwg.mxu0
    %v2539 = vadd.f32 %v1489, %v2533
    %v2540 = vadd.f32 %v1490, %v2536
    %v2541 = vsel %vm109, %v2539, 0.0
    %2542 = vadd.xlane.f32.xlu0 %v2541
    %v2543 = vpop.xlane.xlu0 %2542
    %v2544 = vsel %vm109, %v2540, 0.0
    %2545 = vadd.xlane.f32.xlu0 %v2544
    %v2546 = vpop.xlane.xlu0 %2545
    %v2547 = vmul.f32 %v2543, %v162
    %v2548 = vmul.f32 %v2546, %v162
    %v2549 = vsub.f32 %v2539, %v2547
    %v2550 = vsub.f32 %v2540, %v2548
    %v2551 = vmul.f32 %v2549, %v2549
    %v2552 = vmul.f32 %v2550, %v2550
    %v2553 = vsel %vm109, %v2551, 0.0
    %2554 = vadd.xlane.f32.xlu0 %v2553
    %v2555 = vpop.xlane.xlu0 %2554
    %v2556 = vsel %vm109, %v2552, 0.0
    %2557 = vadd.xlane.f32.xlu0 %v2556
    %v2558 = vpop.xlane.xlu0 %2557
    %v2559 = vmul.f32 %v2555, %v162
    %v2560 = vmul.f32 %v2558, %v162
    %v2561 = vadd.f32 %v2559, 1e-12
    %v2562 = vadd.f32 %v2560, 1e-12
    %v2563 = vrsqrt.pop %v2561
    %v2564 = vrsqrt.pop %v2562
    %v2565 = vmul.f32 %v2549, %v2563
    %v2566 = vmul.f32 %v2550, %v2564
    %v2567 = vlaneseq
    %v2568 = vshrl.u32 %v2567, 7
    %v2569 = vsub.s32 1, %v2568
    %v2570 = vrot.slane %v1492, %v2569
    %v2571 = vmul.f32 %v2565, %v2570
    %v2572 = vmul.f32 %v2566, %v2570
    %v2573 = vlaneseq
    %v2574 = vshrl.u32 %v2573, 7
    %v2575 = vsub.s32 2, %v2574
    %v2576 = vrot.slane %v1492, %v2575
    %v2577 = vadd.f32 %v2571, %v2576
    %v2578 = vadd.f32 %v2572, %v2576
    %v2579 = vpack.c.bf16 %v2578, %v2577
    %s2580 = scalar_lea.vmem %s8, 16
    %v2581 = vld [vmem:[%s2580] sm:$0xf]
    %v2582 = vld [vmem:[%s2580 + $0x4] sm:$0xf]
    %v2583 = vld [vmem:[%s2580 + $0x8] sm:$0xf]
    %v2584 = vld [vmem:[%s2580 + $0xc] sm:$0xf]
    %s2585 = scalar_lea.vmem %s9, 1
    %v2586 = vld [vmem:[%s2585] sm:$0x1]
    %v2588 = vlaneseq
    %v2589 = vshrl.u32 %v2588, 7
    %v2590 = vsub.s32 0, %v2589
    %v2591 = vrot.slane %v2586, %v2590
    %v2597 = vunpack.c.l.b16 %v2581
    %v2598 = vunpack.c.l.b16 %v2582
    %v2599 = vunpack.c.l.b16 %v2583
    %v2600 = vunpack.c.l.b16 %v2584
    %v2601 = vpack.c.b16 %v2598, %v2597
    %v2602 = vpack.c.b16 %v2600, %v2599
    %v2606 = vsel %vm109, %v2579, 0
    %2608 = vmatprep.subr.bf16.mxu0 0
    %2609 = vmatpush1.bf16.msra.mxu0 0
    %2610 = vmatprep.subr.bf16.mxu0 0
    %2611 = vmatpush1.bf16.msra.mxu0 0
    %2612 = vmatprep.subr.bf16.mxu0 0
    %2613 = vmatpush1.bf16.msra.mxu0 0
    %2614 = vmatprep.subr.bf16.mxu0 0
    %2615 = vmatpush1.bf16.msra.mxu0 0
    %2616 = vmatprep.subr.bf16.mxu0 0
    %2617 = vmatpush1.bf16.msra.mxu0 0
    %2618 = vmatprep.subr.bf16.mxu0 0
    %2619 = vmatpush1.bf16.msra.mxu0 0
    %2620 = vmatprep.subr.bf16.mxu0 0
    %2621 = vmatpush1.bf16.msra.mxu0 %v2602
    %2622 = vmatprep.subr.bf16.mxu0 0
    %2623 = vmatpush1.bf16.msra.mxu0 %v2601
    %2624 = vmatprep.subr.bf16.mxu0 0
    %2625 = vmatpush2.bf16.msra.mxu0 0
    %2626 = vmatprep.subr.bf16.mxu0 0
    %2627 = vmatpush2.bf16.msra.mxu0 0
    %2628 = vmatprep.subr.bf16.mxu0 0
    %2629 = vmatpush2.bf16.msra.mxu0 0
    %2630 = vmatprep.subr.bf16.mxu0 0
    %2631 = vmatpush2.bf16.msra.mxu0 0
    %2632 = vmatprep.subr.bf16.mxu0 0
    %2633 = vmatpush2.bf16.msra.mxu0 0
    %2634 = vmatprep.subr.bf16.mxu0 0
    %2635 = vmatpush2.bf16.msra.mxu0 0
    %2636 = vmatprep.subr.bf16.mxu0 0
    %2637 = vmatpush2.bf16.msra.mxu0 0
    %2638 = vmatprep.subr.bf16.mxu0 0
    %2639 = vmatpush2.bf16.msra.mxu0 0
    %2640 = vmatprep.mubr.bf16.mxu0 0
    %2641 = vmatmul.mubr.bf16.gmra.mxu0 %v2606
    %v2642 = vpop.f32.mrf.mxu0
    %v2643 = vadd.f32 %v2591, %v2642
    %v2644 = vpop.f32.mrf.mxu0
    %v2645 = vpop.f32.mrf.mxu0
    %v2646 = vadd.f32 %v2591, %v2645
    %v2647 = vpop.f32.mrf.mxu0
    %2648 = vdwg.mxu0
    %v2649 = vmul.f32 %v2643, 0.5
    %v2650 = vmul.f32 %v2646, 0.5
    %v2651 = vmul.f32 %v2643, 0.044715
    %v2652 = vmul.f32 %v2646, 0.044715
    %v2653 = vmul.f32 %v2651, %v2643
    %v2654 = vmul.f32 %v2652, %v2646
    %v2655 = vmul.f32 %v2653, %v2643
    %v2656 = vmul.f32 %v2654, %v2646
    %v2657 = vadd.f32 %v2643, %v2655
    %v2658 = vadd.f32 %v2646, %v2656
    %v2659 = vmul.f32 %v2657, 0.7978846
    %v2660 = vmul.f32 %v2658, 0.7978846
    %v2661 = vtanh.pop %v2659
    %v2662 = vtanh.pop %v2660
    %v2663 = vadd.f32 %v2661, 1.0
    %v2664 = vadd.f32 %v2662, 1.0
    %v2665 = vmul.f32 %v2649, %v2663
    %v2666 = vmul.f32 %v2650, %v2664
    %v2667 = vpack.c.bf16 %v2666, %v2665
    %s2668 = scalar_lea.vmem %s10, 32
    %v2669 = vld [vmem:[%s2668] sm:$0xf]
    %v2670 = vld [vmem:[%s2668 + $0x4] sm:$0xf]
    %v2671 = vld [vmem:[%s2668 + $0x8] sm:$0xf]
    %v2672 = vld [vmem:[%s2668 + $0xc] sm:$0xf]
    %v2673 = vld [vmem:[%s2668 + $0x10] sm:$0xf]
    %v2674 = vld [vmem:[%s2668 + $0x14] sm:$0xf]
    %v2675 = vld [vmem:[%s2668 + $0x18] sm:$0xf]
    %v2676 = vld [vmem:[%s2668 + $0x1c] sm:$0xf]
    %v2677 = vlaneseq
    %v2678 = vshrl.u32 %v2677, 7
    %v2679 = vsub.s32 3, %v2678
    %v2680 = vrot.slane %v1492, %v2679
    %v2689 = vunpack.c.l.b16 %v2669
    %v2690 = vunpack.c.l.b16 %v2670
    %v2691 = vunpack.c.l.b16 %v2671
    %v2692 = vunpack.c.l.b16 %v2672
    %v2693 = vunpack.c.l.b16 %v2673
    %v2694 = vunpack.c.l.b16 %v2674
    %v2695 = vunpack.c.l.b16 %v2675
    %v2696 = vunpack.c.l.b16 %v2676
    %v2697 = vpack.c.b16 %v2690, %v2689
    %v2698 = vpack.c.b16 %v2692, %v2691
    %v2699 = vpack.c.b16 %v2694, %v2693
    %v2700 = vpack.c.b16 %v2696, %v2695
    %v2706 = vsel %vm1406, %v2667, 0
    %2708 = vmatprep.subr.bf16.mxu0 0
    %2709 = vmatpush1.bf16.msra.mxu0 0
    %2710 = vmatprep.subr.bf16.mxu0 0
    %2711 = vmatpush1.bf16.msra.mxu0 0
    %2712 = vmatprep.subr.bf16.mxu0 0
    %2713 = vmatpush1.bf16.msra.mxu0 0
    %2714 = vmatprep.subr.bf16.mxu0 0
    %2715 = vmatpush1.bf16.msra.mxu0 0
    %2716 = vmatprep.subr.bf16.mxu0 0
    %2717 = vmatpush1.bf16.msra.mxu0 %v2700
    %2718 = vmatprep.subr.bf16.mxu0 0
    %2719 = vmatpush1.bf16.msra.mxu0 %v2699
    %2720 = vmatprep.subr.bf16.mxu0 0
    %2721 = vmatpush1.bf16.msra.mxu0 %v2698
    %2722 = vmatprep.subr.bf16.mxu0 0
    %2723 = vmatpush1.bf16.msra.mxu0 %v2697
    %2724 = vmatprep.subr.bf16.mxu0 0
    %2725 = vmatpush2.bf16.msra.mxu0 0
    %2726 = vmatprep.subr.bf16.mxu0 0
    %2727 = vmatpush2.bf16.msra.mxu0 0
    %2728 = vmatprep.subr.bf16.mxu0 0
    %2729 = vmatpush2.bf16.msra.mxu0 0
    %2730 = vmatprep.subr.bf16.mxu0 0
    %2731 = vmatpush2.bf16.msra.mxu0 0
    %2732 = vmatprep.subr.bf16.mxu0 0
    %2733 = vmatpush2.bf16.msra.mxu0 0
    %2734 = vmatprep.subr.bf16.mxu0 0
    %2735 = vmatpush2.bf16.msra.mxu0 0
    %2736 = vmatprep.subr.bf16.mxu0 0
    %2737 = vmatpush2.bf16.msra.mxu0 0
    %2738 = vmatprep.subr.bf16.mxu0 0
    %2739 = vmatpush2.bf16.msra.mxu0 0
    %2740 = vmatprep.mubr.bf16.mxu0 0
    %2741 = vmatmul.mubr.bf16.gmra.mxu0 %v2706
    %v2742 = vpop.f32.mrf.mxu0
    %v2743 = vadd.f32 %v2680, %v2742
    %v2744 = vpop.f32.mrf.mxu0
    %v2745 = vpop.f32.mrf.mxu0
    %v2746 = vadd.f32 %v2680, %v2745
    %v2747 = vpop.f32.mrf.mxu0
    %2748 = vdwg.mxu0
    %v2749 = vadd.f32 %v2577, %v2743
    %v2750 = vadd.f32 %v2578, %v2746
    %v2751 = vsel %vm109, %v2749, 0.0
    %2752 = vadd.xlane.f32.xlu0 %v2751
    %v2753 = vpop.xlane.xlu0 %2752
    %v2754 = vsel %vm109, %v2750, 0.0
    %2755 = vadd.xlane.f32.xlu0 %v2754
    %v2756 = vpop.xlane.xlu0 %2755
    %v2757 = vmul.f32 %v2753, %v162
    %v2758 = vmul.f32 %v2756, %v162
    %v2759 = vsub.f32 %v2749, %v2757
    %v2760 = vsub.f32 %v2750, %v2758
    %v2761 = vmul.f32 %v2759, %v2759
    %v2762 = vmul.f32 %v2760, %v2760
    %v2763 = vsel %vm109, %v2761, 0.0
    %2764 = vadd.xlane.f32.xlu0 %v2763
    %v2765 = vpop.xlane.xlu0 %2764
    %v2766 = vsel %vm109, %v2762, 0.0
    %2767 = vadd.xlane.f32.xlu0 %v2766
    %v2768 = vpop.xlane.xlu0 %2767
    %v2769 = vmul.f32 %v2765, %v162
    %v2770 = vmul.f32 %v2768, %v162
    %v2771 = vadd.f32 %v2769, 1e-12
    %v2772 = vadd.f32 %v2770, 1e-12
    %v2773 = vrsqrt.pop %v2771
    %v2774 = vrsqrt.pop %v2772
    %v2775 = vmul.f32 %v2759, %v2773
    %v2776 = vmul.f32 %v2760, %v2774
    %v2777 = vlaneseq
    %v2778 = vshrl.u32 %v2777, 7
    %v2779 = vsub.s32 4, %v2778
    %v2780 = vrot.slane %v1492, %v2779
    %v2781 = vmul.f32 %v2775, %v2780
    %v2782 = vmul.f32 %v2776, %v2780
    %v2783 = vlaneseq
    %v2784 = vshrl.u32 %v2783, 7
    %v2785 = vsub.s32 5, %v2784
    %v2786 = vrot.slane %v1492, %v2785
    %v2787 = vadd.f32 %v2781, %v2786
    %v2788 = vadd.f32 %v2782, %v2786
    %v2789 = vpack.c.bf16 %v2788, %v2787
    %v2790 = vld [vmem:[#allocation5] sm:$0xf]
    %v2791 = vld [vmem:[#allocation5 + $0x4] sm:$0xf]
    %v2792 = vld [vmem:[#allocation5 + $0x8] sm:$0xf]
    %v2793 = vld [vmem:[#allocation5 + $0xc] sm:$0xf]
    %v2794 = vld [vmem:[%s12] sm:$0x1]
    %v2796 = vlaneseq
    %v2797 = vshrl.u32 %v2796, 7
    %v2798 = vsub.s32 0, %v2797
    %v2799 = vrot.slane %v2794, %v2798
    %v2805 = vunpack.c.l.b16 %v2790
    %v2806 = vunpack.c.l.b16 %v2791
    %v2807 = vunpack.c.l.b16 %v2792
    %v2808 = vunpack.c.l.b16 %v2793
    %v2809 = vpack.c.b16 %v2806, %v2805
    %v2810 = vpack.c.b16 %v2808, %v2807
    %v2814 = vsel %vm109, %v2789, 0
    %2816 = vmatprep.subr.bf16.mxu0 0
    %2817 = vmatpush1.bf16.msra.mxu0 0
    %2818 = vmatprep.subr.bf16.mxu0 0
    %2819 = vmatpush1.bf16.msra.mxu0 0
    %2820 = vmatprep.subr.bf16.mxu0 0
    %2821 = vmatpush1.bf16.msra.mxu0 0
    %2822 = vmatprep.subr.bf16.mxu0 0
    %2823 = vmatpush1.bf16.msra.mxu0 0
    %2824 = vmatprep.subr.bf16.mxu0 0
    %2825 = vmatpush1.bf16.msra.mxu0 0
    %2826 = vmatprep.subr.bf16.mxu0 0
    %2827 = vmatpush1.bf16.msra.mxu0 0
    %2828 = vmatprep.subr.bf16.mxu0 0
    %2829 = vmatpush1.bf16.msra.mxu0 %v2810
    %2830 = vmatprep.subr.bf16.mxu0 0
    %2831 = vmatpush1.bf16.msra.mxu0 %v2809
    %2832 = vmatprep.subr.bf16.mxu0 0
    %2833 = vmatpush2.bf16.msra.mxu0 0
    %2834 = vmatprep.subr.bf16.mxu0 0
    %2835 = vmatpush2.bf16.msra.mxu0 0
    %2836 = vmatprep.subr.bf16.mxu0 0
    %2837 = vmatpush2.bf16.msra.mxu0 0
    %2838 = vmatprep.subr.bf16.mxu0 0
    %2839 = vmatpush2.bf16.msra.mxu0 0
    %2840 = vmatprep.subr.bf16.mxu0 0
    %2841 = vmatpush2.bf16.msra.mxu0 0
    %2842 = vmatprep.subr.bf16.mxu0 0
    %2843 = vmatpush2.bf16.msra.mxu0 0
    %2844 = vmatprep.subr.bf16.mxu0 0
    %2845 = vmatpush2.bf16.msra.mxu0 0
    %2846 = vmatprep.subr.bf16.mxu0 0
    %2847 = vmatpush2.bf16.msra.mxu0 0
    %2848 = vmatprep.mubr.bf16.mxu0 0
    %2849 = vmatmul.mubr.bf16.gmra.mxu0 %v2814
    %v2850 = vpop.f32.mrf.mxu0
    %v2851 = vadd.f32 %v2799, %v2850
    %v2852 = vpop.f32.mrf.mxu0
    %v2853 = vpop.f32.mrf.mxu0
    %v2854 = vadd.f32 %v2799, %v2853
    %v2855 = vpop.f32.mrf.mxu0
    %2856 = vdwg.mxu0
    %2857 = vst [vmem:[#allocation7] sm:$0xff] %v2851
    %2858 = vst [vmem:[#allocation7 + $0x8] sm:$0xff] %v2854
    // Predicated region
    $region62: #{torch_model_forward.1} parent=1 // pred_check
      _
    $region63: #{torch_model_forward.1} parent=1 // pred_check_branch
      %2860 = sbr.rel (0) target = $region65
    $region64: #{torch_model_forward.1} parent=1 // pred_region
      %s2862 = ssub.s32 256, 256
      %2863 = vsyncadd [#allocation4], %s2862
      %s2864 = sshll.u32 [#allocation7], 4
      %s2865 = int_to_ptr.vmem [resolvable:$true] %s2864
      %2870 = dma.vmem_to_hbm [thread:$0]  %s2865, 256, %s13, [#allocation4], 128, 128, 8
    $region65: #{torch_model_forward.1} parent=1 // pred_fallthru
      _
    // Predicated region
    $region66: #{torch_model_forward.1} parent=1 // pred_check
      _
    $region67: #{torch_model_forward.1} parent=1 // pred_check_branch
      %2872 = sbr.rel (0) target = $region69
    $region68: #{torch_model_forward.1} parent=1 // pred_region
      %2873 = dma.done [#allocation4], 256
    $region69: #{torch_model_forward.1} parent=1 // pred_fallthru
      _
    %2874 = vsyncpa [#allocation3], 1
    %2875 = vsyncpa [#allocation6], 1
    %2876 = vsyncpa [#allocation4], 1

</llo_original>
